<compile_context>
chip_gen: v7x
topology: tpu7x:2x2x1
jax: 0.10.0
libtpu: 0.0.40
codegen_flags: <defaults>
</compile_context>

<pallas_src>
import functools

import jax
import jax.numpy as jnp
from jax import lax
from jax.experimental import pallas as pl
from jax.experimental.pallas import tpu as pltpu

BN_EPS = 1e-5
COMPUTE_DTYPE = jnp.bfloat16          # MXU-native operands; accumulation stays f32
VMEM_LIMIT_BYTES = 48 * 1024 * 1024   # raise toward 96 MiB on v5e/v6e (128 MiB VMEM)
VMEM_BUDGET_BYTES = 24 * 1024 * 1024  # per-step residency target (fits v7x 64 MiB)


def _cdiv(a, b):
    return -(-a // b)


# ---------------------------------------------------------------------------
# Kernels
# ---------------------------------------------------------------------------
def _conv_band_kernel(*args, nx, taps, stride, th, wo, ho, mask_stats):
    """Pass A: one (Cout,K) @ (K, th*wo) matmul per band.

    Stores the un-normalized conv rows (lane-dense, th*wo lanes) and emits
    per-(batch, band) per-channel sum / sum-of-squares for BatchNorm.
    """
    x_refs = args[:nx]
    w_ref = args[nx]
    conv_ref, sum_ref, sq_ref = args[nx + 1], args[nx + 2], args[nx + 3]

    # Pack the RHS: one (cin_p, th*wo) block per kernel tap (lane order =
    # (output row, output col)); concatenate the kh*kw tap blocks along K.
    blocks = []
    for (src, i, c0) in taps:                          # all indices are static
        xr = x_refs[src]
        row_slabs = [xr[t * stride + i, :, c0:c0 + wo] for t in range(th)]
        blocks.append(jnp.concatenate(row_slabs, axis=1))   # (cin_p, th*wo)
    rhs = jnp.concatenate(blocks, axis=0)                    # (K, th*wo)

    acc = jnp.dot(w_ref[...], rhs, preferred_element_type=jnp.float32)  # (cout, th*wo)
    conv_ref[...] = acc.astype(conv_ref.dtype)

    if mask_stats:
        # Ragged last band: lanes are (row, col) ordered, so a lane is a real
        # output position iff lane_index < valid_rows * wo.
        band = pl.program_id(1)
        lane = lax.broadcasted_iota(jnp.int32, acc.shape, 1)
        acc = jnp.where(lane < (ho - band * th) * wo, acc, 0.0)
    sum_ref[...] = jnp.sum(acc, axis=1, keepdims=True)
    sq_ref[...] = jnp.sum(acc * acc, axis=1, keepdims=True)


def _bn_relu_kernel(y_ref, scale_ref, shift_ref, o_ref):
    """Pass B: elementwise BatchNorm affine + ReLU on lane-dense conv rows."""
    y = y_ref[...].astype(jnp.float32)
    o_ref[...] = jnp.maximum(y * scale_ref[...] + shift_ref[...], 0.0).astype(o_ref.dtype)


# ---------------------------------------------------------------------------
# One Conv2d + BatchNorm2d(train) + ReLU stage
# ---------------------------------------------------------------------------
def conv_bn_relu(x_nhcw, w_oihw, bias, gamma, beta, *, stride, padding,
                 block_rows=32, compute_dtype=COMPUTE_DTYPE, out_dtype=None,
                 vmem_budget_bytes=VMEM_BUDGET_BYTES,
                 vmem_limit_bytes=VMEM_LIMIT_BYTES):
    """x_nhcw: (N, H, Cin, W) -> (N, Ho, Cout, Wo); width on the lane axis."""
    del bias  # training-mode BatchNorm: the conv bias cancels in (x - mean)
    n, h, cin, win = x_nhcw.shape
    cout, cin_w, kh, kw = w_oihw.shape
    assert cin_w == cin, (cin_w, cin)
    s = stride
    assert s in (1, 2)
    if s == 2:
        assert kw == 3, "stride-2 path is specialised for kernel_size=3 (module spec)"
    if out_dtype is None:
        out_dtype = compute_dtype

    ho = (h + 2 * padding - kh) // s + 1
    wo = (win + 2 * padding - kw) // s + 1
    itemsize = jnp.dtype(compute_dtype).itemsize
    sub = 8 * (4 // itemsize)                       # sublane tile: 8 (f32) / 16 (bf16)
    cin_p = sub * _cdiv(cin, sub)
    k_dim = kh * kw * cin_p
    wp = win + 2 * padding
    n_src = 1 if s == 1 else 2
    src_w = wp if s == 1 else _cdiv(wp, 2)

    # ---- pick output rows per band from the VMEM budget --------------------
    th = max(1, min(block_rows, ho))
    while th > 1:
        band_rows = (th - 1) * s + kh
        footprint = (2 * n_src * band_rows * cin_p * src_w * itemsize   # dbl-buffered inputs
                     + k_dim * th * wo * itemsize                       # packed RHS temp
                     + 3 * cout * th * wo * 4                           # acc + out buffers
                     + 2 * cout * k_dim * itemsize)                     # weights
        if footprint <= vmem_budget_bytes:
            break
        th -= 1
    n_bands = _cdiv(ho, th)
    ho_pad = n_bands * th
    band_rows = (th - 1) * s + kh
    rows_needed = (ho_pad - 1) * s + kh
    bot = max(0, rows_needed - h - padding)

    # spatial pad + channel pad (zeros) + extra bottom rows for a ragged last band
    xp = jnp.pad(x_nhcw, ((0, 0), (padding, bot), (0, cin_p - cin),
                          (padding, padding))).astype(compute_dtype)

    # packed weights (Cout, K); K order = (kh, kw, cin_p), matching the RHS
    wt = jnp.transpose(w_oihw, (2, 3, 1, 0))                        # (kh, kw, cin, cout)
    wt = jnp.pad(wt, ((0, 0), (0, 0), (0, cin_p - cin), (0, 0)))
    w_mat = wt.reshape(k_dim, cout).T.astype(compute_dtype)         # (cout, K)

    if s == 1:
        srcs = [xp]                                  # taps are width slices j:j+wo
        taps = [(0, i, j) for i in range(kh) for j in range(kw)]
    else:
        # even/odd width de-interleave: total bytes ~= original (no 3x copy);
        # tap columns: j=0 -> even[0:wo], j=1 -> odd[0:wo], j=2 -> even[1:wo+1]
        srcs = [xp[:, :, :, 0::2], xp[:, :, :, 1::2]]
        colmap = [(0, 0), (1, 0), (0, 1)]
        taps = [(colmap[j][0], i, colmap[j][1]) for i in range(kh) for j in range(kw)]

    def band_stack(a):          # (N, n_bands, band_rows, cin_p, w_src); only the
        return jnp.stack(       # (kh-1)-row halo per band is duplicated
            [lax.slice_in_dim(a, b * th * s, b * th * s + band_rows, axis=1)
             for b in range(n_bands)], axis=1)

    x_bands = [band_stack(a) for a in srcs]
    nx = len(x_bands)

    grid = (n, n_bands)
    x_specs = [pl.BlockSpec((None, None, band_rows, cin_p, xb.shape[-1]),
                            lambda ni, bi: (ni, bi, 0, 0, 0))
               for xb in x_bands]
    # TODO(synk): on v5e, if DMA is still exposed, add pipeline_mode=pl.Buffered(3)
    # to x_specs for deeper input buffering.
    w_spec = pl.BlockSpec((cout, k_dim), lambda ni, bi: (0, 0))
    vec_spec = pl.BlockSpec((cout, 1), lambda ni, bi: (0, 0))
    band_spec = pl.BlockSpec((None, None, cout, th * wo), lambda ni, bi: (ni, bi, 0, 0))
    stats_spec = pl.BlockSpec((None, None, cout, 1), lambda ni, bi: (ni, bi, 0, 0))

    cparams = pltpu.CompilerParams(
        dimension_semantics=("parallel", "parallel"),   # v7x: 2-TC split on either axis
        vmem_limit_bytes=int(vmem_limit_bytes))

    flops = 2 * n * n_bands * th * wo * k_dim * cout
    in_bytes = int(sum(a.size * a.dtype.itemsize for a in x_bands)
                   + w_mat.size * w_mat.dtype.itemsize)
    conv_bytes = n * n_bands * cout * th * wo * jnp.dtype(compute_dtype).itemsize

    # ---- pass A: conv (stored once, lane-dense) + BN partial statistics ----
    kernel_a = functools.partial(_conv_band_kernel, nx=nx, taps=taps, stride=s,
                                 th=th, wo=wo, ho=ho, mask_stats=(ho_pad != ho))
    conv_out, sums, sqs = pl.pallas_call(
        kernel_a,
        out_shape=(jax.ShapeDtypeStruct((n, n_bands, cout, th * wo), compute_dtype),
                   jax.ShapeDtypeStruct((n, n_bands, cout, 1), jnp.float32),
                   jax.ShapeDtypeStruct((n, n_bands, cout, 1), jnp.float32)),
        grid=grid,
        in_specs=x_specs + [w_spec],
        out_specs=(band_spec, stats_spec, stats_spec),
        compiler_params=cparams,
        cost_estimate=pl.CostEstimate(
            flops=int(flops), transcendentals=0,
            bytes_accessed=int(in_bytes + conv_bytes + 2 * n * n_bands * cout * 4)),
    )(*x_bands, w_mat)

    # ---- BN batch statistics (training mode, biased variance) in plain JAX -
    m_count = float(n * ho * wo)
    mean = jnp.sum(sums, axis=(0, 1, 3)) / m_count
    # TODO(synk): E[x^2]-E[x]^2 in f32 can lose precision if |mean| >> std; the
    # post-BN activations here are near zero-mean so it is benign (clamped >=0).
    var = jnp.maximum(jnp.sum(sqs, axis=(0, 1, 3)) / m_count - mean * mean, 0.0)
    scale = gamma * lax.rsqrt(var + BN_EPS)
    shift = beta - mean * scale
    scale2 = scale.reshape(cout, 1).astype(jnp.float32)
    shift2 = shift.reshape(cout, 1).astype(jnp.float32)

    # ---- pass B: elementwise normalize + affine + ReLU (lane-dense) --------
    out_band = pl.pallas_call(
        _bn_relu_kernel,
        out_shape=jax.ShapeDtypeStruct((n, n_bands, cout, th * wo), out_dtype),
        grid=grid,
        in_specs=[band_spec, vec_spec, vec_spec],
        out_specs=band_spec,
        compiler_params=cparams,
        cost_estimate=pl.CostEstimate(
            flops=int(2 * n * n_bands * cout * th * wo), transcendentals=0,
            bytes_accessed=int(conv_bytes + n * n_bands * cout * th * wo
                               * jnp.dtype(out_dtype).itemsize)),
    )(conv_out, scale2, shift2)

    # un-band: (N, n_bands, Cout, th*wo) -> (N, Ho, Cout, Wo)   (wrapper reshape)
    out = out_band.reshape(n, n_bands, cout, th, wo).transpose(0, 1, 3, 2, 4)
    return out.reshape(n, ho_pad, cout, wo)[:, :ho]


# ---------------------------------------------------------------------------
# DownBlock_ConvStride2 forward
# ---------------------------------------------------------------------------
def down_block_conv_stride2(x_nchw, params, conv_kernel=3, block_rows=32,
                            compute_dtype=COMPUTE_DTYPE):
    """Forward of DownBlock_ConvStride2 (dim='2d', activation='ReLU')."""
    x = jnp.transpose(x_nchw, (0, 2, 1, 3))       # NCHW -> (N, H, C, W): W on lanes
    common = dict(block_rows=block_rows, compute_dtype=compute_dtype)

    # Down: Conv2d(Cin, Cin, k=3, stride=2, padding=0) + BN + ReLU
    x = conv_bn_relu(x, params["down_w"], params["down_b"], params["down_g"],
                     params["down_beta"], stride=2, padding=0, **common)

    # DoubleConv: 2 x (Conv2d(k, stride=1, padding='same') + BN + ReLU)
    p = (conv_kernel - 1) // 2                    # 'same' for odd kernels
    x = conv_bn_relu(x, params["c1_w"], params["c1_b"], params["c1_g"],
                     params["c1_beta"], stride=1, padding=p, **common)
    x = conv_bn_relu(x, params["c2_w"], params["c2_b"], params["c2_g"],
                     params["c2_beta"], stride=1, padding=p, **common)

    # TODO(synk): the three stages could be fused into one pallas_call keeping
    # the downsampled intermediates in VMEM; kept as separate calls for robustness.
    return jnp.transpose(x, (0, 2, 1, 3)).astype(x_nchw.dtype)   # -> NCHW


# ---------------------------------------------------------------------------
# Deterministic parameter init (PyTorch-style uniform fan-in bound; BN: g=1, b=0)
# ---------------------------------------------------------------------------
def init_params(key, in_ch, out_ch, conv_kernel=3):
    def conv_init(k, cout, cin, kh, kw):
        fan_in = cin * kh * kw
        bound = 1.0 / (fan_in ** 0.5)
        kw_, kb_ = jax.random.split(k)
        w = jax.random.uniform(kw_, (cout, cin, kh, kw), jnp.float32, -bound, bound)
        b = jax.random.uniform(kb_, (cout,), jnp.float32, -bound, bound)
        return w, b

    k0, k1, k2 = jax.random.split(key, 3)
    down_w, down_b = conv_init(k0, in_ch, in_ch, 3, 3)
    c1_w, c1_b = conv_init(k1, out_ch, in_ch, conv_kernel, conv_kernel)
    c2_w, c2_b = conv_init(k2, out_ch, out_ch, conv_kernel, conv_kernel)
    return dict(
        down_w=down_w, down_b=down_b,
        down_g=jnp.ones((in_ch,), jnp.float32), down_beta=jnp.zeros((in_ch,), jnp.float32),
        c1_w=c1_w, c1_b=c1_b,
        c1_g=jnp.ones((out_ch,), jnp.float32), c1_beta=jnp.zeros((out_ch,), jnp.float32),
        c2_w=c2_w, c2_b=c2_b,
        c2_g=jnp.ones((out_ch,), jnp.float32), c2_beta=jnp.zeros((out_ch,), jnp.float32),
    )


# ---------------------------------------------------------------------------
# Pure-JAX reference (for correctness check)
# ---------------------------------------------------------------------------
def _ref_stage(x_nhwc, w_oihw, bias, gamma, beta, stride, padding):
    w_hwio = jnp.transpose(w_oihw, (2, 3, 1, 0))
    y = jax.lax.conv_general_dilated(
        x_nhwc, w_hwio, window_strides=(stride, stride),
        padding=[(padding, padding), (padding, padding)],
        dimension_numbers=("NHWC", "HWIO", "NHWC"))
    y = y + bias
    mean = jnp.mean(y, axis=(0, 1, 2), keepdims=True)
    var = jnp.mean((y - mean) ** 2, axis=(0, 1, 2), keepdims=True)
    y = (y - mean) * jax.lax.rsqrt(var + BN_EPS) * gamma + beta
    return jnp.maximum(y, 0.0)


def _ref_forward(x_nchw, params, conv_kernel=3):
    x = jnp.transpose(x_nchw, (0, 2, 3, 1))
    x = _ref_stage(x, params["down_w"], params["down_b"],
                   params["down_g"], params["down_beta"], 2, 0)
    p = (conv_kernel - 1) // 2
    x = _ref_stage(x, params["c1_w"], params["c1_b"],
                   params["c1_g"], params["c1_beta"], 1, p)
    x = _ref_stage(x, params["c2_w"], params["c2_b"],
                   params["c2_g"], params["c2_beta"], 1, p)
    return jnp.transpose(x, (0, 3, 1, 2))


if __name__ == "__main__":
    key = jax.random.PRNGKey(0)
    kx, kp = jax.random.split(key)

    N, C_IN, H, W = 2, 4, 16, 16
    C_OUT = 8
    CONV_K = 3

    x = jax.random.normal(kx, (N, C_IN, H, W), jnp.float32)
    params = init_params(kp, C_IN, C_OUT, CONV_K)

    y_ref = jax.block_until_ready(_ref_forward(x, params, conv_kernel=CONV_K))

    # Default bf16 MXU operands (f32 accumulation): loose check vs f32 reference.
    fwd_bf16 = jax.jit(functools.partial(down_block_conv_stride2, conv_kernel=CONV_K,
                                         compute_dtype=jnp.bfloat16))
    y_bf16 = jax.block_until_ready(fwd_bf16(x, params))
    # Down(stride=2, k=3, pad=0): 16 -> 7 ; 'same' convs keep 7x7.
    assert y_bf16.shape == (N, C_OUT, 7, 7), y_bf16.shape
    assert jnp.allclose(y_bf16, y_ref, atol=1e-1, rtol=1e-1), \
        float(jnp.max(jnp.abs(y_bf16 - y_ref)))

    # f32 operands: tight check.
    fwd_f32 = jax.jit(functools.partial(down_block_conv_stride2, conv_kernel=CONV_K,
                                        compute_dtype=jnp.float32))
    y_f32 = jax.block_until_ready(fwd_f32(x, params))
    assert y_f32.shape == (N, C_OUT, 7, 7), y_f32.shape
    assert jnp.allclose(y_f32, y_ref, atol=2e-3, rtol=2e-3), \
        float(jnp.max(jnp.abs(y_f32 - y_ref)))

    # TODO(synk): BatchNorm running_mean/running_var buffer updates (training
    # side effect) are not part of the returned forward value and not modeled.
    print("KERNEL_OK")
</pallas_src>

<mosaic_0001>
module attributes {stable_mosaic.version = 11 : i64} {
  func.func @_bn_relu_kernel(%arg0: i32, %arg1: i32, %arg2: memref<1x1x4x49xbf16, #tpu.memory_space<vmem>>, %arg3: memref<4x1xf32, #tpu.memory_space<vmem>>, %arg4: memref<4x1xf32, #tpu.memory_space<vmem>>, %arg5: memref<1x1x4x49xbf16, #tpu.memory_space<vmem>>) attributes {dimension_semantics = [#tpu.dimension_semantics<parallel>, #tpu.dimension_semantics<parallel>], iteration_bounds = array<i64: 2, 1>, scalar_prefetch = 0 : i64, scratch_operands = 0 : i64, tpu.core_type = #tpu.core_type<tc>, window_params = [{transform_indices = @transform_0, window_bounds = array<i64: 1, 1, 4, 49>}, {pipeline_mode = #tpu.pipeline_mode<synchronous>, transform_indices = @transform_1, window_bounds = array<i64: 4, 1>}, {pipeline_mode = #tpu.pipeline_mode<synchronous>, transform_indices = @transform_2, window_bounds = array<i64: 4, 1>}, {transform_indices = @transform_3, window_bounds = array<i64: 1, 1, 4, 49>}]} {
    %c0 = arith.constant 0 : index
    %c0_0 = arith.constant 0 : index
    %c0_1 = arith.constant 0 : index
    %c0_2 = arith.constant 0 : index
    %0 = vector.load %arg2[%c0, %c0_0, %c0_1, %c0_2] : memref<1x1x4x49xbf16, #tpu.memory_space<vmem>>, vector<1x1x4x49xbf16>
    %1 = vector.shape_cast %0 : vector<1x1x4x49xbf16> to vector<4x49xbf16>
    %2 = arith.extf %1 : vector<4x49xbf16> to vector<4x49xf32>
    %c0_3 = arith.constant 0 : index
    %c0_4 = arith.constant 0 : index
    %3 = vector.load %arg3[%c0_3, %c0_4] : memref<4x1xf32, #tpu.memory_space<vmem>>, vector<4x1xf32>
    %4 = vector.broadcast %3 : vector<4x1xf32> to vector<4x49xf32>
    %5 = arith.mulf %2, %4 : vector<4x49xf32>
    %c0_5 = arith.constant 0 : index
    %c0_6 = arith.constant 0 : index
    %6 = vector.load %arg4[%c0_5, %c0_6] : memref<4x1xf32, #tpu.memory_space<vmem>>, vector<4x1xf32>
    %7 = vector.broadcast %6 : vector<4x1xf32> to vector<4x49xf32>
    %8 = arith.addf %5, %7 : vector<4x49xf32>
    %cst = arith.constant 0.000000e+00 : f32
    %9 = vector.broadcast %cst : f32 to vector<4x49xf32>
    %10 = arith.maximumf %8, %9 : vector<4x49xf32>
    %11 = arith.truncf %10 : vector<4x49xf32> to vector<4x49xbf16>
    %c0_7 = arith.constant 0 : index
    %c0_8 = arith.constant 0 : index
    %c0_9 = arith.constant 0 : index
    %c0_10 = arith.constant 0 : index
    %12 = vector.load %arg5[%c0_7, %c0_8, %c0_9, %c0_10] : memref<1x1x4x49xbf16, #tpu.memory_space<vmem>>, vector<1x1x4x49xbf16>
    %13 = vector.shape_cast %12 : vector<1x1x4x49xbf16> to vector<4x49xbf16>
    %14 = vector.shape_cast %11 : vector<4x49xbf16> to vector<1x1x4x49xbf16>
    tpu.vector_store %arg5[%c0_7, %c0_8, %c0_9, %c0_10], %14 {strides = array<i32>} : memref<1x1x4x49xbf16, #tpu.memory_space<vmem>>, vector<1x1x4x49xbf16>,
    return
  }
  func.func @transform_0(%arg0: i32, %arg1: i32) -> (i32, i32, i32, i32) {
    %c0_i32 = arith.constant 0 : i32
    %c0_i32_0 = arith.constant 0 : i32
    %c0_i32_1 = arith.constant 0 : i32
    return %arg0, %arg1, %c0_i32, %c0_i32_0 : i32, i32, i32, i32
  }
  func.func @transform_1(%arg0: i32, %arg1: i32) -> (i32, i32) {
    %c0_i32 = arith.constant 0 : i32
    %c0_i32_0 = arith.constant 0 : i32
    %c0_i32_1 = arith.constant 0 : i32
    return %c0_i32, %c0_i32_0 : i32, i32
  }
  func.func @transform_2(%arg0: i32, %arg1: i32) -> (i32, i32) {
    %c0_i32 = arith.constant 0 : i32
    %c0_i32_0 = arith.constant 0 : i32
    %c0_i32_1 = arith.constant 0 : i32
    return %c0_i32, %c0_i32_0 : i32, i32
  }
  func.func @transform_3(%arg0: i32, %arg1: i32) -> (i32, i32, i32, i32) {
    %c0_i32 = arith.constant 0 : i32
    %c0_i32_0 = arith.constant 0 : i32
    %c0_i32_1 = arith.constant 0 : i32
    return %arg0, %arg1, %c0_i32, %c0_i32_0 : i32, i32, i32, i32
  }
}

module attributes {stable_mosaic.version = 11 : i64} {
  func.func @_conv_band_kernel(%arg0: i32, %arg1: i32, %arg2: memref<1x1x15x16x8xbf16, #tpu.memory_space<vmem>>, %arg3: memref<1x1x15x16x8xbf16, #tpu.memory_space<vmem>>, %arg4: memref<4x144xbf16, #tpu.memory_space<vmem>>, %arg5: memref<1x1x4x49xbf16, #tpu.memory_space<vmem>>, %arg6: memref<1x1x4x1xf32, #tpu.memory_space<vmem>>, %arg7: memref<1x1x4x1xf32, #tpu.memory_space<vmem>>) attributes {dimension_semantics = [#tpu.dimension_semantics<parallel>, #tpu.dimension_semantics<parallel>], iteration_bounds = array<i64: 2, 1>, scalar_prefetch = 0 : i64, scratch_operands = 0 : i64, tpu.core_type = #tpu.core_type<tc>, window_params = [{transform_indices = @transform_0, window_bounds = array<i64: 1, 1, 15, 16, 8>}, {transform_indices = @transform_1, window_bounds = array<i64: 1, 1, 15, 16, 8>}, {pipeline_mode = #tpu.pipeline_mode<synchronous>, transform_indices = @transform_2, window_bounds = array<i64: 4, 144>}, {transform_indices = @transform_3, window_bounds = array<i64: 1, 1, 4, 49>}, {transform_indices = @transform_4, window_bounds = array<i64: 1, 1, 4, 1>}, {transform_indices = @transform_5, window_bounds = array<i64: 1, 1, 4, 1>}]} {
    %c0 = arith.constant 0 : index
    %c0_0 = arith.constant 0 : index
    %c0_1 = arith.constant 0 : index
    %c0_2 = arith.constant 0 : index
    %c0_3 = arith.constant 0 : index
    %0 = vector.load %arg2[%c0, %c0_0, %c0_1, %c0_2, %c0_3] : memref<1x1x15x16x8xbf16, #tpu.memory_space<vmem>>, vector<1x1x1x16x7xbf16>
    %1 = vector.shape_cast %0 : vector<1x1x1x16x7xbf16> to vector<16x7xbf16>
    %c0_4 = arith.constant 0 : index
    %c0_5 = arith.constant 0 : index
    %c2 = arith.constant 2 : index
    %c0_6 = arith.constant 0 : index
    %c0_7 = arith.constant 0 : index
    %2 = vector.load %arg2[%c0_4, %c0_5, %c2, %c0_6, %c0_7] : memref<1x1x15x16x8xbf16, #tpu.memory_space<vmem>>, vector<1x1x1x16x7xbf16>
    %3 = vector.shape_cast %2 : vector<1x1x1x16x7xbf16> to vector<16x7xbf16>
    %c0_8 = arith.constant 0 : index
    %c0_9 = arith.constant 0 : index
    %c4 = arith.constant 4 : index
    %c0_10 = arith.constant 0 : index
    %c0_11 = arith.constant 0 : index
    %4 = vector.load %arg2[%c0_8, %c0_9, %c4, %c0_10, %c0_11] : memref<1x1x15x16x8xbf16, #tpu.memory_space<vmem>>, vector<1x1x1x16x7xbf16>
    %5 = vector.shape_cast %4 : vector<1x1x1x16x7xbf16> to vector<16x7xbf16>
    %c0_12 = arith.constant 0 : index
    %c0_13 = arith.constant 0 : index
    %c6 = arith.constant 6 : index
    %c0_14 = arith.constant 0 : index
    %c0_15 = arith.constant 0 : index
    %6 = vector.load %arg2[%c0_12, %c0_13, %c6, %c0_14, %c0_15] : memref<1x1x15x16x8xbf16, #tpu.memory_space<vmem>>, vector<1x1x1x16x7xbf16>
    %7 = vector.shape_cast %6 : vector<1x1x1x16x7xbf16> to vector<16x7xbf16>
    %c0_16 = arith.constant 0 : index
    %c0_17 = arith.constant 0 : index
    %c8 = arith.constant 8 : index
    %c0_18 = arith.constant 0 : index
    %c0_19 = arith.constant 0 : index
    %8 = vector.load %arg2[%c0_16, %c0_17, %c8, %c0_18, %c0_19] : memref<1x1x15x16x8xbf16, #tpu.memory_space<vmem>>, vector<1x1x1x16x7xbf16>
    %9 = vector.shape_cast %8 : vector<1x1x1x16x7xbf16> to vector<16x7xbf16>
    %c0_20 = arith.constant 0 : index
    %c0_21 = arith.constant 0 : index
    %c10 = arith.constant 10 : index
    %c0_22 = arith.constant 0 : index
    %c0_23 = arith.constant 0 : index
    %10 = vector.load %arg2[%c0_20, %c0_21, %c10, %c0_22, %c0_23] : memref<1x1x15x16x8xbf16, #tpu.memory_space<vmem>>, vector<1x1x1x16x7xbf16>
    %11 = vector.shape_cast %10 : vector<1x1x1x16x7xbf16> to vector<16x7xbf16>
    %c0_24 = arith.constant 0 : index
    %c0_25 = arith.constant 0 : index
    %c12 = arith.constant 12 : index
    %c0_26 = arith.constant 0 : index
    %c0_27 = arith.constant 0 : index
    %12 = vector.load %arg2[%c0_24, %c0_25, %c12, %c0_26, %c0_27] : memref<1x1x15x16x8xbf16, #tpu.memory_space<vmem>>, vector<1x1x1x16x7xbf16>
    %13 = vector.shape_cast %12 : vector<1x1x1x16x7xbf16> to vector<16x7xbf16>
    %14 = tpu.concatenate %1, %3, %5, %7, %9, %11, %13 in 1 : vector<16x7xbf16>, vector<16x7xbf16>, vector<16x7xbf16>, vector<16x7xbf16>, vector<16x7xbf16>, vector<16x7xbf16>, vector<16x7xbf16> -> vector<16x49xbf16>
    %c0_28 = arith.constant 0 : index
    %c0_29 = arith.constant 0 : index
    %c0_30 = arith.constant 0 : index
    %c0_31 = arith.constant 0 : index
    %c0_32 = arith.constant 0 : index
    %15 = vector.load %arg3[%c0_28, %c0_29, %c0_30, %c0_31, %c0_32] : memref<1x1x15x16x8xbf16, #tpu.memory_space<vmem>>, vector<1x1x1x16x7xbf16>
    %16 = vector.shape_cast %15 : vector<1x1x1x16x7xbf16> to vector<16x7xbf16>
    %c0_33 = arith.constant 0 : index
    %c0_34 = arith.constant 0 : index
    %c2_35 = arith.constant 2 : index
    %c0_36 = arith.constant 0 : index
    %c0_37 = arith.constant 0 : index
    %17 = vector.load %arg3[%c0_33, %c0_34, %c2_35, %c0_36, %c0_37] : memref<1x1x15x16x8xbf16, #tpu.memory_space<vmem>>, vector<1x1x1x16x7xbf16>
    %18 = vector.shape_cast %17 : vector<1x1x1x16x7xbf16> to vector<16x7xbf16>
    %c0_38 = arith.constant 0 : index
    %c0_39 = arith.constant 0 : index
    %c4_40 = arith.constant 4 : index
    %c0_41 = arith.constant 0 : index
    %c0_42 = arith.constant 0 : index
    %19 = vector.load %arg3[%c0_38, %c0_39, %c4_40, %c0_41, %c0_42] : memref<1x1x15x16x8xbf16, #tpu.memory_space<vmem>>, vector<1x1x1x16x7xbf16>
    %20 = vector.shape_cast %19 : vector<1x1x1x16x7xbf16> to vector<16x7xbf16>
    %c0_43 = arith.constant 0 : index
    %c0_44 = arith.constant 0 : index
    %c6_45 = arith.constant 6 : index
    %c0_46 = arith.constant 0 : index
    %c0_47 = arith.constant 0 : index
    %21 = vector.load %arg3[%c0_43, %c0_44, %c6_45, %c0_46, %c0_47] : memref<1x1x15x16x8xbf16, #tpu.memory_space<vmem>>, vector<1x1x1x16x7xbf16>
    %22 = vector.shape_cast %21 : vector<1x1x1x16x7xbf16> to vector<16x7xbf16>
    %c0_48 = arith.constant 0 : index
    %c0_49 = arith.constant 0 : index
    %c8_50 = arith.constant 8 : index
    %c0_51 = arith.constant 0 : index
    %c0_52 = arith.constant 0 : index
    %23 = vector.load %arg3[%c0_48, %c0_49, %c8_50, %c0_51, %c0_52] : memref<1x1x15x16x8xbf16, #tpu.memory_space<vmem>>, vector<1x1x1x16x7xbf16>
    %24 = vector.shape_cast %23 : vector<1x1x1x16x7xbf16> to vector<16x7xbf16>
    %c0_53 = arith.constant 0 : index
    %c0_54 = arith.constant 0 : index
    %c10_55 = arith.constant 10 : index
    %c0_56 = arith.constant 0 : index
    %c0_57 = arith.constant 0 : index
    %25 = vector.load %arg3[%c0_53, %c0_54, %c10_55, %c0_56, %c0_57] : memref<1x1x15x16x8xbf16, #tpu.memory_space<vmem>>, vector<1x1x1x16x7xbf16>
    %26 = vector.shape_cast %25 : vector<1x1x1x16x7xbf16> to vector<16x7xbf16>
    %c0_58 = arith.constant 0 : index
    %c0_59 = arith.constant 0 : index
    %c12_60 = arith.constant 12 : index
    %c0_61 = arith.constant 0 : index
    %c0_62 = arith.constant 0 : index
    %27 = vector.load %arg3[%c0_58, %c0_59, %c12_60, %c0_61, %c0_62] : memref<1x1x15x16x8xbf16, #tpu.memory_space<vmem>>, vector<1x1x1x16x7xbf16>
    %28 = vector.shape_cast %27 : vector<1x1x1x16x7xbf16> to vector<16x7xbf16>
    %29 = tpu.concatenate %16, %18, %20, %22, %24, %26, %28 in 1 : vector<16x7xbf16>, vector<16x7xbf16>, vector<16x7xbf16>, vector<16x7xbf16>, vector<16x7xbf16>, vector<16x7xbf16>, vector<16x7xbf16> -> vector<16x49xbf16>
    %c0_63 = arith.constant 0 : index
    %c0_64 = arith.constant 0 : index
    %c0_65 = arith.constant 0 : index
    %c0_66 = arith.constant 0 : index
    %c1 = arith.constant 1 : index
    %30 = vector.load %arg2[%c0_63, %c0_64, %c0_65, %c0_66, %c1] : memref<1x1x15x16x8xbf16, #tpu.memory_space<vmem>>, vector<1x1x1x16x7xbf16>
    %31 = vector.shape_cast %30 : vector<1x1x1x16x7xbf16> to vector<16x7xbf16>
    %c0_67 = arith.constant 0 : index
    %c0_68 = arith.constant 0 : index
    %c2_69 = arith.constant 2 : index
    %c0_70 = arith.constant 0 : index
    %c1_71 = arith.constant 1 : index
    %32 = vector.load %arg2[%c0_67, %c0_68, %c2_69, %c0_70, %c1_71] : memref<1x1x15x16x8xbf16, #tpu.memory_space<vmem>>, vector<1x1x1x16x7xbf16>
    %33 = vector.shape_cast %32 : vector<1x1x1x16x7xbf16> to vector<16x7xbf16>
    %c0_72 = arith.constant 0 : index
    %c0_73 = arith.constant 0 : index
    %c4_74 = arith.constant 4 : index
    %c0_75 = arith.constant 0 : index
    %c1_76 = arith.constant 1 : index
    %34 = vector.load %arg2[%c0_72, %c0_73, %c4_74, %c0_75, %c1_76] : memref<1x1x15x16x8xbf16, #tpu.memory_space<vmem>>, vector<1x1x1x16x7xbf16>
    %35 = vector.shape_cast %34 : vector<1x1x1x16x7xbf16> to vector<16x7xbf16>
    %c0_77 = arith.constant 0 : index
    %c0_78 = arith.constant 0 : index
    %c6_79 = arith.constant 6 : index
    %c0_80 = arith.constant 0 : index
    %c1_81 = arith.constant 1 : index
    %36 = vector.load %arg2[%c0_77, %c0_78, %c6_79, %c0_80, %c1_81] : memref<1x1x15x16x8xbf16, #tpu.memory_space<vmem>>, vector<1x1x1x16x7xbf16>
    %37 = vector.shape_cast %36 : vector<1x1x1x16x7xbf16> to vector<16x7xbf16>
    %c0_82 = arith.constant 0 : index
    %c0_83 = arith.constant 0 : index
    %c8_84 = arith.constant 8 : index
    %c0_85 = arith.constant 0 : index
    %c1_86 = arith.constant 1 : index
    %38 = vector.load %arg2[%c0_82, %c0_83, %c8_84, %c0_85, %c1_86] : memref<1x1x15x16x8xbf16, #tpu.memory_space<vmem>>, vector<1x1x1x16x7xbf16>
    %39 = vector.shape_cast %38 : vector<1x1x1x16x7xbf16> to vector<16x7xbf16>
    %c0_87 = arith.constant 0 : index
    %c0_88 = arith.constant 0 : index
    %c10_89 = arith.constant 10 : index
    %c0_90 = arith.constant 0 : index
    %c1_91 = arith.constant 1 : index
    %40 = vector.load %arg2[%c0_87, %c0_88, %c10_89, %c0_90, %c1_91] : memref<1x1x15x16x8xbf16, #tpu.memory_space<vmem>>, vector<1x1x1x16x7xbf16>
    %41 = vector.shape_cast %40 : vector<1x1x1x16x7xbf16> to vector<16x7xbf16>
    %c0_92 = arith.constant 0 : index
    %c0_93 = arith.constant 0 : index
    %c12_94 = arith.constant 12 : index
    %c0_95 = arith.constant 0 : index
    %c1_96 = arith.constant 1 : index
    %42 = vector.load %arg2[%c0_92, %c0_93, %c12_94, %c0_95, %c1_96] : memref<1x1x15x16x8xbf16, #tpu.memory_space<vmem>>, vector<1x1x1x16x7xbf16>
    %43 = vector.shape_cast %42 : vector<1x1x1x16x7xbf16> to vector<16x7xbf16>
    %44 = tpu.concatenate %31, %33, %35, %37, %39, %41, %43 in 1 : vector<16x7xbf16>, vector<16x7xbf16>, vector<16x7xbf16>, vector<16x7xbf16>, vector<16x7xbf16>, vector<16x7xbf16>, vector<16x7xbf16> -> vector<16x49xbf16>
    %c0_97 = arith.constant 0 : index
    %c0_98 = arith.constant 0 : index
    %c1_99 = arith.constant 1 : index
    %c0_100 = arith.constant 0 : index
    %c0_101 = arith.constant 0 : index
    %45 = vector.load %arg2[%c0_97, %c0_98, %c1_99, %c0_100, %c0_101] : memref<1x1x15x16x8xbf16, #tpu.memory_space<vmem>>, vector<1x1x1x16x7xbf16>
    %46 = vector.shape_cast %45 : vector<1x1x1x16x7xbf16> to vector<16x7xbf16>
    %c0_102 = arith.constant 0 : index
    %c0_103 = arith.constant 0 : index
    %c3 = arith.constant 3 : index
    %c0_104 = arith.constant 0 : index
    %c0_105 = arith.constant 0 : index
    %47 = vector.load %arg2[%c0_102, %c0_103, %c3, %c0_104, %c0_105] : memref<1x1x15x16x8xbf16, #tpu.memory_space<vmem>>, vector<1x1x1x16x7xbf16>
    %48 = vector.shape_cast %47 : vector<1x1x1x16x7xbf16> to vector<16x7xbf16>
    %c0_106 = arith.constant 0 : index
    %c0_107 = arith.constant 0 : index
    %c5 = arith.constant 5 : index
    %c0_108 = arith.constant 0 : index
    %c0_109 = arith.constant 0 : index
    %49 = vector.load %arg2[%c0_106, %c0_107, %c5, %c0_108, %c0_109] : memref<1x1x15x16x8xbf16, #tpu.memory_space<vmem>>, vector<1x1x1x16x7xbf16>
    %50 = vector.shape_cast %49 : vector<1x1x1x16x7xbf16> to vector<16x7xbf16>
    %c0_110 = arith.constant 0 : index
    %c0_111 = arith.constant 0 : index
    %c7 = arith.constant 7 : index
    %c0_112 = arith.constant 0 : index
    %c0_113 = arith.constant 0 : index
    %51 = vector.load %arg2[%c0_110, %c0_111, %c7, %c0_112, %c0_113] : memref<1x1x15x16x8xbf16, #tpu.memory_space<vmem>>, vector<1x1x1x16x7xbf16>
    %52 = vector.shape_cast %51 : vector<1x1x1x16x7xbf16> to vector<16x7xbf16>
    %c0_114 = arith.constant 0 : index
    %c0_115 = arith.constant 0 : index
    %c9 = arith.constant 9 : index
    %c0_116 = arith.constant 0 : index
    %c0_117 = arith.constant 0 : index
    %53 = vector.load %arg2[%c0_114, %c0_115, %c9, %c0_116, %c0_117] : memref<1x1x15x16x8xbf16, #tpu.memory_space<vmem>>, vector<1x1x1x16x7xbf16>
    %54 = vector.shape_cast %53 : vector<1x1x1x16x7xbf16> to vector<16x7xbf16>
    %c0_118 = arith.constant 0 : index
    %c0_119 = arith.constant 0 : index
    %c11 = arith.constant 11 : index
    %c0_120 = arith.constant 0 : index
    %c0_121 = arith.constant 0 : index
    %55 = vector.load %arg2[%c0_118, %c0_119, %c11, %c0_120, %c0_121] : memref<1x1x15x16x8xbf16, #tpu.memory_space<vmem>>, vector<1x1x1x16x7xbf16>
    %56 = vector.shape_cast %55 : vector<1x1x1x16x7xbf16> to vector<16x7xbf16>
    %c0_122 = arith.constant 0 : index
    %c0_123 = arith.constant 0 : index
    %c13 = arith.constant 13 : index
    %c0_124 = arith.constant 0 : index
    %c0_125 = arith.constant 0 : index
    %57 = vector.load %arg2[%c0_122, %c0_123, %c13, %c0_124, %c0_125] : memref<1x1x15x16x8xbf16, #tpu.memory_space<vmem>>, vector<1x1x1x16x7xbf16>
    %58 = vector.shape_cast %57 : vector<1x1x1x16x7xbf16> to vector<16x7xbf16>
    %59 = tpu.concatenate %46, %48, %50, %52, %54, %56, %58 in 1 : vector<16x7xbf16>, vector<16x7xbf16>, vector<16x7xbf16>, vector<16x7xbf16>, vector<16x7xbf16>, vector<16x7xbf16>, vector<16x7xbf16> -> vector<16x49xbf16>
    %c0_126 = arith.constant 0 : index
    %c0_127 = arith.constant 0 : index
    %c1_128 = arith.constant 1 : index
    %c0_129 = arith.constant 0 : index
    %c0_130 = arith.constant 0 : index
    %60 = vector.load %arg3[%c0_126, %c0_127, %c1_128, %c0_129, %c0_130] : memref<1x1x15x16x8xbf16, #tpu.memory_space<vmem>>, vector<1x1x1x16x7xbf16>
    %61 = vector.shape_cast %60 : vector<1x1x1x16x7xbf16> to vector<16x7xbf16>
    %c0_131 = arith.constant 0 : index
    %c0_132 = arith.constant 0 : index
    %c3_133 = arith.constant 3 : index
    %c0_134 = arith.constant 0 : index
    %c0_135 = arith.constant 0 : index
    %62 = vector.load %arg3[%c0_131, %c0_132, %c3_133, %c0_134, %c0_135] : memref<1x1x15x16x8xbf16, #tpu.memory_space<vmem>>, vector<1x1x1x16x7xbf16>
    %63 = vector.shape_cast %62 : vector<1x1x1x16x7xbf16> to vector<16x7xbf16>
    %c0_136 = arith.constant 0 : index
    %c0_137 = arith.constant 0 : index
    %c5_138 = arith.constant 5 : index
    %c0_139 = arith.constant 0 : index
    %c0_140 = arith.constant 0 : index
    %64 = vector.load %arg3[%c0_136, %c0_137, %c5_138, %c0_139, %c0_140] : memref<1x1x15x16x8xbf16, #tpu.memory_space<vmem>>, vector<1x1x1x16x7xbf16>
    %65 = vector.shape_cast %64 : vector<1x1x1x16x7xbf16> to vector<16x7xbf16>
    %c0_141 = arith.constant 0 : index
    %c0_142 = arith.constant 0 : index
    %c7_143 = arith.constant 7 : index
    %c0_144 = arith.constant 0 : index
    %c0_145 = arith.constant 0 : index
    %66 = vector.load %arg3[%c0_141, %c0_142, %c7_143, %c0_144, %c0_145] : memref<1x1x15x16x8xbf16, #tpu.memory_space<vmem>>, vector<1x1x1x16x7xbf16>
    %67 = vector.shape_cast %66 : vector<1x1x1x16x7xbf16> to vector<16x7xbf16>
    %c0_146 = arith.constant 0 : index
    %c0_147 = arith.constant 0 : index
    %c9_148 = arith.constant 9 : index
    %c0_149 = arith.constant 0 : index
    %c0_150 = arith.constant 0 : index
    %68 = vector.load %arg3[%c0_146, %c0_147, %c9_148, %c0_149, %c0_150] : memref<1x1x15x16x8xbf16, #tpu.memory_space<vmem>>, vector<1x1x1x16x7xbf16>
    %69 = vector.shape_cast %68 : vector<1x1x1x16x7xbf16> to vector<16x7xbf16>
    %c0_151 = arith.constant 0 : index
    %c0_152 = arith.constant 0 : index
    %c11_153 = arith.constant 11 : index
    %c0_154 = arith.constant 0 : index
    %c0_155 = arith.constant 0 : index
    %70 = vector.load %arg3[%c0_151, %c0_152, %c11_153, %c0_154, %c0_155] : memref<1x1x15x16x8xbf16, #tpu.memory_space<vmem>>, vector<1x1x1x16x7xbf16>
    %71 = vector.shape_cast %70 : vector<1x1x1x16x7xbf16> to vector<16x7xbf16>
    %c0_156 = arith.constant 0 : index
    %c0_157 = arith.constant 0 : index
    %c13_158 = arith.constant 13 : index
    %c0_159 = arith.constant 0 : index
    %c0_160 = arith.constant 0 : index
    %72 = vector.load %arg3[%c0_156, %c0_157, %c13_158, %c0_159, %c0_160] : memref<1x1x15x16x8xbf16, #tpu.memory_space<vmem>>, vector<1x1x1x16x7xbf16>
    %73 = vector.shape_cast %72 : vector<1x1x1x16x7xbf16> to vector<16x7xbf16>
    %74 = tpu.concatenate %61, %63, %65, %67, %69, %71, %73 in 1 : vector<16x7xbf16>, vector<16x7xbf16>, vector<16x7xbf16>, vector<16x7xbf16>, vector<16x7xbf16>, vector<16x7xbf16>, vector<16x7xbf16> -> vector<16x49xbf16>
    %c0_161 = arith.constant 0 : index
    %c0_162 = arith.constant 0 : index
    %c1_163 = arith.constant 1 : index
    %c0_164 = arith.constant 0 : index
    %c1_165 = arith.constant 1 : index
    %75 = vector.load %arg2[%c0_161, %c0_162, %c1_163, %c0_164, %c1_165] : memref<1x1x15x16x8xbf16, #tpu.memory_space<vmem>>, vector<1x1x1x16x7xbf16>
    %76 = vector.shape_cast %75 : vector<1x1x1x16x7xbf16> to vector<16x7xbf16>
    %c0_166 = arith.constant 0 : index
    %c0_167 = arith.constant 0 : index
    %c3_168 = arith.constant 3 : index
    %c0_169 = arith.constant 0 : index
    %c1_170 = arith.constant 1 : index
    %77 = vector.load %arg2[%c0_166, %c0_167, %c3_168, %c0_169, %c1_170] : memref<1x1x15x16x8xbf16, #tpu.memory_space<vmem>>, vector<1x1x1x16x7xbf16>
    %78 = vector.shape_cast %77 : vector<1x1x1x16x7xbf16> to vector<16x7xbf16>
    %c0_171 = arith.constant 0 : index
    %c0_172 = arith.constant 0 : index
    %c5_173 = arith.constant 5 : index
    %c0_174 = arith.constant 0 : index
    %c1_175 = arith.constant 1 : index
    %79 = vector.load %arg2[%c0_171, %c0_172, %c5_173, %c0_174, %c1_175] : memref<1x1x15x16x8xbf16, #tpu.memory_space<vmem>>, vector<1x1x1x16x7xbf16>
    %80 = vector.shape_cast %79 : vector<1x1x1x16x7xbf16> to vector<16x7xbf16>
    %c0_176 = arith.constant 0 : index
    %c0_177 = arith.constant 0 : index
    %c7_178 = arith.constant 7 : index
    %c0_179 = arith.constant 0 : index
    %c1_180 = arith.constant 1 : index
    %81 = vector.load %arg2[%c0_176, %c0_177, %c7_178, %c0_179, %c1_180] : memref<1x1x15x16x8xbf16, #tpu.memory_space<vmem>>, vector<1x1x1x16x7xbf16>
    %82 = vector.shape_cast %81 : vector<1x1x1x16x7xbf16> to vector<16x7xbf16>
    %c0_181 = arith.constant 0 : index
    %c0_182 = arith.constant 0 : index
    %c9_183 = arith.constant 9 : index
    %c0_184 = arith.constant 0 : index
    %c1_185 = arith.constant 1 : index
    %83 = vector.load %arg2[%c0_181, %c0_182, %c9_183, %c0_184, %c1_185] : memref<1x1x15x16x8xbf16, #tpu.memory_space<vmem>>, vector<1x1x1x16x7xbf16>
    %84 = vector.shape_cast %83 : vector<1x1x1x16x7xbf16> to vector<16x7xbf16>
    %c0_186 = arith.constant 0 : index
    %c0_187 = arith.constant 0 : index
    %c11_188 = arith.constant 11 : index
    %c0_189 = arith.constant 0 : index
    %c1_190 = arith.constant 1 : index
    %85 = vector.load %arg2[%c0_186, %c0_187, %c11_188, %c0_189, %c1_190] : memref<1x1x15x16x8xbf16, #tpu.memory_space<vmem>>, vector<1x1x1x16x7xbf16>
    %86 = vector.shape_cast %85 : vector<1x1x1x16x7xbf16> to vector<16x7xbf16>
    %c0_191 = arith.constant 0 : index
    %c0_192 = arith.constant 0 : index
    %c13_193 = arith.constant 13 : index
    %c0_194 = arith.constant 0 : index
    %c1_195 = arith.constant 1 : index
    %87 = vector.load %arg2[%c0_191, %c0_192, %c13_193, %c0_194, %c1_195] : memref<1x1x15x16x8xbf16, #tpu.memory_space<vmem>>, vector<1x1x1x16x7xbf16>
    %88 = vector.shape_cast %87 : vector<1x1x1x16x7xbf16> to vector<16x7xbf16>
    %89 = tpu.concatenate %76, %78, %80, %82, %84, %86, %88 in 1 : vector<16x7xbf16>, vector<16x7xbf16>, vector<16x7xbf16>, vector<16x7xbf16>, vector<16x7xbf16>, vector<16x7xbf16>, vector<16x7xbf16> -> vector<16x49xbf16>
    %c0_196 = arith.constant 0 : index
    %c0_197 = arith.constant 0 : index
    %c2_198 = arith.constant 2 : index
    %c0_199 = arith.constant 0 : index
    %c0_200 = arith.constant 0 : index
    %90 = vector.load %arg2[%c0_196, %c0_197, %c2_198, %c0_199, %c0_200] : memref<1x1x15x16x8xbf16, #tpu.memory_space<vmem>>, vector<1x1x1x16x7xbf16>
    %91 = vector.shape_cast %90 : vector<1x1x1x16x7xbf16> to vector<16x7xbf16>
    %c0_201 = arith.constant 0 : index
    %c0_202 = arith.constant 0 : index
    %c4_203 = arith.constant 4 : index
    %c0_204 = arith.constant 0 : index
    %c0_205 = arith.constant 0 : index
    %92 = vector.load %arg2[%c0_201, %c0_202, %c4_203, %c0_204, %c0_205] : memref<1x1x15x16x8xbf16, #tpu.memory_space<vmem>>, vector<1x1x1x16x7xbf16>
    %93 = vector.shape_cast %92 : vector<1x1x1x16x7xbf16> to vector<16x7xbf16>
    %c0_206 = arith.constant 0 : index
    %c0_207 = arith.constant 0 : index
    %c6_208 = arith.constant 6 : index
    %c0_209 = arith.constant 0 : index
    %c0_210 = arith.constant 0 : index
    %94 = vector.load %arg2[%c0_206, %c0_207, %c6_208, %c0_209, %c0_210] : memref<1x1x15x16x8xbf16, #tpu.memory_space<vmem>>, vector<1x1x1x16x7xbf16>
    %95 = vector.shape_cast %94 : vector<1x1x1x16x7xbf16> to vector<16x7xbf16>
    %c0_211 = arith.constant 0 : index
    %c0_212 = arith.constant 0 : index
    %c8_213 = arith.constant 8 : index
    %c0_214 = arith.constant 0 : index
    %c0_215 = arith.constant 0 : index
    %96 = vector.load %arg2[%c0_211, %c0_212, %c8_213, %c0_214, %c0_215] : memref<1x1x15x16x8xbf16, #tpu.memory_space<vmem>>, vector<1x1x1x16x7xbf16>
    %97 = vector.shape_cast %96 : vector<1x1x1x16x7xbf16> to vector<16x7xbf16>
    %c0_216 = arith.constant 0 : index
    %c0_217 = arith.constant 0 : index
    %c10_218 = arith.constant 10 : index
    %c0_219 = arith.constant 0 : index
    %c0_220 = arith.constant 0 : index
    %98 = vector.load %arg2[%c0_216, %c0_217, %c10_218, %c0_219, %c0_220] : memref<1x1x15x16x8xbf16, #tpu.memory_space<vmem>>, vector<1x1x1x16x7xbf16>
    %99 = vector.shape_cast %98 : vector<1x1x1x16x7xbf16> to vector<16x7xbf16>
    %c0_221 = arith.constant 0 : index
    %c0_222 = arith.constant 0 : index
    %c12_223 = arith.constant 12 : index
    %c0_224 = arith.constant 0 : index
    %c0_225 = arith.constant 0 : index
    %100 = vector.load %arg2[%c0_221, %c0_222, %c12_223, %c0_224, %c0_225] : memref<1x1x15x16x8xbf16, #tpu.memory_space<vmem>>, vector<1x1x1x16x7xbf16>
    %101 = vector.shape_cast %100 : vector<1x1x1x16x7xbf16> to vector<16x7xbf16>
    %c0_226 = arith.constant 0 : index
    %c0_227 = arith.constant 0 : index
    %c14 = arith.constant 14 : index
    %c0_228 = arith.constant 0 : index
    %c0_229 = arith.constant 0 : index
    %102 = vector.load %arg2[%c0_226, %c0_227, %c14, %c0_228, %c0_229] : memref<1x1x15x16x8xbf16, #tpu.memory_space<vmem>>, vector<1x1x1x16x7xbf16>
    %103 = vector.shape_cast %102 : vector<1x1x1x16x7xbf16> to vector<16x7xbf16>
    %104 = tpu.concatenate %91, %93, %95, %97, %99, %101, %103 in 1 : vector<16x7xbf16>, vector<16x7xbf16>, vector<16x7xbf16>, vector<16x7xbf16>, vector<16x7xbf16>, vector<16x7xbf16>, vector<16x7xbf16> -> vector<16x49xbf16>
    %c0_230 = arith.constant 0 : index
    %c0_231 = arith.constant 0 : index
    %c2_232 = arith.constant 2 : index
    %c0_233 = arith.constant 0 : index
    %c0_234 = arith.constant 0 : index
    %105 = vector.load %arg3[%c0_230, %c0_231, %c2_232, %c0_233, %c0_234] : memref<1x1x15x16x8xbf16, #tpu.memory_space<vmem>>, vector<1x1x1x16x7xbf16>
    %106 = vector.shape_cast %105 : vector<1x1x1x16x7xbf16> to vector<16x7xbf16>
    %c0_235 = arith.constant 0 : index
    %c0_236 = arith.constant 0 : index
    %c4_237 = arith.constant 4 : index
    %c0_238 = arith.constant 0 : index
    %c0_239 = arith.constant 0 : index
    %107 = vector.load %arg3[%c0_235, %c0_236, %c4_237, %c0_238, %c0_239] : memref<1x1x15x16x8xbf16, #tpu.memory_space<vmem>>, vector<1x1x1x16x7xbf16>
    %108 = vector.shape_cast %107 : vector<1x1x1x16x7xbf16> to vector<16x7xbf16>
    %c0_240 = arith.constant 0 : index
    %c0_241 = arith.constant 0 : index
    %c6_242 = arith.constant 6 : index
    %c0_243 = arith.constant 0 : index
    %c0_244 = arith.constant 0 : index
    %109 = vector.load %arg3[%c0_240, %c0_241, %c6_242, %c0_243, %c0_244] : memref<1x1x15x16x8xbf16, #tpu.memory_space<vmem>>, vector<1x1x1x16x7xbf16>
    %110 = vector.shape_cast %109 : vector<1x1x1x16x7xbf16> to vector<16x7xbf16>
    %c0_245 = arith.constant 0 : index
    %c0_246 = arith.constant 0 : index
    %c8_247 = arith.constant 8 : index
    %c0_248 = arith.constant 0 : index
    %c0_249 = arith.constant 0 : index
    %111 = vector.load %arg3[%c0_245, %c0_246, %c8_247, %c0_248, %c0_249] : memref<1x1x15x16x8xbf16, #tpu.memory_space<vmem>>, vector<1x1x1x16x7xbf16>
    %112 = vector.shape_cast %111 : vector<1x1x1x16x7xbf16> to vector<16x7xbf16>
    %c0_250 = arith.constant 0 : index
    %c0_251 = arith.constant 0 : index
    %c10_252 = arith.constant 10 : index
    %c0_253 = arith.constant 0 : index
    %c0_254 = arith.constant 0 : index
    %113 = vector.load %arg3[%c0_250, %c0_251, %c10_252, %c0_253, %c0_254] : memref<1x1x15x16x8xbf16, #tpu.memory_space<vmem>>, vector<1x1x1x16x7xbf16>
    %114 = vector.shape_cast %113 : vector<1x1x1x16x7xbf16> to vector<16x7xbf16>
    %c0_255 = arith.constant 0 : index
    %c0_256 = arith.constant 0 : index
    %c12_257 = arith.constant 12 : index
    %c0_258 = arith.constant 0 : index
    %c0_259 = arith.constant 0 : index
    %115 = vector.load %arg3[%c0_255, %c0_256, %c12_257, %c0_258, %c0_259] : memref<1x1x15x16x8xbf16, #tpu.memory_space<vmem>>, vector<1x1x1x16x7xbf16>
    %116 = vector.shape_cast %115 : vector<1x1x1x16x7xbf16> to vector<16x7xbf16>
    %c0_260 = arith.constant 0 : index
    %c0_261 = arith.constant 0 : index
    %c14_262 = arith.constant 14 : index
    %c0_263 = arith.constant 0 : index
    %c0_264 = arith.constant 0 : index
    %117 = vector.load %arg3[%c0_260, %c0_261, %c14_262, %c0_263, %c0_264] : memref<1x1x15x16x8xbf16, #tpu.memory_space<vmem>>, vector<1x1x1x16x7xbf16>
    %118 = vector.shape_cast %117 : vector<1x1x1x16x7xbf16> to vector<16x7xbf16>
    %119 = tpu.concatenate %106, %108, %110, %112, %114, %116, %118 in 1 : vector<16x7xbf16>, vector<16x7xbf16>, vector<16x7xbf16>, vector<16x7xbf16>, vector<16x7xbf16>, vector<16x7xbf16>, vector<16x7xbf16> -> vector<16x49xbf16>
    %c0_265 = arith.constant 0 : index
    %c0_266 = arith.constant 0 : index
    %c2_267 = arith.constant 2 : index
    %c0_268 = arith.constant 0 : index
    %c1_269 = arith.constant 1 : index
    %120 = vector.load %arg2[%c0_265, %c0_266, %c2_267, %c0_268, %c1_269] : memref<1x1x15x16x8xbf16, #tpu.memory_space<vmem>>, vector<1x1x1x16x7xbf16>
    %121 = vector.shape_cast %120 : vector<1x1x1x16x7xbf16> to vector<16x7xbf16>
    %c0_270 = arith.constant 0 : index
    %c0_271 = arith.constant 0 : index
    %c4_272 = arith.constant 4 : index
    %c0_273 = arith.constant 0 : index
    %c1_274 = arith.constant 1 : index
    %122 = vector.load %arg2[%c0_270, %c0_271, %c4_272, %c0_273, %c1_274] : memref<1x1x15x16x8xbf16, #tpu.memory_space<vmem>>, vector<1x1x1x16x7xbf16>
    %123 = vector.shape_cast %122 : vector<1x1x1x16x7xbf16> to vector<16x7xbf16>
    %c0_275 = arith.constant 0 : index
    %c0_276 = arith.constant 0 : index
    %c6_277 = arith.constant 6 : index
    %c0_278 = arith.constant 0 : index
    %c1_279 = arith.constant 1 : index
    %124 = vector.load %arg2[%c0_275, %c0_276, %c6_277, %c0_278, %c1_279] : memref<1x1x15x16x8xbf16, #tpu.memory_space<vmem>>, vector<1x1x1x16x7xbf16>
    %125 = vector.shape_cast %124 : vector<1x1x1x16x7xbf16> to vector<16x7xbf16>
    %c0_280 = arith.constant 0 : index
    %c0_281 = arith.constant 0 : index
    %c8_282 = arith.constant 8 : index
    %c0_283 = arith.constant 0 : index
    %c1_284 = arith.constant 1 : index
    %126 = vector.load %arg2[%c0_280, %c0_281, %c8_282, %c0_283, %c1_284] : memref<1x1x15x16x8xbf16, #tpu.memory_space<vmem>>, vector<1x1x1x16x7xbf16>
    %127 = vector.shape_cast %126 : vector<1x1x1x16x7xbf16> to vector<16x7xbf16>
    %c0_285 = arith.constant 0 : index
    %c0_286 = arith.constant 0 : index
    %c10_287 = arith.constant 10 : index
    %c0_288 = arith.constant 0 : index
    %c1_289 = arith.constant 1 : index
    %128 = vector.load %arg2[%c0_285, %c0_286, %c10_287, %c0_288, %c1_289] : memref<1x1x15x16x8xbf16, #tpu.memory_space<vmem>>, vector<1x1x1x16x7xbf16>
    %129 = vector.shape_cast %128 : vector<1x1x1x16x7xbf16> to vector<16x7xbf16>
    %c0_290 = arith.constant 0 : index
    %c0_291 = arith.constant 0 : index
    %c12_292 = arith.constant 12 : index
    %c0_293 = arith.constant 0 : index
    %c1_294 = arith.constant 1 : index
    %130 = vector.load %arg2[%c0_290, %c0_291, %c12_292, %c0_293, %c1_294] : memref<1x1x15x16x8xbf16, #tpu.memory_space<vmem>>, vector<1x1x1x16x7xbf16>
    %131 = vector.shape_cast %130 : vector<1x1x1x16x7xbf16> to vector<16x7xbf16>
    %c0_295 = arith.constant 0 : index
    %c0_296 = arith.constant 0 : index
    %c14_297 = arith.constant 14 : index
    %c0_298 = arith.constant 0 : index
    %c1_299 = arith.constant 1 : index
    %132 = vector.load %arg2[%c0_295, %c0_296, %c14_297, %c0_298, %c1_299] : memref<1x1x15x16x8xbf16, #tpu.memory_space<vmem>>, vector<1x1x1x16x7xbf16>
    %133 = vector.shape_cast %132 : vector<1x1x1x16x7xbf16> to vector<16x7xbf16>
    %134 = tpu.concatenate %121, %123, %125, %127, %129, %131, %133 in 1 : vector<16x7xbf16>, vector<16x7xbf16>, vector<16x7xbf16>, vector<16x7xbf16>, vector<16x7xbf16>, vector<16x7xbf16>, vector<16x7xbf16> -> vector<16x49xbf16>
    %135 = tpu.concatenate %14, %29, %44, %59, %74, %89, %104, %119, %134 in 0 : vector<16x49xbf16>, vector<16x49xbf16>, vector<16x49xbf16>, vector<16x49xbf16>, vector<16x49xbf16>, vector<16x49xbf16>, vector<16x49xbf16>, vector<16x49xbf16>, vector<16x49xbf16> -> vector<144x49xbf16>
    %c0_300 = arith.constant 0 : index
    %c0_301 = arith.constant 0 : index
    %136 = vector.load %arg4[%c0_300, %c0_301] : memref<4x144xbf16, #tpu.memory_space<vmem>>, vector<4x144xbf16>
    %cst = arith.constant dense<0.000000e+00> : vector<4x49xf32>
    %137 = tpu.matmul %136, %135, %cst {dimension_numbers = #tpu.dot_dimension_numbers<[1], [0], [0], [1], [0, 0, 1, 1], [], []>} : vector<4x144xbf16>, vector<144x49xbf16>, vector<4x49xf32> -> vector<4x49xf32>
    %138 = arith.truncf %137 : vector<4x49xf32> to vector<4x49xbf16>
    %c0_302 = arith.constant 0 : index
    %c0_303 = arith.constant 0 : index
    %c0_304 = arith.constant 0 : index
    %c0_305 = arith.constant 0 : index
    %139 = vector.load %arg5[%c0_302, %c0_303, %c0_304, %c0_305] : memref<1x1x4x49xbf16, #tpu.memory_space<vmem>>, vector<1x1x4x49xbf16>
    %140 = vector.shape_cast %139 : vector<1x1x4x49xbf16> to vector<4x49xbf16>
    %141 = vector.shape_cast %138 : vector<4x49xbf16> to vector<1x1x4x49xbf16>
    tpu.vector_store %arg5[%c0_302, %c0_303, %c0_304, %c0_305], %141 {strides = array<i32>} : memref<1x1x4x49xbf16, #tpu.memory_space<vmem>>, vector<1x1x4x49xbf16>,
    %cst_306 = arith.constant dense<0.000000e+00> : vector<4xf32>
    %142 = vector.multi_reduction <add>, %137, %cst_306 [1] : vector<4x49xf32> to vector<4xf32>
    %143 = vector.shape_cast %142 : vector<4xf32> to vector<4x1xf32>
    %c0_307 = arith.constant 0 : index
    %c0_308 = arith.constant 0 : index
    %c0_309 = arith.constant 0 : index
    %c0_310 = arith.constant 0 : index
    %144 = vector.load %arg6[%c0_307, %c0_308, %c0_309, %c0_310] : memref<1x1x4x1xf32, #tpu.memory_space<vmem>>, vector<1x1x4x1xf32>
    %145 = vector.shape_cast %144 : vector<1x1x4x1xf32> to vector<4x1xf32>
    %146 = vector.shape_cast %143 : vector<4x1xf32> to vector<1x1x4x1xf32>
    tpu.vector_store %arg6[%c0_307, %c0_308, %c0_309, %c0_310], %146 {strides = array<i32>} : memref<1x1x4x1xf32, #tpu.memory_space<vmem>>, vector<1x1x4x1xf32>,
    %147 = arith.mulf %137, %137 : vector<4x49xf32>
    %cst_311 = arith.constant dense<0.000000e+00> : vector<4xf32>
    %148 = vector.multi_reduction <add>, %147, %cst_311 [1] : vector<4x49xf32> to vector<4xf32>
    %149 = vector.shape_cast %148 : vector<4xf32> to vector<4x1xf32>
    %c0_312 = arith.constant 0 : index
    %c0_313 = arith.constant 0 : index
    %c0_314 = arith.constant 0 : index
    %c0_315 = arith.constant 0 : index
    %150 = vector.load %arg7[%c0_312, %c0_313, %c0_314, %c0_315] : memref<1x1x4x1xf32, #tpu.memory_space<vmem>>, vector<1x1x4x1xf32>
    %151 = vector.shape_cast %150 : vector<1x1x4x1xf32> to vector<4x1xf32>
    %152 = vector.shape_cast %149 : vector<4x1xf32> to vector<1x1x4x1xf32>
    tpu.vector_store %arg7[%c0_312, %c0_313, %c0_314, %c0_315], %152 {strides = array<i32>} : memref<1x1x4x1xf32, #tpu.memory_space<vmem>>, vector<1x1x4x1xf32>,
    return
  }
  func.func @transform_0(%arg0: i32, %arg1: i32) -> (i32, i32, i32, i32, i32) {
    %c0_i32 = arith.constant 0 : i32
    %c0_i32_0 = arith.constant 0 : i32
    %c0_i32_1 = arith.constant 0 : i32
    %c0_i32_2 = arith.constant 0 : i32
    return %arg0, %arg1, %c0_i32, %c0_i32_0, %c0_i32_1 : i32, i32, i32, i32, i32
  }
  func.func @transform_1(%arg0: i32, %arg1: i32) -> (i32, i32, i32, i32, i32) {
    %c0_i32 = arith.constant 0 : i32
    %c0_i32_0 = arith.constant 0 : i32
    %c0_i32_1 = arith.constant 0 : i32
    %c0_i32_2 = arith.constant 0 : i32
    return %arg0, %arg1, %c0_i32, %c0_i32_0, %c0_i32_1 : i32, i32, i32, i32, i32
  }
  func.func @transform_2(%arg0: i32, %arg1: i32) -> (i32, i32) {
    %c0_i32 = arith.constant 0 : i32
    %c0_i32_0 = arith.constant 0 : i32
    %c0_i32_1 = arith.constant 0 : i32
    return %c0_i32, %c0_i32_0 : i32, i32
  }
  func.func @transform_3(%arg0: i32, %arg1: i32) -> (i32, i32, i32, i32) {
    %c0_i32 = arith.constant 0 : i32
    %c0_i32_0 = arith.constant 0 : i32
    %c0_i32_1 = arith.constant 0 : i32
    return %arg0, %arg1, %c0_i32, %c0_i32_0 : i32, i32, i32, i32
  }
  func.func @transform_4(%arg0: i32, %arg1: i32) -> (i32, i32, i32, i32) {
    %c0_i32 = arith.constant 0 : i32
    %c0_i32_0 = arith.constant 0 : i32
    %c0_i32_1 = arith.constant 0 : i32
    return %arg0, %arg1, %c0_i32, %c0_i32_0 : i32, i32, i32, i32
  }
  func.func @transform_5(%arg0: i32, %arg1: i32) -> (i32, i32, i32, i32) {
    %c0_i32 = arith.constant 0 : i32
    %c0_i32_0 = arith.constant 0 : i32
    %c0_i32_1 = arith.constant 0 : i32
    return %arg0, %arg1, %c0_i32, %c0_i32_0 : i32, i32, i32, i32
  }
}

module attributes {stable_mosaic.version = 11 : i64} {
  func.func @_conv_band_kernel(%arg0: i32, %arg1: i32, %arg2: memref<1x1x9x16x9xbf16, #tpu.memory_space<vmem>>, %arg3: memref<8x144xbf16, #tpu.memory_space<vmem>>, %arg4: memref<1x1x8x49xbf16, #tpu.memory_space<vmem>>, %arg5: memref<1x1x8x1xf32, #tpu.memory_space<vmem>>, %arg6: memref<1x1x8x1xf32, #tpu.memory_space<vmem>>) attributes {dimension_semantics = [#tpu.dimension_semantics<parallel>, #tpu.dimension_semantics<parallel>], iteration_bounds = array<i64: 2, 1>, scalar_prefetch = 0 : i64, scratch_operands = 0 : i64, tpu.core_type = #tpu.core_type<tc>, window_params = [{transform_indices = @transform_0, window_bounds = array<i64: 1, 1, 9, 16, 9>}, {pipeline_mode = #tpu.pipeline_mode<synchronous>, transform_indices = @transform_1, window_bounds = array<i64: 8, 144>}, {transform_indices = @transform_2, window_bounds = array<i64: 1, 1, 8, 49>}, {transform_indices = @transform_3, window_bounds = array<i64: 1, 1, 8, 1>}, {transform_indices = @transform_4, window_bounds = array<i64: 1, 1, 8, 1>}]} {
    %c0 = arith.constant 0 : index
    %c0_0 = arith.constant 0 : index
    %c0_1 = arith.constant 0 : index
    %c0_2 = arith.constant 0 : index
    %c0_3 = arith.constant 0 : index
    %0 = vector.load %arg2[%c0, %c0_0, %c0_1, %c0_2, %c0_3] : memref<1x1x9x16x9xbf16, #tpu.memory_space<vmem>>, vector<1x1x1x16x7xbf16>
    %1 = vector.shape_cast %0 : vector<1x1x1x16x7xbf16> to vector<16x7xbf16>
    %c0_4 = arith.constant 0 : index
    %c0_5 = arith.constant 0 : index
    %c1 = arith.constant 1 : index
    %c0_6 = arith.constant 0 : index
    %c0_7 = arith.constant 0 : index
    %2 = vector.load %arg2[%c0_4, %c0_5, %c1, %c0_6, %c0_7] : memref<1x1x9x16x9xbf16, #tpu.memory_space<vmem>>, vector<1x1x1x16x7xbf16>
    %3 = vector.shape_cast %2 : vector<1x1x1x16x7xbf16> to vector<16x7xbf16>
    %c0_8 = arith.constant 0 : index
    %c0_9 = arith.constant 0 : index
    %c2 = arith.constant 2 : index
    %c0_10 = arith.constant 0 : index
    %c0_11 = arith.constant 0 : index
    %4 = vector.load %arg2[%c0_8, %c0_9, %c2, %c0_10, %c0_11] : memref<1x1x9x16x9xbf16, #tpu.memory_space<vmem>>, vector<1x1x1x16x7xbf16>
    %5 = vector.shape_cast %4 : vector<1x1x1x16x7xbf16> to vector<16x7xbf16>
    %c0_12 = arith.constant 0 : index
    %c0_13 = arith.constant 0 : index
    %c3 = arith.constant 3 : index
    %c0_14 = arith.constant 0 : index
    %c0_15 = arith.constant 0 : index
    %6 = vector.load %arg2[%c0_12, %c0_13, %c3, %c0_14, %c0_15] : memref<1x1x9x16x9xbf16, #tpu.memory_space<vmem>>, vector<1x1x1x16x7xbf16>
    %7 = vector.shape_cast %6 : vector<1x1x1x16x7xbf16> to vector<16x7xbf16>
    %c0_16 = arith.constant 0 : index
    %c0_17 = arith.constant 0 : index
    %c4 = arith.constant 4 : index
    %c0_18 = arith.constant 0 : index
    %c0_19 = arith.constant 0 : index
    %8 = vector.load %arg2[%c0_16, %c0_17, %c4, %c0_18, %c0_19] : memref<1x1x9x16x9xbf16, #tpu.memory_space<vmem>>, vector<1x1x1x16x7xbf16>
    %9 = vector.shape_cast %8 : vector<1x1x1x16x7xbf16> to vector<16x7xbf16>
    %c0_20 = arith.constant 0 : index
    %c0_21 = arith.constant 0 : index
    %c5 = arith.constant 5 : index
    %c0_22 = arith.constant 0 : index
    %c0_23 = arith.constant 0 : index
    %10 = vector.load %arg2[%c0_20, %c0_21, %c5, %c0_22, %c0_23] : memref<1x1x9x16x9xbf16, #tpu.memory_space<vmem>>, vector<1x1x1x16x7xbf16>
    %11 = vector.shape_cast %10 : vector<1x1x1x16x7xbf16> to vector<16x7xbf16>
    %c0_24 = arith.constant 0 : index
    %c0_25 = arith.constant 0 : index
    %c6 = arith.constant 6 : index
    %c0_26 = arith.constant 0 : index
    %c0_27 = arith.constant 0 : index
    %12 = vector.load %arg2[%c0_24, %c0_25, %c6, %c0_26, %c0_27] : memref<1x1x9x16x9xbf16, #tpu.memory_space<vmem>>, vector<1x1x1x16x7xbf16>
    %13 = vector.shape_cast %12 : vector<1x1x1x16x7xbf16> to vector<16x7xbf16>
    %14 = tpu.concatenate %1, %3, %5, %7, %9, %11, %13 in 1 : vector<16x7xbf16>, vector<16x7xbf16>, vector<16x7xbf16>, vector<16x7xbf16>, vector<16x7xbf16>, vector<16x7xbf16>, vector<16x7xbf16> -> vector<16x49xbf16>
    %c0_28 = arith.constant 0 : index
    %c0_29 = arith.constant 0 : index
    %c0_30 = arith.constant 0 : index
    %c0_31 = arith.constant 0 : index
    %c1_32 = arith.constant 1 : index
    %15 = vector.load %arg2[%c0_28, %c0_29, %c0_30, %c0_31, %c1_32] : memref<1x1x9x16x9xbf16, #tpu.memory_space<vmem>>, vector<1x1x1x16x7xbf16>
    %16 = vector.shape_cast %15 : vector<1x1x1x16x7xbf16> to vector<16x7xbf16>
    %c0_33 = arith.constant 0 : index
    %c0_34 = arith.constant 0 : index
    %c1_35 = arith.constant 1 : index
    %c0_36 = arith.constant 0 : index
    %c1_37 = arith.constant 1 : index
    %17 = vector.load %arg2[%c0_33, %c0_34, %c1_35, %c0_36, %c1_37] : memref<1x1x9x16x9xbf16, #tpu.memory_space<vmem>>, vector<1x1x1x16x7xbf16>
    %18 = vector.shape_cast %17 : vector<1x1x1x16x7xbf16> to vector<16x7xbf16>
    %c0_38 = arith.constant 0 : index
    %c0_39 = arith.constant 0 : index
    %c2_40 = arith.constant 2 : index
    %c0_41 = arith.constant 0 : index
    %c1_42 = arith.constant 1 : index
    %19 = vector.load %arg2[%c0_38, %c0_39, %c2_40, %c0_41, %c1_42] : memref<1x1x9x16x9xbf16, #tpu.memory_space<vmem>>, vector<1x1x1x16x7xbf16>
    %20 = vector.shape_cast %19 : vector<1x1x1x16x7xbf16> to vector<16x7xbf16>
    %c0_43 = arith.constant 0 : index
    %c0_44 = arith.constant 0 : index
    %c3_45 = arith.constant 3 : index
    %c0_46 = arith.constant 0 : index
    %c1_47 = arith.constant 1 : index
    %21 = vector.load %arg2[%c0_43, %c0_44, %c3_45, %c0_46, %c1_47] : memref<1x1x9x16x9xbf16, #tpu.memory_space<vmem>>, vector<1x1x1x16x7xbf16>
    %22 = vector.shape_cast %21 : vector<1x1x1x16x7xbf16> to vector<16x7xbf16>
    %c0_48 = arith.constant 0 : index
    %c0_49 = arith.constant 0 : index
    %c4_50 = arith.constant 4 : index
    %c0_51 = arith.constant 0 : index
    %c1_52 = arith.constant 1 : index
    %23 = vector.load %arg2[%c0_48, %c0_49, %c4_50, %c0_51, %c1_52] : memref<1x1x9x16x9xbf16, #tpu.memory_space<vmem>>, vector<1x1x1x16x7xbf16>
    %24 = vector.shape_cast %23 : vector<1x1x1x16x7xbf16> to vector<16x7xbf16>
    %c0_53 = arith.constant 0 : index
    %c0_54 = arith.constant 0 : index
    %c5_55 = arith.constant 5 : index
    %c0_56 = arith.constant 0 : index
    %c1_57 = arith.constant 1 : index
    %25 = vector.load %arg2[%c0_53, %c0_54, %c5_55, %c0_56, %c1_57] : memref<1x1x9x16x9xbf16, #tpu.memory_space<vmem>>, vector<1x1x1x16x7xbf16>
    %26 = vector.shape_cast %25 : vector<1x1x1x16x7xbf16> to vector<16x7xbf16>
    %c0_58 = arith.constant 0 : index
    %c0_59 = arith.constant 0 : index
    %c6_60 = arith.constant 6 : index
    %c0_61 = arith.constant 0 : index
    %c1_62 = arith.constant 1 : index
    %27 = vector.load %arg2[%c0_58, %c0_59, %c6_60, %c0_61, %c1_62] : memref<1x1x9x16x9xbf16, #tpu.memory_space<vmem>>, vector<1x1x1x16x7xbf16>
    %28 = vector.shape_cast %27 : vector<1x1x1x16x7xbf16> to vector<16x7xbf16>
    %29 = tpu.concatenate %16, %18, %20, %22, %24, %26, %28 in 1 : vector<16x7xbf16>, vector<16x7xbf16>, vector<16x7xbf16>, vector<16x7xbf16>, vector<16x7xbf16>, vector<16x7xbf16>, vector<16x7xbf16> -> vector<16x49xbf16>
    %c0_63 = arith.constant 0 : index
    %c0_64 = arith.constant 0 : index
    %c0_65 = arith.constant 0 : index
    %c0_66 = arith.constant 0 : index
    %c2_67 = arith.constant 2 : index
    %30 = vector.load %arg2[%c0_63, %c0_64, %c0_65, %c0_66, %c2_67] : memref<1x1x9x16x9xbf16, #tpu.memory_space<vmem>>, vector<1x1x1x16x7xbf16>
    %31 = vector.shape_cast %30 : vector<1x1x1x16x7xbf16> to vector<16x7xbf16>
    %c0_68 = arith.constant 0 : index
    %c0_69 = arith.constant 0 : index
    %c1_70 = arith.constant 1 : index
    %c0_71 = arith.constant 0 : index
    %c2_72 = arith.constant 2 : index
    %32 = vector.load %arg2[%c0_68, %c0_69, %c1_70, %c0_71, %c2_72] : memref<1x1x9x16x9xbf16, #tpu.memory_space<vmem>>, vector<1x1x1x16x7xbf16>
    %33 = vector.shape_cast %32 : vector<1x1x1x16x7xbf16> to vector<16x7xbf16>
    %c0_73 = arith.constant 0 : index
    %c0_74 = arith.constant 0 : index
    %c2_75 = arith.constant 2 : index
    %c0_76 = arith.constant 0 : index
    %c2_77 = arith.constant 2 : index
    %34 = vector.load %arg2[%c0_73, %c0_74, %c2_75, %c0_76, %c2_77] : memref<1x1x9x16x9xbf16, #tpu.memory_space<vmem>>, vector<1x1x1x16x7xbf16>
    %35 = vector.shape_cast %34 : vector<1x1x1x16x7xbf16> to vector<16x7xbf16>
    %c0_78 = arith.constant 0 : index
    %c0_79 = arith.constant 0 : index
    %c3_80 = arith.constant 3 : index
    %c0_81 = arith.constant 0 : index
    %c2_82 = arith.constant 2 : index
    %36 = vector.load %arg2[%c0_78, %c0_79, %c3_80, %c0_81, %c2_82] : memref<1x1x9x16x9xbf16, #tpu.memory_space<vmem>>, vector<1x1x1x16x7xbf16>
    %37 = vector.shape_cast %36 : vector<1x1x1x16x7xbf16> to vector<16x7xbf16>
    %c0_83 = arith.constant 0 : index
    %c0_84 = arith.constant 0 : index
    %c4_85 = arith.constant 4 : index
    %c0_86 = arith.constant 0 : index
    %c2_87 = arith.constant 2 : index
    %38 = vector.load %arg2[%c0_83, %c0_84, %c4_85, %c0_86, %c2_87] : memref<1x1x9x16x9xbf16, #tpu.memory_space<vmem>>, vector<1x1x1x16x7xbf16>
    %39 = vector.shape_cast %38 : vector<1x1x1x16x7xbf16> to vector<16x7xbf16>
    %c0_88 = arith.constant 0 : index
    %c0_89 = arith.constant 0 : index
    %c5_90 = arith.constant 5 : index
    %c0_91 = arith.constant 0 : index
    %c2_92 = arith.constant 2 : index
    %40 = vector.load %arg2[%c0_88, %c0_89, %c5_90, %c0_91, %c2_92] : memref<1x1x9x16x9xbf16, #tpu.memory_space<vmem>>, vector<1x1x1x16x7xbf16>
    %41 = vector.shape_cast %40 : vector<1x1x1x16x7xbf16> to vector<16x7xbf16>
    %c0_93 = arith.constant 0 : index
    %c0_94 = arith.constant 0 : index
    %c6_95 = arith.constant 6 : index
    %c0_96 = arith.constant 0 : index
    %c2_97 = arith.constant 2 : index
    %42 = vector.load %arg2[%c0_93, %c0_94, %c6_95, %c0_96, %c2_97] : memref<1x1x9x16x9xbf16, #tpu.memory_space<vmem>>, vector<1x1x1x16x7xbf16>
    %43 = vector.shape_cast %42 : vector<1x1x1x16x7xbf16> to vector<16x7xbf16>
    %44 = tpu.concatenate %31, %33, %35, %37, %39, %41, %43 in 1 : vector<16x7xbf16>, vector<16x7xbf16>, vector<16x7xbf16>, vector<16x7xbf16>, vector<16x7xbf16>, vector<16x7xbf16>, vector<16x7xbf16> -> vector<16x49xbf16>
    %c0_98 = arith.constant 0 : index
    %c0_99 = arith.constant 0 : index
    %c1_100 = arith.constant 1 : index
    %c0_101 = arith.constant 0 : index
    %c0_102 = arith.constant 0 : index
    %45 = vector.load %arg2[%c0_98, %c0_99, %c1_100, %c0_101, %c0_102] : memref<1x1x9x16x9xbf16, #tpu.memory_space<vmem>>, vector<1x1x1x16x7xbf16>
    %46 = vector.shape_cast %45 : vector<1x1x1x16x7xbf16> to vector<16x7xbf16>
    %c0_103 = arith.constant 0 : index
    %c0_104 = arith.constant 0 : index
    %c2_105 = arith.constant 2 : index
    %c0_106 = arith.constant 0 : index
    %c0_107 = arith.constant 0 : index
    %47 = vector.load %arg2[%c0_103, %c0_104, %c2_105, %c0_106, %c0_107] : memref<1x1x9x16x9xbf16, #tpu.memory_space<vmem>>, vector<1x1x1x16x7xbf16>
    %48 = vector.shape_cast %47 : vector<1x1x1x16x7xbf16> to vector<16x7xbf16>
    %c0_108 = arith.constant 0 : index
    %c0_109 = arith.constant 0 : index
    %c3_110 = arith.constant 3 : index
    %c0_111 = arith.constant 0 : index
    %c0_112 = arith.constant 0 : index
    %49 = vector.load %arg2[%c0_108, %c0_109, %c3_110, %c0_111, %c0_112] : memref<1x1x9x16x9xbf16, #tpu.memory_space<vmem>>, vector<1x1x1x16x7xbf16>
    %50 = vector.shape_cast %49 : vector<1x1x1x16x7xbf16> to vector<16x7xbf16>
    %c0_113 = arith.constant 0 : index
    %c0_114 = arith.constant 0 : index
    %c4_115 = arith.constant 4 : index
    %c0_116 = arith.constant 0 : index
    %c0_117 = arith.constant 0 : index
    %51 = vector.load %arg2[%c0_113, %c0_114, %c4_115, %c0_116, %c0_117] : memref<1x1x9x16x9xbf16, #tpu.memory_space<vmem>>, vector<1x1x1x16x7xbf16>
    %52 = vector.shape_cast %51 : vector<1x1x1x16x7xbf16> to vector<16x7xbf16>
    %c0_118 = arith.constant 0 : index
    %c0_119 = arith.constant 0 : index
    %c5_120 = arith.constant 5 : index
    %c0_121 = arith.constant 0 : index
    %c0_122 = arith.constant 0 : index
    %53 = vector.load %arg2[%c0_118, %c0_119, %c5_120, %c0_121, %c0_122] : memref<1x1x9x16x9xbf16, #tpu.memory_space<vmem>>, vector<1x1x1x16x7xbf16>
    %54 = vector.shape_cast %53 : vector<1x1x1x16x7xbf16> to vector<16x7xbf16>
    %c0_123 = arith.constant 0 : index
    %c0_124 = arith.constant 0 : index
    %c6_125 = arith.constant 6 : index
    %c0_126 = arith.constant 0 : index
    %c0_127 = arith.constant 0 : index
    %55 = vector.load %arg2[%c0_123, %c0_124, %c6_125, %c0_126, %c0_127] : memref<1x1x9x16x9xbf16, #tpu.memory_space<vmem>>, vector<1x1x1x16x7xbf16>
    %56 = vector.shape_cast %55 : vector<1x1x1x16x7xbf16> to vector<16x7xbf16>
    %c0_128 = arith.constant 0 : index
    %c0_129 = arith.constant 0 : index
    %c7 = arith.constant 7 : index
    %c0_130 = arith.constant 0 : index
    %c0_131 = arith.constant 0 : index
    %57 = vector.load %arg2[%c0_128, %c0_129, %c7, %c0_130, %c0_131] : memref<1x1x9x16x9xbf16, #tpu.memory_space<vmem>>, vector<1x1x1x16x7xbf16>
    %58 = vector.shape_cast %57 : vector<1x1x1x16x7xbf16> to vector<16x7xbf16>
    %59 = tpu.concatenate %46, %48, %50, %52, %54, %56, %58 in 1 : vector<16x7xbf16>, vector<16x7xbf16>, vector<16x7xbf16>, vector<16x7xbf16>, vector<16x7xbf16>, vector<16x7xbf16>, vector<16x7xbf16> -> vector<16x49xbf16>
    %c0_132 = arith.constant 0 : index
    %c0_133 = arith.constant 0 : index
    %c1_134 = arith.constant 1 : index
    %c0_135 = arith.constant 0 : index
    %c1_136 = arith.constant 1 : index
    %60 = vector.load %arg2[%c0_132, %c0_133, %c1_134, %c0_135, %c1_136] : memref<1x1x9x16x9xbf16, #tpu.memory_space<vmem>>, vector<1x1x1x16x7xbf16>
    %61 = vector.shape_cast %60 : vector<1x1x1x16x7xbf16> to vector<16x7xbf16>
    %c0_137 = arith.constant 0 : index
    %c0_138 = arith.constant 0 : index
    %c2_139 = arith.constant 2 : index
    %c0_140 = arith.constant 0 : index
    %c1_141 = arith.constant 1 : index
    %62 = vector.load %arg2[%c0_137, %c0_138, %c2_139, %c0_140, %c1_141] : memref<1x1x9x16x9xbf16, #tpu.memory_space<vmem>>, vector<1x1x1x16x7xbf16>
    %63 = vector.shape_cast %62 : vector<1x1x1x16x7xbf16> to vector<16x7xbf16>
    %c0_142 = arith.constant 0 : index
    %c0_143 = arith.constant 0 : index
    %c3_144 = arith.constant 3 : index
    %c0_145 = arith.constant 0 : index
    %c1_146 = arith.constant 1 : index
    %64 = vector.load %arg2[%c0_142, %c0_143, %c3_144, %c0_145, %c1_146] : memref<1x1x9x16x9xbf16, #tpu.memory_space<vmem>>, vector<1x1x1x16x7xbf16>
    %65 = vector.shape_cast %64 : vector<1x1x1x16x7xbf16> to vector<16x7xbf16>
    %c0_147 = arith.constant 0 : index
    %c0_148 = arith.constant 0 : index
    %c4_149 = arith.constant 4 : index
    %c0_150 = arith.constant 0 : index
    %c1_151 = arith.constant 1 : index
    %66 = vector.load %arg2[%c0_147, %c0_148, %c4_149, %c0_150, %c1_151] : memref<1x1x9x16x9xbf16, #tpu.memory_space<vmem>>, vector<1x1x1x16x7xbf16>
    %67 = vector.shape_cast %66 : vector<1x1x1x16x7xbf16> to vector<16x7xbf16>
    %c0_152 = arith.constant 0 : index
    %c0_153 = arith.constant 0 : index
    %c5_154 = arith.constant 5 : index
    %c0_155 = arith.constant 0 : index
    %c1_156 = arith.constant 1 : index
    %68 = vector.load %arg2[%c0_152, %c0_153, %c5_154, %c0_155, %c1_156] : memref<1x1x9x16x9xbf16, #tpu.memory_space<vmem>>, vector<1x1x1x16x7xbf16>
    %69 = vector.shape_cast %68 : vector<1x1x1x16x7xbf16> to vector<16x7xbf16>
    %c0_157 = arith.constant 0 : index
    %c0_158 = arith.constant 0 : index
    %c6_159 = arith.constant 6 : index
    %c0_160 = arith.constant 0 : index
    %c1_161 = arith.constant 1 : index
    %70 = vector.load %arg2[%c0_157, %c0_158, %c6_159, %c0_160, %c1_161] : memref<1x1x9x16x9xbf16, #tpu.memory_space<vmem>>, vector<1x1x1x16x7xbf16>
    %71 = vector.shape_cast %70 : vector<1x1x1x16x7xbf16> to vector<16x7xbf16>
    %c0_162 = arith.constant 0 : index
    %c0_163 = arith.constant 0 : index
    %c7_164 = arith.constant 7 : index
    %c0_165 = arith.constant 0 : index
    %c1_166 = arith.constant 1 : index
    %72 = vector.load %arg2[%c0_162, %c0_163, %c7_164, %c0_165, %c1_166] : memref<1x1x9x16x9xbf16, #tpu.memory_space<vmem>>, vector<1x1x1x16x7xbf16>
    %73 = vector.shape_cast %72 : vector<1x1x1x16x7xbf16> to vector<16x7xbf16>
    %74 = tpu.concatenate %61, %63, %65, %67, %69, %71, %73 in 1 : vector<16x7xbf16>, vector<16x7xbf16>, vector<16x7xbf16>, vector<16x7xbf16>, vector<16x7xbf16>, vector<16x7xbf16>, vector<16x7xbf16> -> vector<16x49xbf16>
    %c0_167 = arith.constant 0 : index
    %c0_168 = arith.constant 0 : index
    %c1_169 = arith.constant 1 : index
    %c0_170 = arith.constant 0 : index
    %c2_171 = arith.constant 2 : index
    %75 = vector.load %arg2[%c0_167, %c0_168, %c1_169, %c0_170, %c2_171] : memref<1x1x9x16x9xbf16, #tpu.memory_space<vmem>>, vector<1x1x1x16x7xbf16>
    %76 = vector.shape_cast %75 : vector<1x1x1x16x7xbf16> to vector<16x7xbf16>
    %c0_172 = arith.constant 0 : index
    %c0_173 = arith.constant 0 : index
    %c2_174 = arith.constant 2 : index
    %c0_175 = arith.constant 0 : index
    %c2_176 = arith.constant 2 : index
    %77 = vector.load %arg2[%c0_172, %c0_173, %c2_174, %c0_175, %c2_176] : memref<1x1x9x16x9xbf16, #tpu.memory_space<vmem>>, vector<1x1x1x16x7xbf16>
    %78 = vector.shape_cast %77 : vector<1x1x1x16x7xbf16> to vector<16x7xbf16>
    %c0_177 = arith.constant 0 : index
    %c0_178 = arith.constant 0 : index
    %c3_179 = arith.constant 3 : index
    %c0_180 = arith.constant 0 : index
    %c2_181 = arith.constant 2 : index
    %79 = vector.load %arg2[%c0_177, %c0_178, %c3_179, %c0_180, %c2_181] : memref<1x1x9x16x9xbf16, #tpu.memory_space<vmem>>, vector<1x1x1x16x7xbf16>
    %80 = vector.shape_cast %79 : vector<1x1x1x16x7xbf16> to vector<16x7xbf16>
    %c0_182 = arith.constant 0 : index
    %c0_183 = arith.constant 0 : index
    %c4_184 = arith.constant 4 : index
    %c0_185 = arith.constant 0 : index
    %c2_186 = arith.constant 2 : index
    %81 = vector.load %arg2[%c0_182, %c0_183, %c4_184, %c0_185, %c2_186] : memref<1x1x9x16x9xbf16, #tpu.memory_space<vmem>>, vector<1x1x1x16x7xbf16>
    %82 = vector.shape_cast %81 : vector<1x1x1x16x7xbf16> to vector<16x7xbf16>
    %c0_187 = arith.constant 0 : index
    %c0_188 = arith.constant 0 : index
    %c5_189 = arith.constant 5 : index
    %c0_190 = arith.constant 0 : index
    %c2_191 = arith.constant 2 : index
    %83 = vector.load %arg2[%c0_187, %c0_188, %c5_189, %c0_190, %c2_191] : memref<1x1x9x16x9xbf16, #tpu.memory_space<vmem>>, vector<1x1x1x16x7xbf16>
    %84 = vector.shape_cast %83 : vector<1x1x1x16x7xbf16> to vector<16x7xbf16>
    %c0_192 = arith.constant 0 : index
    %c0_193 = arith.constant 0 : index
    %c6_194 = arith.constant 6 : index
    %c0_195 = arith.constant 0 : index
    %c2_196 = arith.constant 2 : index
    %85 = vector.load %arg2[%c0_192, %c0_193, %c6_194, %c0_195, %c2_196] : memref<1x1x9x16x9xbf16, #tpu.memory_space<vmem>>, vector<1x1x1x16x7xbf16>
    %86 = vector.shape_cast %85 : vector<1x1x1x16x7xbf16> to vector<16x7xbf16>
    %c0_197 = arith.constant 0 : index
    %c0_198 = arith.constant 0 : index
    %c7_199 = arith.constant 7 : index
    %c0_200 = arith.constant 0 : index
    %c2_201 = arith.constant 2 : index
    %87 = vector.load %arg2[%c0_197, %c0_198, %c7_199, %c0_200, %c2_201] : memref<1x1x9x16x9xbf16, #tpu.memory_space<vmem>>, vector<1x1x1x16x7xbf16>
    %88 = vector.shape_cast %87 : vector<1x1x1x16x7xbf16> to vector<16x7xbf16>
    %89 = tpu.concatenate %76, %78, %80, %82, %84, %86, %88 in 1 : vector<16x7xbf16>, vector<16x7xbf16>, vector<16x7xbf16>, vector<16x7xbf16>, vector<16x7xbf16>, vector<16x7xbf16>, vector<16x7xbf16> -> vector<16x49xbf16>
    %c0_202 = arith.constant 0 : index
    %c0_203 = arith.constant 0 : index
    %c2_204 = arith.constant 2 : index
    %c0_205 = arith.constant 0 : index
    %c0_206 = arith.constant 0 : index
    %90 = vector.load %arg2[%c0_202, %c0_203, %c2_204, %c0_205, %c0_206] : memref<1x1x9x16x9xbf16, #tpu.memory_space<vmem>>, vector<1x1x1x16x7xbf16>
    %91 = vector.shape_cast %90 : vector<1x1x1x16x7xbf16> to vector<16x7xbf16>
    %c0_207 = arith.constant 0 : index
    %c0_208 = arith.constant 0 : index
    %c3_209 = arith.constant 3 : index
    %c0_210 = arith.constant 0 : index
    %c0_211 = arith.constant 0 : index
    %92 = vector.load %arg2[%c0_207, %c0_208, %c3_209, %c0_210, %c0_211] : memref<1x1x9x16x9xbf16, #tpu.memory_space<vmem>>, vector<1x1x1x16x7xbf16>
    %93 = vector.shape_cast %92 : vector<1x1x1x16x7xbf16> to vector<16x7xbf16>
    %c0_212 = arith.constant 0 : index
    %c0_213 = arith.constant 0 : index
    %c4_214 = arith.constant 4 : index
    %c0_215 = arith.constant 0 : index
    %c0_216 = arith.constant 0 : index
    %94 = vector.load %arg2[%c0_212, %c0_213, %c4_214, %c0_215, %c0_216] : memref<1x1x9x16x9xbf16, #tpu.memory_space<vmem>>, vector<1x1x1x16x7xbf16>
    %95 = vector.shape_cast %94 : vector<1x1x1x16x7xbf16> to vector<16x7xbf16>
    %c0_217 = arith.constant 0 : index
    %c0_218 = arith.constant 0 : index
    %c5_219 = arith.constant 5 : index
    %c0_220 = arith.constant 0 : index
    %c0_221 = arith.constant 0 : index
    %96 = vector.load %arg2[%c0_217, %c0_218, %c5_219, %c0_220, %c0_221] : memref<1x1x9x16x9xbf16, #tpu.memory_space<vmem>>, vector<1x1x1x16x7xbf16>
    %97 = vector.shape_cast %96 : vector<1x1x1x16x7xbf16> to vector<16x7xbf16>
    %c0_222 = arith.constant 0 : index
    %c0_223 = arith.constant 0 : index
    %c6_224 = arith.constant 6 : index
    %c0_225 = arith.constant 0 : index
    %c0_226 = arith.constant 0 : index
    %98 = vector.load %arg2[%c0_222, %c0_223, %c6_224, %c0_225, %c0_226] : memref<1x1x9x16x9xbf16, #tpu.memory_space<vmem>>, vector<1x1x1x16x7xbf16>
    %99 = vector.shape_cast %98 : vector<1x1x1x16x7xbf16> to vector<16x7xbf16>
    %c0_227 = arith.constant 0 : index
    %c0_228 = arith.constant 0 : index
    %c7_229 = arith.constant 7 : index
    %c0_230 = arith.constant 0 : index
    %c0_231 = arith.constant 0 : index
    %100 = vector.load %arg2[%c0_227, %c0_228, %c7_229, %c0_230, %c0_231] : memref<1x1x9x16x9xbf16, #tpu.memory_space<vmem>>, vector<1x1x1x16x7xbf16>
    %101 = vector.shape_cast %100 : vector<1x1x1x16x7xbf16> to vector<16x7xbf16>
    %c0_232 = arith.constant 0 : index
    %c0_233 = arith.constant 0 : index
    %c8 = arith.constant 8 : index
    %c0_234 = arith.constant 0 : index
    %c0_235 = arith.constant 0 : index
    %102 = vector.load %arg2[%c0_232, %c0_233, %c8, %c0_234, %c0_235] : memref<1x1x9x16x9xbf16, #tpu.memory_space<vmem>>, vector<1x1x1x16x7xbf16>
    %103 = vector.shape_cast %102 : vector<1x1x1x16x7xbf16> to vector<16x7xbf16>
    %104 = tpu.concatenate %91, %93, %95, %97, %99, %101, %103 in 1 : vector<16x7xbf16>, vector<16x7xbf16>, vector<16x7xbf16>, vector<16x7xbf16>, vector<16x7xbf16>, vector<16x7xbf16>, vector<16x7xbf16> -> vector<16x49xbf16>
    %c0_236 = arith.constant 0 : index
    %c0_237 = arith.constant 0 : index
    %c2_238 = arith.constant 2 : index
    %c0_239 = arith.constant 0 : index
    %c1_240 = arith.constant 1 : index
    %105 = vector.load %arg2[%c0_236, %c0_237, %c2_238, %c0_239, %c1_240] : memref<1x1x9x16x9xbf16, #tpu.memory_space<vmem>>, vector<1x1x1x16x7xbf16>
    %106 = vector.shape_cast %105 : vector<1x1x1x16x7xbf16> to vector<16x7xbf16>
    %c0_241 = arith.constant 0 : index
    %c0_242 = arith.constant 0 : index
    %c3_243 = arith.constant 3 : index
    %c0_244 = arith.constant 0 : index
    %c1_245 = arith.constant 1 : index
    %107 = vector.load %arg2[%c0_241, %c0_242, %c3_243, %c0_244, %c1_245] : memref<1x1x9x16x9xbf16, #tpu.memory_space<vmem>>, vector<1x1x1x16x7xbf16>
    %108 = vector.shape_cast %107 : vector<1x1x1x16x7xbf16> to vector<16x7xbf16>
    %c0_246 = arith.constant 0 : index
    %c0_247 = arith.constant 0 : index
    %c4_248 = arith.constant 4 : index
    %c0_249 = arith.constant 0 : index
    %c1_250 = arith.constant 1 : index
    %109 = vector.load %arg2[%c0_246, %c0_247, %c4_248, %c0_249, %c1_250] : memref<1x1x9x16x9xbf16, #tpu.memory_space<vmem>>, vector<1x1x1x16x7xbf16>
    %110 = vector.shape_cast %109 : vector<1x1x1x16x7xbf16> to vector<16x7xbf16>
    %c0_251 = arith.constant 0 : index
    %c0_252 = arith.constant 0 : index
    %c5_253 = arith.constant 5 : index
    %c0_254 = arith.constant 0 : index
    %c1_255 = arith.constant 1 : index
    %111 = vector.load %arg2[%c0_251, %c0_252, %c5_253, %c0_254, %c1_255] : memref<1x1x9x16x9xbf16, #tpu.memory_space<vmem>>, vector<1x1x1x16x7xbf16>
    %112 = vector.shape_cast %111 : vector<1x1x1x16x7xbf16> to vector<16x7xbf16>
    %c0_256 = arith.constant 0 : index
    %c0_257 = arith.constant 0 : index
    %c6_258 = arith.constant 6 : index
    %c0_259 = arith.constant 0 : index
    %c1_260 = arith.constant 1 : index
    %113 = vector.load %arg2[%c0_256, %c0_257, %c6_258, %c0_259, %c1_260] : memref<1x1x9x16x9xbf16, #tpu.memory_space<vmem>>, vector<1x1x1x16x7xbf16>
    %114 = vector.shape_cast %113 : vector<1x1x1x16x7xbf16> to vector<16x7xbf16>
    %c0_261 = arith.constant 0 : index
    %c0_262 = arith.constant 0 : index
    %c7_263 = arith.constant 7 : index
    %c0_264 = arith.constant 0 : index
    %c1_265 = arith.constant 1 : index
    %115 = vector.load %arg2[%c0_261, %c0_262, %c7_263, %c0_264, %c1_265] : memref<1x1x9x16x9xbf16, #tpu.memory_space<vmem>>, vector<1x1x1x16x7xbf16>
    %116 = vector.shape_cast %115 : vector<1x1x1x16x7xbf16> to vector<16x7xbf16>
    %c0_266 = arith.constant 0 : index
    %c0_267 = arith.constant 0 : index
    %c8_268 = arith.constant 8 : index
    %c0_269 = arith.constant 0 : index
    %c1_270 = arith.constant 1 : index
    %117 = vector.load %arg2[%c0_266, %c0_267, %c8_268, %c0_269, %c1_270] : memref<1x1x9x16x9xbf16, #tpu.memory_space<vmem>>, vector<1x1x1x16x7xbf16>
    %118 = vector.shape_cast %117 : vector<1x1x1x16x7xbf16> to vector<16x7xbf16>
    %119 = tpu.concatenate %106, %108, %110, %112, %114, %116, %118 in 1 : vector<16x7xbf16>, vector<16x7xbf16>, vector<16x7xbf16>, vector<16x7xbf16>, vector<16x7xbf16>, vector<16x7xbf16>, vector<16x7xbf16> -> vector<16x49xbf16>
    %c0_271 = arith.constant 0 : index
    %c0_272 = arith.constant 0 : index
    %c2_273 = arith.constant 2 : index
    %c0_274 = arith.constant 0 : index
    %c2_275 = arith.constant 2 : index
    %120 = vector.load %arg2[%c0_271, %c0_272, %c2_273, %c0_274, %c2_275] : memref<1x1x9x16x9xbf16, #tpu.memory_space<vmem>>, vector<1x1x1x16x7xbf16>
    %121 = vector.shape_cast %120 : vector<1x1x1x16x7xbf16> to vector<16x7xbf16>
    %c0_276 = arith.constant 0 : index
    %c0_277 = arith.constant 0 : index
    %c3_278 = arith.constant 3 : index
    %c0_279 = arith.constant 0 : index
    %c2_280 = arith.constant 2 : index
    %122 = vector.load %arg2[%c0_276, %c0_277, %c3_278, %c0_279, %c2_280] : memref<1x1x9x16x9xbf16, #tpu.memory_space<vmem>>, vector<1x1x1x16x7xbf16>
    %123 = vector.shape_cast %122 : vector<1x1x1x16x7xbf16> to vector<16x7xbf16>
    %c0_281 = arith.constant 0 : index
    %c0_282 = arith.constant 0 : index
    %c4_283 = arith.constant 4 : index
    %c0_284 = arith.constant 0 : index
    %c2_285 = arith.constant 2 : index
    %124 = vector.load %arg2[%c0_281, %c0_282, %c4_283, %c0_284, %c2_285] : memref<1x1x9x16x9xbf16, #tpu.memory_space<vmem>>, vector<1x1x1x16x7xbf16>
    %125 = vector.shape_cast %124 : vector<1x1x1x16x7xbf16> to vector<16x7xbf16>
    %c0_286 = arith.constant 0 : index
    %c0_287 = arith.constant 0 : index
    %c5_288 = arith.constant 5 : index
    %c0_289 = arith.constant 0 : index
    %c2_290 = arith.constant 2 : index
    %126 = vector.load %arg2[%c0_286, %c0_287, %c5_288, %c0_289, %c2_290] : memref<1x1x9x16x9xbf16, #tpu.memory_space<vmem>>, vector<1x1x1x16x7xbf16>
    %127 = vector.shape_cast %126 : vector<1x1x1x16x7xbf16> to vector<16x7xbf16>
    %c0_291 = arith.constant 0 : index
    %c0_292 = arith.constant 0 : index
    %c6_293 = arith.constant 6 : index
    %c0_294 = arith.constant 0 : index
    %c2_295 = arith.constant 2 : index
    %128 = vector.load %arg2[%c0_291, %c0_292, %c6_293, %c0_294, %c2_295] : memref<1x1x9x16x9xbf16, #tpu.memory_space<vmem>>, vector<1x1x1x16x7xbf16>
    %129 = vector.shape_cast %128 : vector<1x1x1x16x7xbf16> to vector<16x7xbf16>
    %c0_296 = arith.constant 0 : index
    %c0_297 = arith.constant 0 : index
    %c7_298 = arith.constant 7 : index
    %c0_299 = arith.constant 0 : index
    %c2_300 = arith.constant 2 : index
    %130 = vector.load %arg2[%c0_296, %c0_297, %c7_298, %c0_299, %c2_300] : memref<1x1x9x16x9xbf16, #tpu.memory_space<vmem>>, vector<1x1x1x16x7xbf16>
    %131 = vector.shape_cast %130 : vector<1x1x1x16x7xbf16> to vector<16x7xbf16>
    %c0_301 = arith.constant 0 : index
    %c0_302 = arith.constant 0 : index
    %c8_303 = arith.constant 8 : index
    %c0_304 = arith.constant 0 : index
    %c2_305 = arith.constant 2 : index
    %132 = vector.load %arg2[%c0_301, %c0_302, %c8_303, %c0_304, %c2_305] : memref<1x1x9x16x9xbf16, #tpu.memory_space<vmem>>, vector<1x1x1x16x7xbf16>
    %133 = vector.shape_cast %132 : vector<1x1x1x16x7xbf16> to vector<16x7xbf16>
    %134 = tpu.concatenate %121, %123, %125, %127, %129, %131, %133 in 1 : vector<16x7xbf16>, vector<16x7xbf16>, vector<16x7xbf16>, vector<16x7xbf16>, vector<16x7xbf16>, vector<16x7xbf16>, vector<16x7xbf16> -> vector<16x49xbf16>
    %135 = tpu.concatenate %14, %29, %44, %59, %74, %89, %104, %119, %134 in 0 : vector<16x49xbf16>, vector<16x49xbf16>, vector<16x49xbf16>, vector<16x49xbf16>, vector<16x49xbf16>, vector<16x49xbf16>, vector<16x49xbf16>, vector<16x49xbf16>, vector<16x49xbf16> -> vector<144x49xbf16>
    %c0_306 = arith.constant 0 : index
    %c0_307 = arith.constant 0 : index
    %136 = vector.load %arg3[%c0_306, %c0_307] : memref<8x144xbf16, #tpu.memory_space<vmem>>, vector<8x144xbf16>
    %cst = arith.constant dense<0.000000e+00> : vector<8x49xf32>
    %137 = tpu.matmul %136, %135, %cst {dimension_numbers = #tpu.dot_dimension_numbers<[1], [0], [0], [1], [0, 0, 1, 1], [], []>} : vector<8x144xbf16>, vector<144x49xbf16>, vector<8x49xf32> -> vector<8x49xf32>
    %138 = arith.truncf %137 : vector<8x49xf32> to vector<8x49xbf16>
    %c0_308 = arith.constant 0 : index
    %c0_309 = arith.constant 0 : index
    %c0_310 = arith.constant 0 : index
    %c0_311 = arith.constant 0 : index
    %139 = vector.load %arg4[%c0_308, %c0_309, %c0_310, %c0_311] : memref<1x1x8x49xbf16, #tpu.memory_space<vmem>>, vector<1x1x8x49xbf16>
    %140 = vector.shape_cast %139 : vector<1x1x8x49xbf16> to vector<8x49xbf16>
    %141 = vector.shape_cast %138 : vector<8x49xbf16> to vector<1x1x8x49xbf16>
    tpu.vector_store %arg4[%c0_308, %c0_309, %c0_310, %c0_311], %141 {strides = array<i32>} : memref<1x1x8x49xbf16, #tpu.memory_space<vmem>>, vector<1x1x8x49xbf16>,
    %cst_312 = arith.constant dense<0.000000e+00> : vector<8xf32>
    %142 = vector.multi_reduction <add>, %137, %cst_312 [1] : vector<8x49xf32> to vector<8xf32>
    %143 = vector.shape_cast %142 : vector<8xf32> to vector<8x1xf32>
    %c0_313 = arith.constant 0 : index
    %c0_314 = arith.constant 0 : index
    %c0_315 = arith.constant 0 : index
    %c0_316 = arith.constant 0 : index
    %144 = vector.load %arg5[%c0_313, %c0_314, %c0_315, %c0_316] : memref<1x1x8x1xf32, #tpu.memory_space<vmem>>, vector<1x1x8x1xf32>
    %145 = vector.shape_cast %144 : vector<1x1x8x1xf32> to vector<8x1xf32>
    %146 = vector.shape_cast %143 : vector<8x1xf32> to vector<1x1x8x1xf32>
    tpu.vector_store %arg5[%c0_313, %c0_314, %c0_315, %c0_316], %146 {strides = array<i32>} : memref<1x1x8x1xf32, #tpu.memory_space<vmem>>, vector<1x1x8x1xf32>,
    %147 = arith.mulf %137, %137 : vector<8x49xf32>
    %cst_317 = arith.constant dense<0.000000e+00> : vector<8xf32>
    %148 = vector.multi_reduction <add>, %147, %cst_317 [1] : vector<8x49xf32> to vector<8xf32>
    %149 = vector.shape_cast %148 : vector<8xf32> to vector<8x1xf32>
    %c0_318 = arith.constant 0 : index
    %c0_319 = arith.constant 0 : index
    %c0_320 = arith.constant 0 : index
    %c0_321 = arith.constant 0 : index
    %150 = vector.load %arg6[%c0_318, %c0_319, %c0_320, %c0_321] : memref<1x1x8x1xf32, #tpu.memory_space<vmem>>, vector<1x1x8x1xf32>
    %151 = vector.shape_cast %150 : vector<1x1x8x1xf32> to vector<8x1xf32>
    %152 = vector.shape_cast %149 : vector<8x1xf32> to vector<1x1x8x1xf32>
    tpu.vector_store %arg6[%c0_318, %c0_319, %c0_320, %c0_321], %152 {strides = array<i32>} : memref<1x1x8x1xf32, #tpu.memory_space<vmem>>, vector<1x1x8x1xf32>,
    return
  }
  func.func @transform_0(%arg0: i32, %arg1: i32) -> (i32, i32, i32, i32, i32) {
    %c0_i32 = arith.constant 0 : i32
    %c0_i32_0 = arith.constant 0 : i32
    %c0_i32_1 = arith.constant 0 : i32
    %c0_i32_2 = arith.constant 0 : i32
    return %arg0, %arg1, %c0_i32, %c0_i32_0, %c0_i32_1 : i32, i32, i32, i32, i32
  }
  func.func @transform_1(%arg0: i32, %arg1: i32) -> (i32, i32) {
    %c0_i32 = arith.constant 0 : i32
    %c0_i32_0 = arith.constant 0 : i32
    %c0_i32_1 = arith.constant 0 : i32
    return %c0_i32, %c0_i32_0 : i32, i32
  }
  func.func @transform_2(%arg0: i32, %arg1: i32) -> (i32, i32, i32, i32) {
    %c0_i32 = arith.constant 0 : i32
    %c0_i32_0 = arith.constant 0 : i32
    %c0_i32_1 = arith.constant 0 : i32
    return %arg0, %arg1, %c0_i32, %c0_i32_0 : i32, i32, i32, i32
  }
  func.func @transform_3(%arg0: i32, %arg1: i32) -> (i32, i32, i32, i32) {
    %c0_i32 = arith.constant 0 : i32
    %c0_i32_0 = arith.constant 0 : i32
    %c0_i32_1 = arith.constant 0 : i32
    return %arg0, %arg1, %c0_i32, %c0_i32_0 : i32, i32, i32, i32
  }
  func.func @transform_4(%arg0: i32, %arg1: i32) -> (i32, i32, i32, i32) {
    %c0_i32 = arith.constant 0 : i32
    %c0_i32_0 = arith.constant 0 : i32
    %c0_i32_1 = arith.constant 0 : i32
    return %arg0, %arg1, %c0_i32, %c0_i32_0 : i32, i32, i32, i32
  }
}

module attributes {stable_mosaic.version = 11 : i64} {
  func.func @_bn_relu_kernel(%arg0: i32, %arg1: i32, %arg2: memref<1x1x8x49xbf16, #tpu.memory_space<vmem>>, %arg3: memref<8x1xf32, #tpu.memory_space<vmem>>, %arg4: memref<8x1xf32, #tpu.memory_space<vmem>>, %arg5: memref<1x1x8x49xbf16, #tpu.memory_space<vmem>>) attributes {dimension_semantics = [#tpu.dimension_semantics<parallel>, #tpu.dimension_semantics<parallel>], iteration_bounds = array<i64: 2, 1>, scalar_prefetch = 0 : i64, scratch_operands = 0 : i64, tpu.core_type = #tpu.core_type<tc>, window_params = [{transform_indices = @transform_0, window_bounds = array<i64: 1, 1, 8, 49>}, {pipeline_mode = #tpu.pipeline_mode<synchronous>, transform_indices = @transform_1, window_bounds = array<i64: 8, 1>}, {pipeline_mode = #tpu.pipeline_mode<synchronous>, transform_indices = @transform_2, window_bounds = array<i64: 8, 1>}, {transform_indices = @transform_3, window_bounds = array<i64: 1, 1, 8, 49>}]} {
    %c0 = arith.constant 0 : index
    %c0_0 = arith.constant 0 : index
    %c0_1 = arith.constant 0 : index
    %c0_2 = arith.constant 0 : index
    %0 = vector.load %arg2[%c0, %c0_0, %c0_1, %c0_2] : memref<1x1x8x49xbf16, #tpu.memory_space<vmem>>, vector<1x1x8x49xbf16>
    %1 = vector.shape_cast %0 : vector<1x1x8x49xbf16> to vector<8x49xbf16>
    %2 = arith.extf %1 : vector<8x49xbf16> to vector<8x49xf32>
    %c0_3 = arith.constant 0 : index
    %c0_4 = arith.constant 0 : index
    %3 = vector.load %arg3[%c0_3, %c0_4] : memref<8x1xf32, #tpu.memory_space<vmem>>, vector<8x1xf32>
    %4 = vector.broadcast %3 : vector<8x1xf32> to vector<8x49xf32>
    %5 = arith.mulf %2, %4 : vector<8x49xf32>
    %c0_5 = arith.constant 0 : index
    %c0_6 = arith.constant 0 : index
    %6 = vector.load %arg4[%c0_5, %c0_6] : memref<8x1xf32, #tpu.memory_space<vmem>>, vector<8x1xf32>
    %7 = vector.broadcast %6 : vector<8x1xf32> to vector<8x49xf32>
    %8 = arith.addf %5, %7 : vector<8x49xf32>
    %cst = arith.constant 0.000000e+00 : f32
    %9 = vector.broadcast %cst : f32 to vector<8x49xf32>
    %10 = arith.maximumf %8, %9 : vector<8x49xf32>
    %11 = arith.truncf %10 : vector<8x49xf32> to vector<8x49xbf16>
    %c0_7 = arith.constant 0 : index
    %c0_8 = arith.constant 0 : index
    %c0_9 = arith.constant 0 : index
    %c0_10 = arith.constant 0 : index
    %12 = vector.load %arg5[%c0_7, %c0_8, %c0_9, %c0_10] : memref<1x1x8x49xbf16, #tpu.memory_space<vmem>>, vector<1x1x8x49xbf16>
    %13 = vector.shape_cast %12 : vector<1x1x8x49xbf16> to vector<8x49xbf16>
    %14 = vector.shape_cast %11 : vector<8x49xbf16> to vector<1x1x8x49xbf16>
    tpu.vector_store %arg5[%c0_7, %c0_8, %c0_9, %c0_10], %14 {strides = array<i32>} : memref<1x1x8x49xbf16, #tpu.memory_space<vmem>>, vector<1x1x8x49xbf16>,
    return
  }
  func.func @transform_0(%arg0: i32, %arg1: i32) -> (i32, i32, i32, i32) {
    %c0_i32 = arith.constant 0 : i32
    %c0_i32_0 = arith.constant 0 : i32
    %c0_i32_1 = arith.constant 0 : i32
    return %arg0, %arg1, %c0_i32, %c0_i32_0 : i32, i32, i32, i32
  }
  func.func @transform_1(%arg0: i32, %arg1: i32) -> (i32, i32) {
    %c0_i32 = arith.constant 0 : i32
    %c0_i32_0 = arith.constant 0 : i32
    %c0_i32_1 = arith.constant 0 : i32
    return %c0_i32, %c0_i32_0 : i32, i32
  }
  func.func @transform_2(%arg0: i32, %arg1: i32) -> (i32, i32) {
    %c0_i32 = arith.constant 0 : i32
    %c0_i32_0 = arith.constant 0 : i32
    %c0_i32_1 = arith.constant 0 : i32
    return %c0_i32, %c0_i32_0 : i32, i32
  }
  func.func @transform_3(%arg0: i32, %arg1: i32) -> (i32, i32, i32, i32) {
    %c0_i32 = arith.constant 0 : i32
    %c0_i32_0 = arith.constant 0 : i32
    %c0_i32_1 = arith.constant 0 : i32
    return %arg0, %arg1, %c0_i32, %c0_i32_0 : i32, i32, i32, i32
  }
}

</mosaic_0001>

<llo_original>
// kernel: down_block_conv_stride2.7
$region0: #{down_block_conv_stride2.7}
  #allocation0 [shape = 'u32[]', space=smem, size = 0x4, offset = 0x4, fixed_abs, tag = 'smem constant byte address 0x4 - core index']
  #allocation1 [shape = 'u32[144,128]{1,0:T(1,128)}', space=vmem, size = 0x12000, scoped, tag = 'internal scratch']
  %s0 = inlined_call_operand.vmem [shape: bf16[2,1,4,49], index: 0, kind: input, shape index: {}]
  %s1 = inlined_call_operand.vmem [shape: f32[4,1], index: 1, kind: input, shape index: {}]
  %s2 = inlined_call_operand.vmem [shape: f32[4,1], index: 2, kind: input, shape index: {}]
  %s3 = inlined_call_operand.vmem [shape: bf16[2,1,4,49], index: 3, kind: output, shape index: {}]
  %s4 = sld [smem:[#allocation0]]
  $region45: #{down_block_conv_stride2.7} parent=0
    _
  %s6 = ssub.s32 1, %s4
  %s7 = scalar_select 0, %s6, %s4
  loop: start=0, step=1, limit=4
  $region2: #{down_block_conv_stride2.7} parent=0 // loop_pre_header
    _
  $region3: #{down_block_conv_stride2.7} parent=0 // loop_header
    %s9 = sphi 0, %s13
    %p10 = scmp.ge.s32.totalorder %s9, 4
    %s16 = sphi 0, %s28
    %s17 = sphi 0, %s24
    %s18 = sphi 0, %s16
    %s19 = sphi 0, %s17
    %s20 = sphi 0, %s18
    %s21 = sphi 0, %s19
    %s33 = sphi 0, %s35
    %s36 = sphi 0, %s33
    %s37 = sphi 0, %s36
    %s53 = sphi 0, %s37
    %s57 = sphi 0, %s57
    %s59 = sphi 0, %s57
    %s60 = sphi 0, %s59
    %s74 = sphi 0, %s60
    %s78 = sphi 0, %s78
    %s80 = sphi 0, %s78
    %s81 = sphi 0, %s80
    %s95 = sphi 0, %s81
    %s103 = sphi 0, %s105
    %s106 = sphi 0, %s103
    %s107 = sphi 0, %s106
    %s123 = sphi 0, %s107
  $region4: #{down_block_conv_stride2.7} parent=0 // loop_header_branch
    %12 = sbr.rel (%p10) target = $region8
  $region5: #{down_block_conv_stride2.7} parent=0 // loop_body
    %s14 = ssub.s32 %s9, 1
    %s15 = ssub.s32 %s9, 2
    %s22 = sadd.s32 1, %s17
    %p23 = scmp.ge.s32.totalorder %s22, 1
    %s24 = scalar_select %p23, 0, %s22
    %s25 = sadd.s32 1, %s16
    %s26 = scalar_select %p23, %s25, %s16
    %p27 = scmp.ge.s32.totalorder %s26, 2
    %s28 = scalar_select %p27, 0, %s26
    %s29 = ssub.s32 %s16, %s28
    %s30 = ssub.s32 %s17, %s24
    %s31 = sor.u32 %s29, %s30
    %p32 = scmp.eq.s32.totalorder %s31, 0
    %s34 = sadd.s32 %s33, 1
    %s35 = scalar_select %p32, %s33, %s34
    %p38 = pneg %p32
    %p39 = scmp.eq.s32.totalorder %s9, 1
    %p40 = por %p38, %p39
    %p41 = scmp.ne.s32.totalorder %s33, %s36
    %p42 = scmp.eq.s32.totalorder %s9, 0
    %p43 = por %p41, %p42
    %p44 = scmp.ne.s32.totalorder %s33, %s36
    %p45 = scmp.eq.s32.totalorder %s14, 1
    %p46 = por %p44, %p45
    %p47 = scmp.ne.s32.totalorder %s36, %s37
    %p48 = scmp.eq.s32.totalorder %s14, 0
    %p49 = por %p47, %p48
    %p50 = scmp.ne.s32.totalorder %s36, %s37
    %p51 = scmp.eq.s32.totalorder %s15, 1
    %p52 = por %p50, %p51
    %p54 = scmp.ne.s32.totalorder %s37, %s53
    %p55 = scmp.eq.s32.totalorder %s15, 0
    %p56 = por %p54, %p55
    %s58 = sadd.s32 %s57, 1
    %p61 = scmp.eq.s32.totalorder %s9, 1
    %p62 = scmp.ne.s32.totalorder %s57, %s59
    %p63 = scmp.eq.s32.totalorder %s9, 0
    %p64 = por %p62, %p63
    %p65 = scmp.ne.s32.totalorder %s57, %s59
    %p66 = scmp.eq.s32.totalorder %s14, 1
    %p67 = por %p65, %p66
    %p68 = scmp.ne.s32.totalorder %s59, %s60
    %p69 = scmp.eq.s32.totalorder %s14, 0
    %p70 = por %p68, %p69
    %p71 = scmp.ne.s32.totalorder %s59, %s60
    %p72 = scmp.eq.s32.totalorder %s15, 1
    %p73 = por %p71, %p72
    %p75 = scmp.ne.s32.totalorder %s60, %s74
    %p76 = scmp.eq.s32.totalorder %s15, 0
    %p77 = por %p75, %p76
    %s79 = sadd.s32 %s78, 1
    %p82 = scmp.eq.s32.totalorder %s9, 1
    %p83 = scmp.ne.s32.totalorder %s78, %s80
    %p84 = scmp.eq.s32.totalorder %s9, 0
    %p85 = por %p83, %p84
    %p86 = scmp.ne.s32.totalorder %s78, %s80
    %p87 = scmp.eq.s32.totalorder %s14, 1
    %p88 = por %p86, %p87
    %p89 = scmp.ne.s32.totalorder %s80, %s81
    %p90 = scmp.eq.s32.totalorder %s14, 0
    %p91 = por %p89, %p90
    %p92 = scmp.ne.s32.totalorder %s80, %s81
    %p93 = scmp.eq.s32.totalorder %s15, 1
    %p94 = por %p92, %p93
    %p96 = scmp.ne.s32.totalorder %s81, %s95
    %p97 = scmp.eq.s32.totalorder %s15, 0
    %p98 = por %p96, %p97
    %s99 = ssub.s32 %s16, %s28
    %s100 = ssub.s32 %s17, %s24
    %s101 = sor.u32 %s99, %s100
    %p102 = scmp.eq.s32.totalorder %s101, 0
    %s104 = sadd.s32 %s103, 1
    %s105 = scalar_select %p102, %s103, %s104
    %p108 = pneg %p102
    %p109 = scmp.eq.s32.totalorder %s9, 1
    %p110 = por %p108, %p109
    %p111 = scmp.ne.s32.totalorder %s103, %s106
    %p112 = scmp.eq.s32.totalorder %s9, 0
    %p113 = por %p111, %p112
    %p114 = scmp.ne.s32.totalorder %s103, %s106
    %p115 = scmp.eq.s32.totalorder %s14, 1
    %p116 = por %p114, %p115
    %p117 = scmp.ne.s32.totalorder %s106, %s107
    %p118 = scmp.eq.s32.totalorder %s14, 0
    %p119 = por %p117, %p118
    %p120 = scmp.ne.s32.totalorder %s106, %s107
    %p121 = scmp.eq.s32.totalorder %s15, 1
    %p122 = por %p120, %p121
    %p124 = scmp.ne.s32.totalorder %s107, %s123
    %p125 = scmp.eq.s32.totalorder %s15, 0
    %p126 = por %p124, %p125
    %p127 = scmp.le.s32.totalorder 1, %s9
    %p128 = scmp.lt.s32.totalorder %s9, 3
    %p129 = pnand %p127, %p128
    %p130 = pneg %p129
    // Predicated region
    $region9: #{down_block_conv_stride2.7} parent=5 // pred_check
      _
    $region10: #{down_block_conv_stride2.7} parent=5 // pred_check_branch
      %132 = sbr.rel (%p129) target = $region12
    $region11: #{down_block_conv_stride2.7} parent=5 // pred_region
      %s133 = ssub.s32 %s9, 1
      // Predicated region
      $region13: #{down_block_conv_stride2.7} parent=11 // pred_check
        %p134 = pneg %p70
      $region14: #{down_block_conv_stride2.7} parent=11 // pred_check_branch
        %136 = sbr.rel (%p134) target = $region16
      $region15: #{down_block_conv_stride2.7} parent=11 // pred_region
        _
      $region16: #{down_block_conv_stride2.7} parent=11 // pred_fallthru
        _
      // Predicated region
      $region17: #{down_block_conv_stride2.7} parent=11 // pred_check
        %p137 = pneg %p91
      $region18: #{down_block_conv_stride2.7} parent=11 // pred_check_branch
        %139 = sbr.rel (%p137) target = $region20
      $region19: #{down_block_conv_stride2.7} parent=11 // pred_region
        _
      $region20: #{down_block_conv_stride2.7} parent=11 // pred_fallthru
        _
    $region12: #{down_block_conv_stride2.7} parent=5 // pred_fallthru
      _
    %p140 = scmp.lt.s32.totalorder %s9, 2
    // Predicated region
    $region21: #{down_block_conv_stride2.7} parent=5 // pred_check
      %p141 = pneg %p140
    $region22: #{down_block_conv_stride2.7} parent=5 // pred_check_branch
      %143 = sbr.rel (%p141) target = $region24
    $region23: #{down_block_conv_stride2.7} parent=5 // pred_region
      // Predicated region
      $region25: #{down_block_conv_stride2.7} parent=23 // pred_check
        %p144 = pneg %p43
      $region26: #{down_block_conv_stride2.7} parent=23 // pred_check_branch
        %146 = sbr.rel (%p144) target = $region28
      $region27: #{down_block_conv_stride2.7} parent=23 // pred_region
        %p147 = scmp.lt.s32.totalorder %s16, 1
        %s148 = scalar_select %p147, %s16, 1
        %p149 = scmp.lt.s32.totalorder %s17, 0
        %s150 = scalar_select %p149, %s17, 0
        %s151 = sadd.s32 %s150, %s148
        %s152 = smul.addr %s151, 2
        %s153 = scalar_lea.vmem %s0, %s152
      $region28: #{down_block_conv_stride2.7} parent=23 // pred_fallthru
        _
    $region24: #{down_block_conv_stride2.7} parent=5 // pred_fallthru
      _
    %p154 = scmp.le.s32.totalorder 1, %s9
    %p155 = scmp.lt.s32.totalorder %s9, 3
    %p156 = pnand %p154, %p155
    %p157 = pneg %p156
    // Predicated region
    $region29: #{down_block_conv_stride2.7} parent=5 // pred_check
      _
    $region30: #{down_block_conv_stride2.7} parent=5 // pred_check_branch
      %159 = sbr.rel (%p156) target = $region32
    $region31: #{down_block_conv_stride2.7} parent=5 // pred_region
      %s160 = ssub.s32 %s9, 1
      %p161 = scmp.lt.s32.totalorder %s18, 1
      %s162 = scalar_select %p161, %s18, 1
      %p163 = scmp.lt.s32.totalorder %s19, 0
      %s164 = scalar_select %p163, %s19, 0
      %s165 = sadd.s32 %s164, %s162
      %s166 = smul.addr %s165, 2
      %s167 = scalar_lea.vmem %s0, %s166
      %p168 = pneg %p49
      %p169 = pneg %p46
      %p170 = pneg %p70
      %p171 = pneg %p67
      %p172 = pneg %p91
      %p173 = pneg %p88
      %p174 = pneg %p119
      %p175 = pneg %p116
      %p176 = scmp.lt.s32.totalorder %s18, 1
      %s177 = scalar_select %p176, %s18, 1
      %p178 = scmp.lt.s32.totalorder %s19, 0
      %s179 = scalar_select %p178, %s19, 0
      %s180 = sadd.s32 %s179, %s177
      %s181 = smul.addr %s180, 2
      %s182 = scalar_lea.vmem %s3, %s181
      %p183 = scmp.lt.s32.totalorder %s18, 1
      %s184 = scalar_select %p183, %s18, 1
      %p185 = scmp.lt.s32.totalorder %s19, 0
      %s186 = scalar_select %p185, %s19, 0
      %s187 = sadd.s32 %s186, %s184
      %s188 = smul.addr %s187, 2
      %s189 = scalar_lea.vmem %s0, %s188
      %p190 = scmp.lt.s32.totalorder %s18, 1
      %s191 = scalar_select %p190, %s18, 1
      %p192 = scmp.lt.s32.totalorder %s19, 0
      %s193 = scalar_select %p192, %s19, 0
      %s194 = sadd.s32 %s193, %s191
      %s195 = smul.addr %s194, 2
      %s196 = scalar_lea.vmem %s3, %s195
      %v197 = vld [vmem:[%s189] sm:$0x3]
      %v198 = vunpack.c.l.bf16 %v197
      %v199 = vld [vmem:[%s1] sm:$0xf]
      %201 = vset.pattern.permute.xlu0 0
      %202 = vperm.xlu0 %201, %v199
      %v203 = vpop.permute.xlu0 %202
      %v205 = vmul.f32 %v198, %v203
      %v206 = vld [vmem:[%s2] sm:$0xf]
      %208 = vset.pattern.permute.xlu0 0
      %209 = vperm.xlu0 %208, %v206
      %v210 = vpop.permute.xlu0 %209
      %v212 = vadd.f32 %v205, %v210
      %v213 = vmax.f32 %v212, 0.0
      %v214 = vpack.c.bf16 %v213, %v213
      %vm215 = vcmask 394240
      %216 = vst.msk [vmem:[%s196] sm:$0x3] %vm215, %v214
      %p217 = scmp.lt.s32.totalorder %s18, 1
      %s218 = scalar_select %p217, %s18, 1
      %p219 = scmp.lt.s32.totalorder %s19, 0
      %s220 = scalar_select %p219, %s19, 0
      %s221 = sadd.s32 %s220, %s218
      %s222 = smul.addr %s221, 2
      %s223 = scalar_lea.vmem %s3, %s222
      // Predicated region
      $region33: #{down_block_conv_stride2.7} parent=31 // pred_check
        %p224 = pneg %p116
      $region34: #{down_block_conv_stride2.7} parent=31 // pred_check_branch
        %226 = sbr.rel (%p224) target = $region36
      $region35: #{down_block_conv_stride2.7} parent=31 // pred_region
        _
      $region36: #{down_block_conv_stride2.7} parent=31 // pred_fallthru
        _
    $region32: #{down_block_conv_stride2.7} parent=5 // pred_fallthru
      _
    %p227 = scmp.le.s32.totalorder 2, %s9
    // Predicated region
    $region37: #{down_block_conv_stride2.7} parent=5 // pred_check
      %p228 = pneg %p227
    $region38: #{down_block_conv_stride2.7} parent=5 // pred_check_branch
      %230 = sbr.rel (%p228) target = $region40
    $region39: #{down_block_conv_stride2.7} parent=5 // pred_region
      %s231 = ssub.s32 %s9, 2
      // Predicated region
      $region41: #{down_block_conv_stride2.7} parent=39 // pred_check
        %p232 = pneg %p122
      $region42: #{down_block_conv_stride2.7} parent=39 // pred_check_branch
        %234 = sbr.rel (%p232) target = $region44
      $region43: #{down_block_conv_stride2.7} parent=39 // pred_region
        %p235 = scmp.lt.s32.totalorder %s20, 1
        %s236 = scalar_select %p235, %s20, 1
        %p237 = scmp.lt.s32.totalorder %s21, 0
        %s238 = scalar_select %p237, %s21, 0
        %s239 = sadd.s32 %s238, %s236
        %s240 = smul.addr %s239, 2
        %s241 = scalar_lea.vmem %s3, %s240
      $region44: #{down_block_conv_stride2.7} parent=39 // pred_fallthru
        _
    $region40: #{down_block_conv_stride2.7} parent=5 // pred_fallthru
      _
  $region6: #{down_block_conv_stride2.7} parent=0 // loop_footer
    %s13 = sadd.s32 1, %s9
  $region7: #{down_block_conv_stride2.7} parent=0 // loop_footer_branch
    %8 = sbr.rel target = $region3
  $region8: #{down_block_conv_stride2.7} parent=0 // loop_exit
    _

// kernel: down_block_conv_stride2.6
$region0: #{down_block_conv_stride2.6}
  #allocation0 [shape = 'u32[]', space=smem, size = 0x4, offset = 0x4, fixed_abs, tag = 'smem constant byte address 0x4 - core index']
  #allocation1 [shape = 'u32[144,128]{1,0:T(1,128)}', space=vmem, size = 0x12000, scoped, tag = 'internal scratch']
  %s0 = inlined_call_operand.vmem [shape: bf16[2,1,15,16,8], index: 0, kind: input, shape index: {}]
  %s1 = inlined_call_operand.vmem [shape: bf16[2,1,15,16,8], index: 1, kind: input, shape index: {}]
  %s2 = inlined_call_operand.vmem [shape: bf16[4,144], index: 2, kind: input, shape index: {}]
  %s3 = inlined_call_operand.vmem [shape: bf16[2,1,4,49], index: 3, kind: output, shape index: {0}]
  %s4 = inlined_call_operand.vmem [shape: f32[2,1,4,1], index: 4, kind: output, shape index: {1}]
  %s5 = inlined_call_operand.vmem [shape: f32[2,1,4,1], index: 5, kind: output, shape index: {2}]
  %6 = xla_tuple %s3, %s4, %s5
  %s7 = sld [smem:[#allocation0]]
  $region61: #{down_block_conv_stride2.6} parent=0
    _
  %s9 = ssub.s32 1, %s7
  %s10 = scalar_select 0, %s9, %s7
  loop: start=0, step=1, limit=4
  $region2: #{down_block_conv_stride2.6} parent=0 // loop_pre_header
    _
  $region3: #{down_block_conv_stride2.6} parent=0 // loop_header
    %s12 = sphi 0, %s16
    %p13 = scmp.ge.s32.totalorder %s12, 4
    %s19 = sphi 0, %s31
    %s20 = sphi 0, %s27
    %s21 = sphi 0, %s19
    %s22 = sphi 0, %s20
    %s23 = sphi 0, %s21
    %s24 = sphi 0, %s22
    %s36 = sphi 0, %s38
    %s39 = sphi 0, %s36
    %s40 = sphi 0, %s39
    %s56 = sphi 0, %s40
    %s64 = sphi 0, %s66
    %s67 = sphi 0, %s64
    %s68 = sphi 0, %s67
    %s84 = sphi 0, %s68
    %s88 = sphi 0, %s88
    %s90 = sphi 0, %s88
    %s91 = sphi 0, %s90
    %s105 = sphi 0, %s91
    %s113 = sphi 0, %s115
    %s116 = sphi 0, %s113
    %s117 = sphi 0, %s116
    %s133 = sphi 0, %s117
    %s141 = sphi 0, %s143
    %s144 = sphi 0, %s141
    %s145 = sphi 0, %s144
    %s161 = sphi 0, %s145
    %s169 = sphi 0, %s171
    %s172 = sphi 0, %s169
    %s173 = sphi 0, %s172
    %s189 = sphi 0, %s173
  $region4: #{down_block_conv_stride2.6} parent=0 // loop_header_branch
    %15 = sbr.rel (%p13) target = $region8
  $region5: #{down_block_conv_stride2.6} parent=0 // loop_body
    %s17 = ssub.s32 %s12, 1
    %s18 = ssub.s32 %s12, 2
    %s25 = sadd.s32 1, %s20
    %p26 = scmp.ge.s32.totalorder %s25, 1
    %s27 = scalar_select %p26, 0, %s25
    %s28 = sadd.s32 1, %s19
    %s29 = scalar_select %p26, %s28, %s19
    %p30 = scmp.ge.s32.totalorder %s29, 2
    %s31 = scalar_select %p30, 0, %s29
    %s32 = ssub.s32 %s19, %s31
    %s33 = ssub.s32 %s20, %s27
    %s34 = sor.u32 %s32, %s33
    %p35 = scmp.eq.s32.totalorder %s34, 0
    %s37 = sadd.s32 %s36, 1
    %s38 = scalar_select %p35, %s36, %s37
    %p41 = pneg %p35
    %p42 = scmp.eq.s32.totalorder %s12, 1
    %p43 = por %p41, %p42
    %p44 = scmp.ne.s32.totalorder %s36, %s39
    %p45 = scmp.eq.s32.totalorder %s12, 0
    %p46 = por %p44, %p45
    %p47 = scmp.ne.s32.totalorder %s36, %s39
    %p48 = scmp.eq.s32.totalorder %s17, 1
    %p49 = por %p47, %p48
    %p50 = scmp.ne.s32.totalorder %s39, %s40
    %p51 = scmp.eq.s32.totalorder %s17, 0
    %p52 = por %p50, %p51
    %p53 = scmp.ne.s32.totalorder %s39, %s40
    %p54 = scmp.eq.s32.totalorder %s18, 1
    %p55 = por %p53, %p54
    %p57 = scmp.ne.s32.totalorder %s40, %s56
    %p58 = scmp.eq.s32.totalorder %s18, 0
    %p59 = por %p57, %p58
    %s60 = ssub.s32 %s19, %s31
    %s61 = ssub.s32 %s20, %s27
    %s62 = sor.u32 %s60, %s61
    %p63 = scmp.eq.s32.totalorder %s62, 0
    %s65 = sadd.s32 %s64, 1
    %s66 = scalar_select %p63, %s64, %s65
    %p69 = pneg %p63
    %p70 = scmp.eq.s32.totalorder %s12, 1
    %p71 = por %p69, %p70
    %p72 = scmp.ne.s32.totalorder %s64, %s67
    %p73 = scmp.eq.s32.totalorder %s12, 0
    %p74 = por %p72, %p73
    %p75 = scmp.ne.s32.totalorder %s64, %s67
    %p76 = scmp.eq.s32.totalorder %s17, 1
    %p77 = por %p75, %p76
    %p78 = scmp.ne.s32.totalorder %s67, %s68
    %p79 = scmp.eq.s32.totalorder %s17, 0
    %p80 = por %p78, %p79
    %p81 = scmp.ne.s32.totalorder %s67, %s68
    %p82 = scmp.eq.s32.totalorder %s18, 1
    %p83 = por %p81, %p82
    %p85 = scmp.ne.s32.totalorder %s68, %s84
    %p86 = scmp.eq.s32.totalorder %s18, 0
    %p87 = por %p85, %p86
    %s89 = sadd.s32 %s88, 1
    %p92 = scmp.eq.s32.totalorder %s12, 1
    %p93 = scmp.ne.s32.totalorder %s88, %s90
    %p94 = scmp.eq.s32.totalorder %s12, 0
    %p95 = por %p93, %p94
    %p96 = scmp.ne.s32.totalorder %s88, %s90
    %p97 = scmp.eq.s32.totalorder %s17, 1
    %p98 = por %p96, %p97
    %p99 = scmp.ne.s32.totalorder %s90, %s91
    %p100 = scmp.eq.s32.totalorder %s17, 0
    %p101 = por %p99, %p100
    %p102 = scmp.ne.s32.totalorder %s90, %s91
    %p103 = scmp.eq.s32.totalorder %s18, 1
    %p104 = por %p102, %p103
    %p106 = scmp.ne.s32.totalorder %s91, %s105
    %p107 = scmp.eq.s32.totalorder %s18, 0
    %p108 = por %p106, %p107
    %s109 = ssub.s32 %s19, %s31
    %s110 = ssub.s32 %s20, %s27
    %s111 = sor.u32 %s109, %s110
    %p112 = scmp.eq.s32.totalorder %s111, 0
    %s114 = sadd.s32 %s113, 1
    %s115 = scalar_select %p112, %s113, %s114
    %p118 = pneg %p112
    %p119 = scmp.eq.s32.totalorder %s12, 1
    %p120 = por %p118, %p119
    %p121 = scmp.ne.s32.totalorder %s113, %s116
    %p122 = scmp.eq.s32.totalorder %s12, 0
    %p123 = por %p121, %p122
    %p124 = scmp.ne.s32.totalorder %s113, %s116
    %p125 = scmp.eq.s32.totalorder %s17, 1
    %p126 = por %p124, %p125
    %p127 = scmp.ne.s32.totalorder %s116, %s117
    %p128 = scmp.eq.s32.totalorder %s17, 0
    %p129 = por %p127, %p128
    %p130 = scmp.ne.s32.totalorder %s116, %s117
    %p131 = scmp.eq.s32.totalorder %s18, 1
    %p132 = por %p130, %p131
    %p134 = scmp.ne.s32.totalorder %s117, %s133
    %p135 = scmp.eq.s32.totalorder %s18, 0
    %p136 = por %p134, %p135
    %s137 = ssub.s32 %s19, %s31
    %s138 = ssub.s32 %s20, %s27
    %s139 = sor.u32 %s137, %s138
    %p140 = scmp.eq.s32.totalorder %s139, 0
    %s142 = sadd.s32 %s141, 1
    %s143 = scalar_select %p140, %s141, %s142
    %p146 = pneg %p140
    %p147 = scmp.eq.s32.totalorder %s12, 1
    %p148 = por %p146, %p147
    %p149 = scmp.ne.s32.totalorder %s141, %s144
    %p150 = scmp.eq.s32.totalorder %s12, 0
    %p151 = por %p149, %p150
    %p152 = scmp.ne.s32.totalorder %s141, %s144
    %p153 = scmp.eq.s32.totalorder %s17, 1
    %p154 = por %p152, %p153
    %p155 = scmp.ne.s32.totalorder %s144, %s145
    %p156 = scmp.eq.s32.totalorder %s17, 0
    %p157 = por %p155, %p156
    %p158 = scmp.ne.s32.totalorder %s144, %s145
    %p159 = scmp.eq.s32.totalorder %s18, 1
    %p160 = por %p158, %p159
    %p162 = scmp.ne.s32.totalorder %s145, %s161
    %p163 = scmp.eq.s32.totalorder %s18, 0
    %p164 = por %p162, %p163
    %s165 = ssub.s32 %s19, %s31
    %s166 = ssub.s32 %s20, %s27
    %s167 = sor.u32 %s165, %s166
    %p168 = scmp.eq.s32.totalorder %s167, 0
    %s170 = sadd.s32 %s169, 1
    %s171 = scalar_select %p168, %s169, %s170
    %p174 = pneg %p168
    %p175 = scmp.eq.s32.totalorder %s12, 1
    %p176 = por %p174, %p175
    %p177 = scmp.ne.s32.totalorder %s169, %s172
    %p178 = scmp.eq.s32.totalorder %s12, 0
    %p179 = por %p177, %p178
    %p180 = scmp.ne.s32.totalorder %s169, %s172
    %p181 = scmp.eq.s32.totalorder %s17, 1
    %p182 = por %p180, %p181
    %p183 = scmp.ne.s32.totalorder %s172, %s173
    %p184 = scmp.eq.s32.totalorder %s17, 0
    %p185 = por %p183, %p184
    %p186 = scmp.ne.s32.totalorder %s172, %s173
    %p187 = scmp.eq.s32.totalorder %s18, 1
    %p188 = por %p186, %p187
    %p190 = scmp.ne.s32.totalorder %s173, %s189
    %p191 = scmp.eq.s32.totalorder %s18, 0
    %p192 = por %p190, %p191
    %p193 = scmp.le.s32.totalorder 1, %s12
    %p194 = scmp.lt.s32.totalorder %s12, 3
    %p195 = pnand %p193, %p194
    %p196 = pneg %p195
    // Predicated region
    $region9: #{down_block_conv_stride2.6} parent=5 // pred_check
      _
    $region10: #{down_block_conv_stride2.6} parent=5 // pred_check_branch
      %198 = sbr.rel (%p195) target = $region12
    $region11: #{down_block_conv_stride2.6} parent=5 // pred_region
      %s199 = ssub.s32 %s12, 1
      // Predicated region
      $region13: #{down_block_conv_stride2.6} parent=11 // pred_check
        %p200 = pneg %p101
      $region14: #{down_block_conv_stride2.6} parent=11 // pred_check_branch
        %202 = sbr.rel (%p200) target = $region16
      $region15: #{down_block_conv_stride2.6} parent=11 // pred_region
        _
      $region16: #{down_block_conv_stride2.6} parent=11 // pred_fallthru
        _
    $region12: #{down_block_conv_stride2.6} parent=5 // pred_fallthru
      _
    %p203 = scmp.lt.s32.totalorder %s12, 2
    // Predicated region
    $region17: #{down_block_conv_stride2.6} parent=5 // pred_check
      %p204 = pneg %p203
    $region18: #{down_block_conv_stride2.6} parent=5 // pred_check_branch
      %206 = sbr.rel (%p204) target = $region20
    $region19: #{down_block_conv_stride2.6} parent=5 // pred_region
      // Predicated region
      $region21: #{down_block_conv_stride2.6} parent=19 // pred_check
        %p207 = pneg %p46
      $region22: #{down_block_conv_stride2.6} parent=19 // pred_check_branch
        %209 = sbr.rel (%p207) target = $region24
      $region23: #{down_block_conv_stride2.6} parent=19 // pred_region
        %p210 = scmp.lt.s32.totalorder %s19, 1
        %s211 = scalar_select %p210, %s19, 1
        %p212 = scmp.lt.s32.totalorder %s20, 0
        %s213 = scalar_select %p212, %s20, 0
        %s214 = smul.addr %s213, 30
        %s215 = smul.addr %s211, 30
        %s216 = sadd.s32 %s214, %s215
        %s217 = smul.addr %s216, 4
        %s218 = scalar_lea.vmem %s0, %s217
      $region24: #{down_block_conv_stride2.6} parent=19 // pred_fallthru
        _
      // Predicated region
      $region25: #{down_block_conv_stride2.6} parent=19 // pred_check
        %p219 = pneg %p74
      $region26: #{down_block_conv_stride2.6} parent=19 // pred_check_branch
        %221 = sbr.rel (%p219) target = $region28
      $region27: #{down_block_conv_stride2.6} parent=19 // pred_region
        %p222 = scmp.lt.s32.totalorder %s19, 1
        %s223 = scalar_select %p222, %s19, 1
        %p224 = scmp.lt.s32.totalorder %s20, 0
        %s225 = scalar_select %p224, %s20, 0
        %s226 = smul.addr %s225, 30
        %s227 = smul.addr %s223, 30
        %s228 = sadd.s32 %s226, %s227
        %s229 = smul.addr %s228, 4
        %s230 = scalar_lea.vmem %s1, %s229
      $region28: #{down_block_conv_stride2.6} parent=19 // pred_fallthru
        _
    $region20: #{down_block_conv_stride2.6} parent=5 // pred_fallthru
      _
    %p231 = scmp.le.s32.totalorder 1, %s12
    %p232 = scmp.lt.s32.totalorder %s12, 3
    %p233 = pnand %p231, %p232
    %p234 = pneg %p233
    // Predicated region
    $region29: #{down_block_conv_stride2.6} parent=5 // pred_check
      _
    $region30: #{down_block_conv_stride2.6} parent=5 // pred_check_branch
      %236 = sbr.rel (%p233) target = $region32
    $region31: #{down_block_conv_stride2.6} parent=5 // pred_region
      %s237 = ssub.s32 %s12, 1
      %p238 = scmp.lt.s32.totalorder %s21, 1
      %s239 = scalar_select %p238, %s21, 1
      %p240 = scmp.lt.s32.totalorder %s22, 0
      %s241 = scalar_select %p240, %s22, 0
      %s242 = smul.addr %s241, 30
      %s243 = smul.addr %s239, 30
      %s244 = sadd.s32 %s242, %s243
      %s245 = smul.addr %s244, 4
      %s246 = scalar_lea.vmem %s0, %s245
      %p247 = pneg %p52
      %p248 = pneg %p49
      %p249 = scmp.lt.s32.totalorder %s21, 1
      %s250 = scalar_select %p249, %s21, 1
      %p251 = scmp.lt.s32.totalorder %s22, 0
      %s252 = scalar_select %p251, %s22, 0
      %s253 = smul.addr %s252, 30
      %s254 = smul.addr %s250, 30
      %s255 = sadd.s32 %s253, %s254
      %s256 = smul.addr %s255, 4
      %s257 = scalar_lea.vmem %s1, %s256
      %p258 = pneg %p80
      %p259 = pneg %p77
      %p260 = pneg %p101
      %p261 = pneg %p98
      %p262 = pneg %p129
      %p263 = pneg %p126
      %p264 = scmp.lt.s32.totalorder %s21, 1
      %s265 = scalar_select %p264, %s21, 1
      %p266 = scmp.lt.s32.totalorder %s22, 0
      %s267 = scalar_select %p266, %s22, 0
      %s268 = sadd.s32 %s267, %s265
      %s269 = smul.addr %s268, 2
      %s270 = scalar_lea.vmem %s3, %s269
      %p271 = pneg %p157
      %p272 = pneg %p154
      %p273 = scmp.lt.s32.totalorder %s21, 1
      %s274 = scalar_select %p273, %s21, 1
      %p275 = scmp.lt.s32.totalorder %s22, 0
      %s276 = scalar_select %p275, %s22, 0
      %s277 = sadd.s32 %s276, %s274
      %s278 = smul.addr %s277, 4
      %s279 = scalar_lea.vmem %s4, %s278
      %p280 = pneg %p185
      %p281 = pneg %p182
      %p282 = scmp.lt.s32.totalorder %s21, 1
      %s283 = scalar_select %p282, %s21, 1
      %p284 = scmp.lt.s32.totalorder %s22, 0
      %s285 = scalar_select %p284, %s22, 0
      %s286 = sadd.s32 %s285, %s283
      %s287 = smul.addr %s286, 4
      %s288 = scalar_lea.vmem %s5, %s287
      %p289 = scmp.lt.s32.totalorder %s21, 1
      %s290 = scalar_select %p289, %s21, 1
      %p291 = scmp.lt.s32.totalorder %s22, 0
      %s292 = scalar_select %p291, %s22, 0
      %s293 = smul.addr %s292, 30
      %s294 = smul.addr %s290, 30
      %s295 = sadd.s32 %s293, %s294
      %s296 = smul.addr %s295, 4
      %s297 = scalar_lea.vmem %s0, %s296
      %p298 = scmp.lt.s32.totalorder %s21, 1
      %s299 = scalar_select %p298, %s21, 1
      %p300 = scmp.lt.s32.totalorder %s22, 0
      %s301 = scalar_select %p300, %s22, 0
      %s302 = smul.addr %s301, 30
      %s303 = smul.addr %s299, 30
      %s304 = sadd.s32 %s302, %s303
      %s305 = smul.addr %s304, 4
      %s306 = scalar_lea.vmem %s1, %s305
      %p307 = scmp.lt.s32.totalorder %s21, 1
      %s308 = scalar_select %p307, %s21, 1
      %p309 = scmp.lt.s32.totalorder %s22, 0
      %s310 = scalar_select %p309, %s22, 0
      %s311 = sadd.s32 %s310, %s308
      %s312 = smul.addr %s311, 2
      %s313 = scalar_lea.vmem %s3, %s312
      %p314 = scmp.lt.s32.totalorder %s21, 1
      %s315 = scalar_select %p314, %s21, 1
      %p316 = scmp.lt.s32.totalorder %s22, 0
      %s317 = scalar_select %p316, %s22, 0
      %s318 = sadd.s32 %s317, %s315
      %s319 = smul.addr %s318, 4
      %s320 = scalar_lea.vmem %s4, %s319
      %p321 = scmp.lt.s32.totalorder %s21, 1
      %s322 = scalar_select %p321, %s21, 1
      %p323 = scmp.lt.s32.totalorder %s22, 0
      %s324 = scalar_select %p323, %s22, 0
      %s325 = sadd.s32 %s324, %s322
      %s326 = smul.addr %s325, 4
      %s327 = scalar_lea.vmem %s5, %s326
      %v329 = vld [vmem:[%s297] sm:$0xf]
      %v330 = vld [vmem:[%s297 + $0x4] sm:$0xf]
      %s331 = scalar_lea.vmem %s297, 16
      %v332 = vld [vmem:[%s331] sm:$0xf]
      %v333 = vld [vmem:[%s331 + $0x4] sm:$0xf]
      %s334 = scalar_lea.vmem %s297, 32
      %v335 = vld [vmem:[%s334] sm:$0xf]
      %v336 = vld [vmem:[%s334 + $0x4] sm:$0xf]
      %s337 = scalar_lea.vmem %s297, 48
      %v338 = vld [vmem:[%s337] sm:$0xf]
      %v339 = vld [vmem:[%s337 + $0x4] sm:$0xf]
      %s340 = scalar_lea.vmem %s297, 64
      %v341 = vld [vmem:[%s340] sm:$0xf]
      %v342 = vld [vmem:[%s340 + $0x4] sm:$0xf]
      %s343 = scalar_lea.vmem %s297, 80
      %v344 = vld [vmem:[%s343] sm:$0xf]
      %v345 = vld [vmem:[%s343 + $0x4] sm:$0xf]
      %s346 = scalar_lea.vmem %s297, 96
      %v347 = vld [vmem:[%s346] sm:$0xf]
      %v348 = vld [vmem:[%s346 + $0x4] sm:$0xf]
      %v351 = vunpack.c.l.b16 %v329
      %v352 = vunpack.c.l.b16 %v330
      %v353 = vpack.c.b16 %v352, %v351
      %v356 = vunpack.c.l.b16 %v332
      %v357 = vunpack.c.l.b16 %v333
      %v358 = vpack.c.b16 %v357, %v356
      %359 = vrot.lane.b32.xlu0 %v358, 7
      %v360 = vpop.permute.xlu0 %359
      %v363 = vunpack.c.l.b16 %v335
      %v364 = vunpack.c.l.b16 %v336
      %v365 = vpack.c.b16 %v364, %v363
      %366 = vrot.lane.b32.xlu0 %v365, 14
      %v367 = vpop.permute.xlu0 %366
      %v370 = vunpack.c.l.b16 %v338
      %v371 = vunpack.c.l.b16 %v339
      %v372 = vpack.c.b16 %v371, %v370
      %373 = vrot.lane.b32.xlu0 %v372, 21
      %v374 = vpop.permute.xlu0 %373
      %v377 = vunpack.c.l.b16 %v341
      %v378 = vunpack.c.l.b16 %v342
      %v379 = vpack.c.b16 %v378, %v377
      %380 = vrot.lane.b32.xlu0 %v379, 28
      %v381 = vpop.permute.xlu0 %380
      %v384 = vunpack.c.l.b16 %v344
      %v385 = vunpack.c.l.b16 %v345
      %v386 = vpack.c.b16 %v385, %v384
      %387 = vrot.lane.b32.xlu0 %v386, 35
      %v388 = vpop.permute.xlu0 %387
      %v391 = vunpack.c.l.b16 %v347
      %v392 = vunpack.c.l.b16 %v348
      %v393 = vpack.c.b16 %v392, %v391
      %394 = vrot.lane.b32.xlu0 %v393, 42
      %v395 = vpop.permute.xlu0 %394
      %vm396 = vcmask 56320
      %v399 = vsel %vm396, %v353, %v360
      %vm400 = vcmask 113664
      %v402 = vsel %vm400, %v399, %v367
      %vm403 = vcmask 171008
      %v405 = vsel %vm403, %v402, %v374
      %vm406 = vcmask 228352
      %v408 = vsel %vm406, %v405, %v381
      %vm409 = vcmask 285696
      %v411 = vsel %vm409, %v408, %v388
      %vm412 = vcmask 343040
      %v414 = vsel %vm412, %v411, %v395
      %v416 = vld [vmem:[%s306] sm:$0xf]
      %v417 = vld [vmem:[%s306 + $0x4] sm:$0xf]
      %s418 = scalar_lea.vmem %s306, 16
      %v419 = vld [vmem:[%s418] sm:$0xf]
      %v420 = vld [vmem:[%s418 + $0x4] sm:$0xf]
      %s421 = scalar_lea.vmem %s306, 32
      %v422 = vld [vmem:[%s421] sm:$0xf]
      %v423 = vld [vmem:[%s421 + $0x4] sm:$0xf]
      %s424 = scalar_lea.vmem %s306, 48
      %v425 = vld [vmem:[%s424] sm:$0xf]
      %v426 = vld [vmem:[%s424 + $0x4] sm:$0xf]
      %s427 = scalar_lea.vmem %s306, 64
      %v428 = vld [vmem:[%s427] sm:$0xf]
      %v429 = vld [vmem:[%s427 + $0x4] sm:$0xf]
      %s430 = scalar_lea.vmem %s306, 80
      %v431 = vld [vmem:[%s430] sm:$0xf]
      %v432 = vld [vmem:[%s430 + $0x4] sm:$0xf]
      %s433 = scalar_lea.vmem %s306, 96
      %v434 = vld [vmem:[%s433] sm:$0xf]
      %v435 = vld [vmem:[%s433 + $0x4] sm:$0xf]
      %v438 = vunpack.c.l.b16 %v416
      %v439 = vunpack.c.l.b16 %v417
      %v440 = vpack.c.b16 %v439, %v438
      %v443 = vunpack.c.l.b16 %v419
      %v444 = vunpack.c.l.b16 %v420
      %v445 = vpack.c.b16 %v444, %v443
      %446 = vrot.lane.b32.xlu0 %v445, 7
      %v447 = vpop.permute.xlu0 %446
      %v450 = vunpack.c.l.b16 %v422
      %v451 = vunpack.c.l.b16 %v423
      %v452 = vpack.c.b16 %v451, %v450
      %453 = vrot.lane.b32.xlu0 %v452, 14
      %v454 = vpop.permute.xlu0 %453
      %v457 = vunpack.c.l.b16 %v425
      %v458 = vunpack.c.l.b16 %v426
      %v459 = vpack.c.b16 %v458, %v457
      %460 = vrot.lane.b32.xlu0 %v459, 21
      %v461 = vpop.permute.xlu0 %460
      %v464 = vunpack.c.l.b16 %v428
      %v465 = vunpack.c.l.b16 %v429
      %v466 = vpack.c.b16 %v465, %v464
      %467 = vrot.lane.b32.xlu0 %v466, 28
      %v468 = vpop.permute.xlu0 %467
      %v471 = vunpack.c.l.b16 %v431
      %v472 = vunpack.c.l.b16 %v432
      %v473 = vpack.c.b16 %v472, %v471
      %474 = vrot.lane.b32.xlu0 %v473, 35
      %v475 = vpop.permute.xlu0 %474
      %v478 = vunpack.c.l.b16 %v434
      %v479 = vunpack.c.l.b16 %v435
      %v480 = vpack.c.b16 %v479, %v478
      %481 = vrot.lane.b32.xlu0 %v480, 42
      %v482 = vpop.permute.xlu0 %481
      %v485 = vsel %vm396, %v440, %v447
      %v487 = vsel %vm400, %v485, %v454
      %v489 = vsel %vm403, %v487, %v461
      %v491 = vsel %vm406, %v489, %v468
      %v493 = vsel %vm409, %v491, %v475
      %v495 = vsel %vm412, %v493, %v482
      %497 = vrot.lane.b32.xlu0 %v353, 127
      %v498 = vpop.permute.xlu0 %497
      %499 = vrot.lane.b32.xlu0 %v358, 6
      %v500 = vpop.permute.xlu0 %499
      %501 = vrot.lane.b32.xlu0 %v365, 13
      %v502 = vpop.permute.xlu0 %501
      %503 = vrot.lane.b32.xlu0 %v372, 20
      %v504 = vpop.permute.xlu0 %503
      %505 = vrot.lane.b32.xlu0 %v379, 27
      %v506 = vpop.permute.xlu0 %505
      %507 = vrot.lane.b32.xlu0 %v386, 34
      %v508 = vpop.permute.xlu0 %507
      %509 = vrot.lane.b32.xlu0 %v393, 41
      %v510 = vpop.permute.xlu0 %509
      %v513 = vsel %vm396, %v498, %v500
      %v515 = vsel %vm400, %v513, %v502
      %v517 = vsel %vm403, %v515, %v504
      %v519 = vsel %vm406, %v517, %v506
      %v521 = vsel %vm409, %v519, %v508
      %v523 = vsel %vm412, %v521, %v510
      %s525 = scalar_lea.vmem %s297, 8
      %v526 = vld [vmem:[%s525] sm:$0xf]
      %v527 = vld [vmem:[%s525 + $0x4] sm:$0xf]
      %s528 = scalar_lea.vmem %s297, 24
      %v529 = vld [vmem:[%s528] sm:$0xf]
      %v530 = vld [vmem:[%s528 + $0x4] sm:$0xf]
      %s531 = scalar_lea.vmem %s297, 40
      %v532 = vld [vmem:[%s531] sm:$0xf]
      %v533 = vld [vmem:[%s531 + $0x4] sm:$0xf]
      %s534 = scalar_lea.vmem %s297, 56
      %v535 = vld [vmem:[%s534] sm:$0xf]
      %v536 = vld [vmem:[%s534 + $0x4] sm:$0xf]
      %s537 = scalar_lea.vmem %s297, 72
      %v538 = vld [vmem:[%s537] sm:$0xf]
      %v539 = vld [vmem:[%s537 + $0x4] sm:$0xf]
      %s540 = scalar_lea.vmem %s297, 88
      %v541 = vld [vmem:[%s540] sm:$0xf]
      %v542 = vld [vmem:[%s540 + $0x4] sm:$0xf]
      %s543 = scalar_lea.vmem %s297, 104
      %v544 = vld [vmem:[%s543] sm:$0xf]
      %v545 = vld [vmem:[%s543 + $0x4] sm:$0xf]
      %v548 = vunpack.c.l.b16 %v526
      %v549 = vunpack.c.l.b16 %v527
      %v550 = vpack.c.b16 %v549, %v548
      %v553 = vunpack.c.l.b16 %v529
      %v554 = vunpack.c.l.b16 %v530
      %v555 = vpack.c.b16 %v554, %v553
      %556 = vrot.lane.b32.xlu0 %v555, 7
      %v557 = vpop.permute.xlu0 %556
      %v560 = vunpack.c.l.b16 %v532
      %v561 = vunpack.c.l.b16 %v533
      %v562 = vpack.c.b16 %v561, %v560
      %563 = vrot.lane.b32.xlu0 %v562, 14
      %v564 = vpop.permute.xlu0 %563
      %v567 = vunpack.c.l.b16 %v535
      %v568 = vunpack.c.l.b16 %v536
      %v569 = vpack.c.b16 %v568, %v567
      %570 = vrot.lane.b32.xlu0 %v569, 21
      %v571 = vpop.permute.xlu0 %570
      %v574 = vunpack.c.l.b16 %v538
      %v575 = vunpack.c.l.b16 %v539
      %v576 = vpack.c.b16 %v575, %v574
      %577 = vrot.lane.b32.xlu0 %v576, 28
      %v578 = vpop.permute.xlu0 %577
      %v581 = vunpack.c.l.b16 %v541
      %v582 = vunpack.c.l.b16 %v542
      %v583 = vpack.c.b16 %v582, %v581
      %584 = vrot.lane.b32.xlu0 %v583, 35
      %v585 = vpop.permute.xlu0 %584
      %v588 = vunpack.c.l.b16 %v544
      %v589 = vunpack.c.l.b16 %v545
      %v590 = vpack.c.b16 %v589, %v588
      %591 = vrot.lane.b32.xlu0 %v590, 42
      %v592 = vpop.permute.xlu0 %591
      %v595 = vsel %vm396, %v550, %v557
      %v597 = vsel %vm400, %v595, %v564
      %v599 = vsel %vm403, %v597, %v571
      %v601 = vsel %vm406, %v599, %v578
      %v603 = vsel %vm409, %v601, %v585
      %v605 = vsel %vm412, %v603, %v592
      %s607 = scalar_lea.vmem %s306, 8
      %v608 = vld [vmem:[%s607] sm:$0xf]
      %v609 = vld [vmem:[%s607 + $0x4] sm:$0xf]
      %s610 = scalar_lea.vmem %s306, 24
      %v611 = vld [vmem:[%s610] sm:$0xf]
      %v612 = vld [vmem:[%s610 + $0x4] sm:$0xf]
      %s613 = scalar_lea.vmem %s306, 40
      %v614 = vld [vmem:[%s613] sm:$0xf]
      %v615 = vld [vmem:[%s613 + $0x4] sm:$0xf]
      %s616 = scalar_lea.vmem %s306, 56
      %v617 = vld [vmem:[%s616] sm:$0xf]
      %v618 = vld [vmem:[%s616 + $0x4] sm:$0xf]
      %s619 = scalar_lea.vmem %s306, 72
      %v620 = vld [vmem:[%s619] sm:$0xf]
      %v621 = vld [vmem:[%s619 + $0x4] sm:$0xf]
      %s622 = scalar_lea.vmem %s306, 88
      %v623 = vld [vmem:[%s622] sm:$0xf]
      %v624 = vld [vmem:[%s622 + $0x4] sm:$0xf]
      %s625 = scalar_lea.vmem %s306, 104
      %v626 = vld [vmem:[%s625] sm:$0xf]
      %v627 = vld [vmem:[%s625 + $0x4] sm:$0xf]
      %v630 = vunpack.c.l.b16 %v608
      %v631 = vunpack.c.l.b16 %v609
      %v632 = vpack.c.b16 %v631, %v630
      %v635 = vunpack.c.l.b16 %v611
      %v636 = vunpack.c.l.b16 %v612
      %v637 = vpack.c.b16 %v636, %v635
      %638 = vrot.lane.b32.xlu0 %v637, 7
      %v639 = vpop.permute.xlu0 %638
      %v642 = vunpack.c.l.b16 %v614
      %v643 = vunpack.c.l.b16 %v615
      %v644 = vpack.c.b16 %v643, %v642
      %645 = vrot.lane.b32.xlu0 %v644, 14
      %v646 = vpop.permute.xlu0 %645
      %v649 = vunpack.c.l.b16 %v617
      %v650 = vunpack.c.l.b16 %v618
      %v651 = vpack.c.b16 %v650, %v649
      %652 = vrot.lane.b32.xlu0 %v651, 21
      %v653 = vpop.permute.xlu0 %652
      %v656 = vunpack.c.l.b16 %v620
      %v657 = vunpack.c.l.b16 %v621
      %v658 = vpack.c.b16 %v657, %v656
      %659 = vrot.lane.b32.xlu0 %v658, 28
      %v660 = vpop.permute.xlu0 %659
      %v663 = vunpack.c.l.b16 %v623
      %v664 = vunpack.c.l.b16 %v624
      %v665 = vpack.c.b16 %v664, %v663
      %666 = vrot.lane.b32.xlu0 %v665, 35
      %v667 = vpop.permute.xlu0 %666
      %v670 = vunpack.c.l.b16 %v626
      %v671 = vunpack.c.l.b16 %v627
      %v672 = vpack.c.b16 %v671, %v670
      %673 = vrot.lane.b32.xlu0 %v672, 42
      %v674 = vpop.permute.xlu0 %673
      %v677 = vsel %vm396, %v632, %v639
      %v679 = vsel %vm400, %v677, %v646
      %v681 = vsel %vm403, %v679, %v653
      %v683 = vsel %vm406, %v681, %v660
      %v685 = vsel %vm409, %v683, %v667
      %v687 = vsel %vm412, %v685, %v674
      %689 = vrot.lane.b32.xlu0 %v550, 127
      %v690 = vpop.permute.xlu0 %689
      %691 = vrot.lane.b32.xlu0 %v555, 6
      %v692 = vpop.permute.xlu0 %691
      %693 = vrot.lane.b32.xlu0 %v562, 13
      %v694 = vpop.permute.xlu0 %693
      %695 = vrot.lane.b32.xlu0 %v569, 20
      %v696 = vpop.permute.xlu0 %695
      %697 = vrot.lane.b32.xlu0 %v576, 27
      %v698 = vpop.permute.xlu0 %697
      %699 = vrot.lane.b32.xlu0 %v583, 34
      %v700 = vpop.permute.xlu0 %699
      %701 = vrot.lane.b32.xlu0 %v590, 41
      %v702 = vpop.permute.xlu0 %701
      %v705 = vsel %vm396, %v690, %v692
      %v707 = vsel %vm400, %v705, %v694
      %v709 = vsel %vm403, %v707, %v696
      %v711 = vsel %vm406, %v709, %v698
      %v713 = vsel %vm409, %v711, %v700
      %v715 = vsel %vm412, %v713, %v702
      %s717 = scalar_lea.vmem %s297, 112
      %v718 = vld [vmem:[%s717] sm:$0xf]
      %v719 = vld [vmem:[%s717 + $0x4] sm:$0xf]
      %720 = vrot.lane.b32.xlu0 %v365, 7
      %v721 = vpop.permute.xlu0 %720
      %722 = vrot.lane.b32.xlu0 %v372, 14
      %v723 = vpop.permute.xlu0 %722
      %724 = vrot.lane.b32.xlu0 %v379, 21
      %v725 = vpop.permute.xlu0 %724
      %726 = vrot.lane.b32.xlu0 %v386, 28
      %v727 = vpop.permute.xlu0 %726
      %728 = vrot.lane.b32.xlu0 %v393, 35
      %v729 = vpop.permute.xlu0 %728
      %v732 = vunpack.c.l.b16 %v718
      %v733 = vunpack.c.l.b16 %v719
      %v734 = vpack.c.b16 %v733, %v732
      %735 = vrot.lane.b32.xlu0 %v734, 42
      %v736 = vpop.permute.xlu0 %735
      %v739 = vsel %vm396, %v358, %v721
      %v741 = vsel %vm400, %v739, %v723
      %v743 = vsel %vm403, %v741, %v725
      %v745 = vsel %vm406, %v743, %v727
      %v747 = vsel %vm409, %v745, %v729
      %v749 = vsel %vm412, %v747, %v736
      %s751 = scalar_lea.vmem %s306, 112
      %v752 = vld [vmem:[%s751] sm:$0xf]
      %v753 = vld [vmem:[%s751 + $0x4] sm:$0xf]
      %754 = vrot.lane.b32.xlu0 %v452, 7
      %v755 = vpop.permute.xlu0 %754
      %756 = vrot.lane.b32.xlu0 %v459, 14
      %v757 = vpop.permute.xlu0 %756
      %758 = vrot.lane.b32.xlu0 %v466, 21
      %v759 = vpop.permute.xlu0 %758
      %760 = vrot.lane.b32.xlu0 %v473, 28
      %v761 = vpop.permute.xlu0 %760
      %762 = vrot.lane.b32.xlu0 %v480, 35
      %v763 = vpop.permute.xlu0 %762
      %v766 = vunpack.c.l.b16 %v752
      %v767 = vunpack.c.l.b16 %v753
      %v768 = vpack.c.b16 %v767, %v766
      %769 = vrot.lane.b32.xlu0 %v768, 42
      %v770 = vpop.permute.xlu0 %769
      %v773 = vsel %vm396, %v445, %v755
      %v775 = vsel %vm400, %v773, %v757
      %v777 = vsel %vm403, %v775, %v759
      %v779 = vsel %vm406, %v777, %v761
      %v781 = vsel %vm409, %v779, %v763
      %v783 = vsel %vm412, %v781, %v770
      %785 = vrot.lane.b32.xlu0 %v358, 127
      %v786 = vpop.permute.xlu0 %785
      %787 = vrot.lane.b32.xlu0 %v365, 6
      %v788 = vpop.permute.xlu0 %787
      %789 = vrot.lane.b32.xlu0 %v372, 13
      %v790 = vpop.permute.xlu0 %789
      %791 = vrot.lane.b32.xlu0 %v379, 20
      %v792 = vpop.permute.xlu0 %791
      %793 = vrot.lane.b32.xlu0 %v386, 27
      %v794 = vpop.permute.xlu0 %793
      %795 = vrot.lane.b32.xlu0 %v393, 34
      %v796 = vpop.permute.xlu0 %795
      %797 = vrot.lane.b32.xlu0 %v734, 41
      %v798 = vpop.permute.xlu0 %797
      %v801 = vsel %vm396, %v786, %v788
      %v803 = vsel %vm400, %v801, %v790
      %v805 = vsel %vm403, %v803, %v792
      %v807 = vsel %vm406, %v805, %v794
      %v809 = vsel %vm409, %v807, %v796
      %v811 = vsel %vm412, %v809, %v798
      %v813 = vld [vmem:[%s2] sm:$0xf]
      %v816 = vunpack.c.l.s4 1983009808
      %v817 = vunpack.c.0.s8 %v816
      %v818 = vlaneseq
      %v819 = vshrl.u32 %v818, 7
      %v820 = vsub.s32 %v817, %v819
      %v821 = vrot.slane %v813, %v820
      %v822 = vcombine.high %v821, %v821
      %vm824 = vcmask 130048
      %v826 = vsel %vm824, %v822, 0
      %828 = vmatprep.subr.bf16.mxu0 0
      %829 = vmatpush1.bf16.msra.mxu0 %v414
      %830 = vmatprep.subr.bf16.mxu0 0
      %831 = vmatpush1.bf16.msra.mxu0 %v495
      %832 = vmatprep.subr.bf16.mxu0 0
      %833 = vmatpush1.bf16.msra.mxu0 %v523
      %834 = vmatprep.subr.bf16.mxu0 0
      %835 = vmatpush1.bf16.msra.mxu0 %v605
      %836 = vmatprep.subr.bf16.mxu0 0
      %837 = vmatpush1.bf16.msra.mxu0 %v687
      %838 = vmatprep.subr.bf16.mxu0 0
      %839 = vmatpush1.bf16.msra.mxu0 %v715
      %840 = vmatprep.subr.bf16.mxu0 0
      %841 = vmatpush1.bf16.msra.mxu0 %v749
      %842 = vmatprep.subr.bf16.mxu0 0
      %843 = vmatpush1.bf16.msra.mxu0 %v783
      %844 = vmatprep.subr.bf16.mxu0 0
      %845 = vmatpush1.bf16.msra.mxu0 %v811
      %846 = vmatprep.subr.bf16.mxu0 0
      %847 = vmatpush1.bf16.msra.mxu0 0
      %848 = vmatprep.subr.bf16.mxu0 0
      %849 = vmatpush1.bf16.msra.mxu0 0
      %850 = vmatprep.subr.bf16.mxu0 0
      %851 = vmatpush1.bf16.msra.mxu0 0
      %852 = vmatprep.subr.bf16.mxu0 0
      %853 = vmatpush1.bf16.msra.mxu0 0
      %854 = vmatprep.subr.bf16.mxu0 0
      %855 = vmatpush1.bf16.msra.mxu0 0
      %856 = vmatprep.subr.bf16.mxu0 0
      %857 = vmatpush1.bf16.msra.mxu0 0
      %858 = vmatprep.subr.bf16.mxu0 0
      %859 = vmatpush1.bf16.msra.mxu0 0
      %860 = vmatprep.mubr.bf16.mxu0 %v826
      %861 = vmatmul.mubr.bf16.gmra.mrb[0].mxu0 %v821
      %v862 = vpop.f32.mrb[0].mxu0
      %v863 = vadd.f32 0.0, %v862
      %v864 = vpop.f32.mrb[0].mxu0
      %v865 = vpop.f32.mrb[0].mxu0
      %v866 = vpop.f32.mrb[0].mxu0
      %867 = vdwg.mxu0
      %v868 = vpack.c.bf16 %v863, %v863
      %vm869 = vcmask 394240
      %870 = vst.msk [vmem:[%s313] sm:$0x3] %vm869, %v868
      %vm871 = vcmask 396288
      %v872 = vsel %vm871, %v863, 0.0
      %873 = vadd.xlane.f32.xlu0 %v872
      %v874 = vpop.xlane.xlu0 %873
      %vm875 = vcmask 3072
      %876 = vst.msk [vmem:[%s320] sm:$0xf] %vm875, %v874
      %v877 = vmul.f32 %v863, %v863
      %v878 = vsel %vm871, %v877, 0.0
      %879 = vadd.xlane.f32.xlu0 %v878
      %v880 = vpop.xlane.xlu0 %879
      %881 = vst.msk [vmem:[%s327] sm:$0xf] %vm875, %v880
      %p882 = scmp.lt.s32.totalorder %s21, 1
      %s883 = scalar_select %p882, %s21, 1
      %p884 = scmp.lt.s32.totalorder %s22, 0
      %s885 = scalar_select %p884, %s22, 0
      %s886 = sadd.s32 %s885, %s883
      %s887 = smul.addr %s886, 2
      %s888 = scalar_lea.vmem %s3, %s887
      %p889 = scmp.lt.s32.totalorder %s21, 1
      %s890 = scalar_select %p889, %s21, 1
      %p891 = scmp.lt.s32.totalorder %s22, 0
      %s892 = scalar_select %p891, %s22, 0
      %s893 = sadd.s32 %s892, %s890
      %s894 = smul.addr %s893, 4
      %s895 = scalar_lea.vmem %s4, %s894
      %p896 = scmp.lt.s32.totalorder %s21, 1
      %s897 = scalar_select %p896, %s21, 1
      %p898 = scmp.lt.s32.totalorder %s22, 0
      %s899 = scalar_select %p898, %s22, 0
      %s900 = sadd.s32 %s899, %s897
      %s901 = smul.addr %s900, 4
      %s902 = scalar_lea.vmem %s5, %s901
      // Predicated region
      $region33: #{down_block_conv_stride2.6} parent=31 // pred_check
        %p903 = pneg %p126
      $region34: #{down_block_conv_stride2.6} parent=31 // pred_check_branch
        %905 = sbr.rel (%p903) target = $region36
      $region35: #{down_block_conv_stride2.6} parent=31 // pred_region
        _
      $region36: #{down_block_conv_stride2.6} parent=31 // pred_fallthru
        _
      // Predicated region
      $region37: #{down_block_conv_stride2.6} parent=31 // pred_check
        %p906 = pneg %p154
      $region38: #{down_block_conv_stride2.6} parent=31 // pred_check_branch
        %908 = sbr.rel (%p906) target = $region40
      $region39: #{down_block_conv_stride2.6} parent=31 // pred_region
        _
      $region40: #{down_block_conv_stride2.6} parent=31 // pred_fallthru
        _
      // Predicated region
      $region41: #{down_block_conv_stride2.6} parent=31 // pred_check
        %p909 = pneg %p182
      $region42: #{down_block_conv_stride2.6} parent=31 // pred_check_branch
        %911 = sbr.rel (%p909) target = $region44
      $region43: #{down_block_conv_stride2.6} parent=31 // pred_region
        _
      $region44: #{down_block_conv_stride2.6} parent=31 // pred_fallthru
        _
    $region32: #{down_block_conv_stride2.6} parent=5 // pred_fallthru
      _
    %p912 = scmp.le.s32.totalorder 2, %s12
    // Predicated region
    $region45: #{down_block_conv_stride2.6} parent=5 // pred_check
      %p913 = pneg %p912
    $region46: #{down_block_conv_stride2.6} parent=5 // pred_check_branch
      %915 = sbr.rel (%p913) target = $region48
    $region47: #{down_block_conv_stride2.6} parent=5 // pred_region
      %s916 = ssub.s32 %s12, 2
      // Predicated region
      $region49: #{down_block_conv_stride2.6} parent=47 // pred_check
        %p917 = pneg %p132
      $region50: #{down_block_conv_stride2.6} parent=47 // pred_check_branch
        %919 = sbr.rel (%p917) target = $region52
      $region51: #{down_block_conv_stride2.6} parent=47 // pred_region
        %p920 = scmp.lt.s32.totalorder %s23, 1
        %s921 = scalar_select %p920, %s23, 1
        %p922 = scmp.lt.s32.totalorder %s24, 0
        %s923 = scalar_select %p922, %s24, 0
        %s924 = sadd.s32 %s923, %s921
        %s925 = smul.addr %s924, 2
        %s926 = scalar_lea.vmem %s3, %s925
      $region52: #{down_block_conv_stride2.6} parent=47 // pred_fallthru
        _
      // Predicated region
      $region53: #{down_block_conv_stride2.6} parent=47 // pred_check
        %p927 = pneg %p160
      $region54: #{down_block_conv_stride2.6} parent=47 // pred_check_branch
        %929 = sbr.rel (%p927) target = $region56
      $region55: #{down_block_conv_stride2.6} parent=47 // pred_region
        %p930 = scmp.lt.s32.totalorder %s23, 1
        %s931 = scalar_select %p930, %s23, 1
        %p932 = scmp.lt.s32.totalorder %s24, 0
        %s933 = scalar_select %p932, %s24, 0
        %s934 = sadd.s32 %s933, %s931
        %s935 = smul.addr %s934, 4
        %s936 = scalar_lea.vmem %s4, %s935
      $region56: #{down_block_conv_stride2.6} parent=47 // pred_fallthru
        _
      // Predicated region
      $region57: #{down_block_conv_stride2.6} parent=47 // pred_check
        %p937 = pneg %p188
      $region58: #{down_block_conv_stride2.6} parent=47 // pred_check_branch
        %939 = sbr.rel (%p937) target = $region60
      $region59: #{down_block_conv_stride2.6} parent=47 // pred_region
        %p940 = scmp.lt.s32.totalorder %s23, 1
        %s941 = scalar_select %p940, %s23, 1
        %p942 = scmp.lt.s32.totalorder %s24, 0
        %s943 = scalar_select %p942, %s24, 0
        %s944 = sadd.s32 %s943, %s941
        %s945 = smul.addr %s944, 4
        %s946 = scalar_lea.vmem %s5, %s945
      $region60: #{down_block_conv_stride2.6} parent=47 // pred_fallthru
        _
    $region48: #{down_block_conv_stride2.6} parent=5 // pred_fallthru
      _
  $region6: #{down_block_conv_stride2.6} parent=0 // loop_footer
    %s16 = sadd.s32 1, %s12
  $region7: #{down_block_conv_stride2.6} parent=0 // loop_footer_branch
    %11 = sbr.rel target = $region3
  $region8: #{down_block_conv_stride2.6} parent=0 // loop_exit
    _

// kernel: down_block_conv_stride2.9
$region0: #{down_block_conv_stride2.9}
  #allocation0 [shape = 'u32[]', space=smem, size = 0x4, offset = 0x4, fixed_abs, tag = 'smem constant byte address 0x4 - core index']
  #allocation1 [shape = 'u32[144,128]{1,0:T(1,128)}', space=vmem, size = 0x12000, scoped, tag = 'internal scratch']
  %s0 = inlined_call_operand.vmem [shape: bf16[2,1,8,49], index: 0, kind: input, shape index: {}]
  %s1 = inlined_call_operand.vmem [shape: f32[8,1], index: 1, kind: input, shape index: {}]
  %s2 = inlined_call_operand.vmem [shape: f32[8,1], index: 2, kind: input, shape index: {}]
  %s3 = inlined_call_operand.vmem [shape: bf16[2,1,8,49], index: 3, kind: output, shape index: {}]
  %s4 = sld [smem:[#allocation0]]
  $region45: #{down_block_conv_stride2.9} parent=0
    _
  %s6 = ssub.s32 1, %s4
  %s7 = scalar_select 0, %s6, %s4
  loop: start=0, step=1, limit=4
  $region2: #{down_block_conv_stride2.9} parent=0 // loop_pre_header
    _
  $region3: #{down_block_conv_stride2.9} parent=0 // loop_header
    %s9 = sphi 0, %s13
    %p10 = scmp.ge.s32.totalorder %s9, 4
    %s16 = sphi 0, %s28
    %s17 = sphi 0, %s24
    %s18 = sphi 0, %s16
    %s19 = sphi 0, %s17
    %s20 = sphi 0, %s18
    %s21 = sphi 0, %s19
    %s33 = sphi 0, %s35
    %s36 = sphi 0, %s33
    %s37 = sphi 0, %s36
    %s53 = sphi 0, %s37
    %s57 = sphi 0, %s57
    %s59 = sphi 0, %s57
    %s60 = sphi 0, %s59
    %s74 = sphi 0, %s60
    %s78 = sphi 0, %s78
    %s80 = sphi 0, %s78
    %s81 = sphi 0, %s80
    %s95 = sphi 0, %s81
    %s103 = sphi 0, %s105
    %s106 = sphi 0, %s103
    %s107 = sphi 0, %s106
    %s123 = sphi 0, %s107
  $region4: #{down_block_conv_stride2.9} parent=0 // loop_header_branch
    %12 = sbr.rel (%p10) target = $region8
  $region5: #{down_block_conv_stride2.9} parent=0 // loop_body
    %s14 = ssub.s32 %s9, 1
    %s15 = ssub.s32 %s9, 2
    %s22 = sadd.s32 1, %s17
    %p23 = scmp.ge.s32.totalorder %s22, 1
    %s24 = scalar_select %p23, 0, %s22
    %s25 = sadd.s32 1, %s16
    %s26 = scalar_select %p23, %s25, %s16
    %p27 = scmp.ge.s32.totalorder %s26, 2
    %s28 = scalar_select %p27, 0, %s26
    %s29 = ssub.s32 %s16, %s28
    %s30 = ssub.s32 %s17, %s24
    %s31 = sor.u32 %s29, %s30
    %p32 = scmp.eq.s32.totalorder %s31, 0
    %s34 = sadd.s32 %s33, 1
    %s35 = scalar_select %p32, %s33, %s34
    %p38 = pneg %p32
    %p39 = scmp.eq.s32.totalorder %s9, 1
    %p40 = por %p38, %p39
    %p41 = scmp.ne.s32.totalorder %s33, %s36
    %p42 = scmp.eq.s32.totalorder %s9, 0
    %p43 = por %p41, %p42
    %p44 = scmp.ne.s32.totalorder %s33, %s36
    %p45 = scmp.eq.s32.totalorder %s14, 1
    %p46 = por %p44, %p45
    %p47 = scmp.ne.s32.totalorder %s36, %s37
    %p48 = scmp.eq.s32.totalorder %s14, 0
    %p49 = por %p47, %p48
    %p50 = scmp.ne.s32.totalorder %s36, %s37
    %p51 = scmp.eq.s32.totalorder %s15, 1
    %p52 = por %p50, %p51
    %p54 = scmp.ne.s32.totalorder %s37, %s53
    %p55 = scmp.eq.s32.totalorder %s15, 0
    %p56 = por %p54, %p55
    %s58 = sadd.s32 %s57, 1
    %p61 = scmp.eq.s32.totalorder %s9, 1
    %p62 = scmp.ne.s32.totalorder %s57, %s59
    %p63 = scmp.eq.s32.totalorder %s9, 0
    %p64 = por %p62, %p63
    %p65 = scmp.ne.s32.totalorder %s57, %s59
    %p66 = scmp.eq.s32.totalorder %s14, 1
    %p67 = por %p65, %p66
    %p68 = scmp.ne.s32.totalorder %s59, %s60
    %p69 = scmp.eq.s32.totalorder %s14, 0
    %p70 = por %p68, %p69
    %p71 = scmp.ne.s32.totalorder %s59, %s60
    %p72 = scmp.eq.s32.totalorder %s15, 1
    %p73 = por %p71, %p72
    %p75 = scmp.ne.s32.totalorder %s60, %s74
    %p76 = scmp.eq.s32.totalorder %s15, 0
    %p77 = por %p75, %p76
    %s79 = sadd.s32 %s78, 1
    %p82 = scmp.eq.s32.totalorder %s9, 1
    %p83 = scmp.ne.s32.totalorder %s78, %s80
    %p84 = scmp.eq.s32.totalorder %s9, 0
    %p85 = por %p83, %p84
    %p86 = scmp.ne.s32.totalorder %s78, %s80
    %p87 = scmp.eq.s32.totalorder %s14, 1
    %p88 = por %p86, %p87
    %p89 = scmp.ne.s32.totalorder %s80, %s81
    %p90 = scmp.eq.s32.totalorder %s14, 0
    %p91 = por %p89, %p90
    %p92 = scmp.ne.s32.totalorder %s80, %s81
    %p93 = scmp.eq.s32.totalorder %s15, 1
    %p94 = por %p92, %p93
    %p96 = scmp.ne.s32.totalorder %s81, %s95
    %p97 = scmp.eq.s32.totalorder %s15, 0
    %p98 = por %p96, %p97
    %s99 = ssub.s32 %s16, %s28
    %s100 = ssub.s32 %s17, %s24
    %s101 = sor.u32 %s99, %s100
    %p102 = scmp.eq.s32.totalorder %s101, 0
    %s104 = sadd.s32 %s103, 1
    %s105 = scalar_select %p102, %s103, %s104
    %p108 = pneg %p102
    %p109 = scmp.eq.s32.totalorder %s9, 1
    %p110 = por %p108, %p109
    %p111 = scmp.ne.s32.totalorder %s103, %s106
    %p112 = scmp.eq.s32.totalorder %s9, 0
    %p113 = por %p111, %p112
    %p114 = scmp.ne.s32.totalorder %s103, %s106
    %p115 = scmp.eq.s32.totalorder %s14, 1
    %p116 = por %p114, %p115
    %p117 = scmp.ne.s32.totalorder %s106, %s107
    %p118 = scmp.eq.s32.totalorder %s14, 0
    %p119 = por %p117, %p118
    %p120 = scmp.ne.s32.totalorder %s106, %s107
    %p121 = scmp.eq.s32.totalorder %s15, 1
    %p122 = por %p120, %p121
    %p124 = scmp.ne.s32.totalorder %s107, %s123
    %p125 = scmp.eq.s32.totalorder %s15, 0
    %p126 = por %p124, %p125
    %p127 = scmp.le.s32.totalorder 1, %s9
    %p128 = scmp.lt.s32.totalorder %s9, 3
    %p129 = pnand %p127, %p128
    %p130 = pneg %p129
    // Predicated region
    $region9: #{down_block_conv_stride2.9} parent=5 // pred_check
      _
    $region10: #{down_block_conv_stride2.9} parent=5 // pred_check_branch
      %132 = sbr.rel (%p129) target = $region12
    $region11: #{down_block_conv_stride2.9} parent=5 // pred_region
      %s133 = ssub.s32 %s9, 1
      // Predicated region
      $region13: #{down_block_conv_stride2.9} parent=11 // pred_check
        %p134 = pneg %p70
      $region14: #{down_block_conv_stride2.9} parent=11 // pred_check_branch
        %136 = sbr.rel (%p134) target = $region16
      $region15: #{down_block_conv_stride2.9} parent=11 // pred_region
        _
      $region16: #{down_block_conv_stride2.9} parent=11 // pred_fallthru
        _
      // Predicated region
      $region17: #{down_block_conv_stride2.9} parent=11 // pred_check
        %p137 = pneg %p91
      $region18: #{down_block_conv_stride2.9} parent=11 // pred_check_branch
        %139 = sbr.rel (%p137) target = $region20
      $region19: #{down_block_conv_stride2.9} parent=11 // pred_region
        _
      $region20: #{down_block_conv_stride2.9} parent=11 // pred_fallthru
        _
    $region12: #{down_block_conv_stride2.9} parent=5 // pred_fallthru
      _
    %p140 = scmp.lt.s32.totalorder %s9, 2
    // Predicated region
    $region21: #{down_block_conv_stride2.9} parent=5 // pred_check
      %p141 = pneg %p140
    $region22: #{down_block_conv_stride2.9} parent=5 // pred_check_branch
      %143 = sbr.rel (%p141) target = $region24
    $region23: #{down_block_conv_stride2.9} parent=5 // pred_region
      // Predicated region
      $region25: #{down_block_conv_stride2.9} parent=23 // pred_check
        %p144 = pneg %p43
      $region26: #{down_block_conv_stride2.9} parent=23 // pred_check_branch
        %146 = sbr.rel (%p144) target = $region28
      $region27: #{down_block_conv_stride2.9} parent=23 // pred_region
        %p147 = scmp.lt.s32.totalorder %s16, 1
        %s148 = scalar_select %p147, %s16, 1
        %p149 = scmp.lt.s32.totalorder %s17, 0
        %s150 = scalar_select %p149, %s17, 0
        %s151 = sadd.s32 %s150, %s148
        %s152 = smul.addr %s151, 4
        %s153 = scalar_lea.vmem %s0, %s152
      $region28: #{down_block_conv_stride2.9} parent=23 // pred_fallthru
        _
    $region24: #{down_block_conv_stride2.9} parent=5 // pred_fallthru
      _
    %p154 = scmp.le.s32.totalorder 1, %s9
    %p155 = scmp.lt.s32.totalorder %s9, 3
    %p156 = pnand %p154, %p155
    %p157 = pneg %p156
    // Predicated region
    $region29: #{down_block_conv_stride2.9} parent=5 // pred_check
      _
    $region30: #{down_block_conv_stride2.9} parent=5 // pred_check_branch
      %159 = sbr.rel (%p156) target = $region32
    $region31: #{down_block_conv_stride2.9} parent=5 // pred_region
      %s160 = ssub.s32 %s9, 1
      %p161 = scmp.lt.s32.totalorder %s18, 1
      %s162 = scalar_select %p161, %s18, 1
      %p163 = scmp.lt.s32.totalorder %s19, 0
      %s164 = scalar_select %p163, %s19, 0
      %s165 = sadd.s32 %s164, %s162
      %s166 = smul.addr %s165, 4
      %s167 = scalar_lea.vmem %s0, %s166
      %p168 = pneg %p49
      %p169 = pneg %p46
      %p170 = pneg %p70
      %p171 = pneg %p67
      %p172 = pneg %p91
      %p173 = pneg %p88
      %p174 = pneg %p119
      %p175 = pneg %p116
      %p176 = scmp.lt.s32.totalorder %s18, 1
      %s177 = scalar_select %p176, %s18, 1
      %p178 = scmp.lt.s32.totalorder %s19, 0
      %s179 = scalar_select %p178, %s19, 0
      %s180 = sadd.s32 %s179, %s177
      %s181 = smul.addr %s180, 4
      %s182 = scalar_lea.vmem %s3, %s181
      %p183 = scmp.lt.s32.totalorder %s18, 1
      %s184 = scalar_select %p183, %s18, 1
      %p185 = scmp.lt.s32.totalorder %s19, 0
      %s186 = scalar_select %p185, %s19, 0
      %s187 = sadd.s32 %s186, %s184
      %s188 = smul.addr %s187, 4
      %s189 = scalar_lea.vmem %s0, %s188
      %p190 = scmp.lt.s32.totalorder %s18, 1
      %s191 = scalar_select %p190, %s18, 1
      %p192 = scmp.lt.s32.totalorder %s19, 0
      %s193 = scalar_select %p192, %s19, 0
      %s194 = sadd.s32 %s193, %s191
      %s195 = smul.addr %s194, 4
      %s196 = scalar_lea.vmem %s3, %s195
      %v197 = vld [vmem:[%s189] sm:$0xf]
      %v198 = vunpack.c.l.bf16 %v197
      %v199 = vld [vmem:[%s1] sm:$0xff]
      %201 = vset.pattern.permute.xlu0 0
      %202 = vperm.xlu0 %201, %v199
      %v203 = vpop.permute.xlu0 %202
      %v205 = vmul.f32 %v198, %v203
      %v206 = vld [vmem:[%s2] sm:$0xff]
      %208 = vset.pattern.permute.xlu0 0
      %209 = vperm.xlu0 %208, %v206
      %v210 = vpop.permute.xlu0 %209
      %v212 = vadd.f32 %v205, %v210
      %v213 = vmax.f32 %v212, 0.0
      %v214 = vpack.c.bf16 %v213, %v213
      %vm215 = vcmask 396288
      %216 = vst.msk [vmem:[%s196] sm:$0xf] %vm215, %v214
      %p217 = scmp.lt.s32.totalorder %s18, 1
      %s218 = scalar_select %p217, %s18, 1
      %p219 = scmp.lt.s32.totalorder %s19, 0
      %s220 = scalar_select %p219, %s19, 0
      %s221 = sadd.s32 %s220, %s218
      %s222 = smul.addr %s221, 4
      %s223 = scalar_lea.vmem %s3, %s222
      // Predicated region
      $region33: #{down_block_conv_stride2.9} parent=31 // pred_check
        %p224 = pneg %p116
      $region34: #{down_block_conv_stride2.9} parent=31 // pred_check_branch
        %226 = sbr.rel (%p224) target = $region36
      $region35: #{down_block_conv_stride2.9} parent=31 // pred_region
        _
      $region36: #{down_block_conv_stride2.9} parent=31 // pred_fallthru
        _
    $region32: #{down_block_conv_stride2.9} parent=5 // pred_fallthru
      _
    %p227 = scmp.le.s32.totalorder 2, %s9
    // Predicated region
    $region37: #{down_block_conv_stride2.9} parent=5 // pred_check
      %p228 = pneg %p227
    $region38: #{down_block_conv_stride2.9} parent=5 // pred_check_branch
      %230 = sbr.rel (%p228) target = $region40
    $region39: #{down_block_conv_stride2.9} parent=5 // pred_region
      %s231 = ssub.s32 %s9, 2
      // Predicated region
      $region41: #{down_block_conv_stride2.9} parent=39 // pred_check
        %p232 = pneg %p122
      $region42: #{down_block_conv_stride2.9} parent=39 // pred_check_branch
        %234 = sbr.rel (%p232) target = $region44
      $region43: #{down_block_conv_stride2.9} parent=39 // pred_region
        %p235 = scmp.lt.s32.totalorder %s20, 1
        %s236 = scalar_select %p235, %s20, 1
        %p237 = scmp.lt.s32.totalorder %s21, 0
        %s238 = scalar_select %p237, %s21, 0
        %s239 = sadd.s32 %s238, %s236
        %s240 = smul.addr %s239, 4
        %s241 = scalar_lea.vmem %s3, %s240
      $region44: #{down_block_conv_stride2.9} parent=39 // pred_fallthru
        _
    $region40: #{down_block_conv_stride2.9} parent=5 // pred_fallthru
      _
  $region6: #{down_block_conv_stride2.9} parent=0 // loop_footer
    %s13 = sadd.s32 1, %s9
  $region7: #{down_block_conv_stride2.9} parent=0 // loop_footer_branch
    %8 = sbr.rel target = $region3
  $region8: #{down_block_conv_stride2.9} parent=0 // loop_exit
    _

// kernel: down_block_conv_stride2.8
$region0: #{down_block_conv_stride2.8}
  #allocation0 [shape = 'u32[]', space=smem, size = 0x4, offset = 0x4, fixed_abs, tag = 'smem constant byte address 0x4 - core index']
  #allocation1 [shape = 'u32[144,128]{1,0:T(1,128)}', space=vmem, size = 0x12000, scoped, tag = 'internal scratch']
  %s0 = inlined_call_operand.vmem [shape: bf16[2,1,9,16,9], index: 0, kind: input, shape index: {}]
  %s1 = inlined_call_operand.vmem [shape: bf16[8,144], index: 1, kind: input, shape index: {}]
  %s2 = inlined_call_operand.vmem [shape: bf16[2,1,8,49], index: 2, kind: output, shape index: {0}]
  %s3 = inlined_call_operand.vmem [shape: f32[2,1,8,1], index: 3, kind: output, shape index: {1}]
  %s4 = inlined_call_operand.vmem [shape: f32[2,1,8,1], index: 4, kind: output, shape index: {2}]
  %5 = xla_tuple %s2, %s3, %s4
  %s6 = sld [smem:[#allocation0]]
  $region57: #{down_block_conv_stride2.8} parent=0
    _
  %s8 = ssub.s32 1, %s6
  %s9 = scalar_select 0, %s8, %s6
  loop: start=0, step=1, limit=4
  $region2: #{down_block_conv_stride2.8} parent=0 // loop_pre_header
    _
  $region3: #{down_block_conv_stride2.8} parent=0 // loop_header
    %s11 = sphi 0, %s15
    %p12 = scmp.ge.s32.totalorder %s11, 4
    %s18 = sphi 0, %s30
    %s19 = sphi 0, %s26
    %s20 = sphi 0, %s18
    %s21 = sphi 0, %s19
    %s22 = sphi 0, %s20
    %s23 = sphi 0, %s21
    %s35 = sphi 0, %s37
    %s38 = sphi 0, %s35
    %s39 = sphi 0, %s38
    %s55 = sphi 0, %s39
    %s59 = sphi 0, %s59
    %s61 = sphi 0, %s59
    %s62 = sphi 0, %s61
    %s76 = sphi 0, %s62
    %s84 = sphi 0, %s86
    %s87 = sphi 0, %s84
    %s88 = sphi 0, %s87
    %s104 = sphi 0, %s88
    %s112 = sphi 0, %s114
    %s115 = sphi 0, %s112
    %s116 = sphi 0, %s115
    %s132 = sphi 0, %s116
    %s140 = sphi 0, %s142
    %s143 = sphi 0, %s140
    %s144 = sphi 0, %s143
    %s160 = sphi 0, %s144
  $region4: #{down_block_conv_stride2.8} parent=0 // loop_header_branch
    %14 = sbr.rel (%p12) target = $region8
  $region5: #{down_block_conv_stride2.8} parent=0 // loop_body
    %s16 = ssub.s32 %s11, 1
    %s17 = ssub.s32 %s11, 2
    %s24 = sadd.s32 1, %s19
    %p25 = scmp.ge.s32.totalorder %s24, 1
    %s26 = scalar_select %p25, 0, %s24
    %s27 = sadd.s32 1, %s18
    %s28 = scalar_select %p25, %s27, %s18
    %p29 = scmp.ge.s32.totalorder %s28, 2
    %s30 = scalar_select %p29, 0, %s28
    %s31 = ssub.s32 %s18, %s30
    %s32 = ssub.s32 %s19, %s26
    %s33 = sor.u32 %s31, %s32
    %p34 = scmp.eq.s32.totalorder %s33, 0
    %s36 = sadd.s32 %s35, 1
    %s37 = scalar_select %p34, %s35, %s36
    %p40 = pneg %p34
    %p41 = scmp.eq.s32.totalorder %s11, 1
    %p42 = por %p40, %p41
    %p43 = scmp.ne.s32.totalorder %s35, %s38
    %p44 = scmp.eq.s32.totalorder %s11, 0
    %p45 = por %p43, %p44
    %p46 = scmp.ne.s32.totalorder %s35, %s38
    %p47 = scmp.eq.s32.totalorder %s16, 1
    %p48 = por %p46, %p47
    %p49 = scmp.ne.s32.totalorder %s38, %s39
    %p50 = scmp.eq.s32.totalorder %s16, 0
    %p51 = por %p49, %p50
    %p52 = scmp.ne.s32.totalorder %s38, %s39
    %p53 = scmp.eq.s32.totalorder %s17, 1
    %p54 = por %p52, %p53
    %p56 = scmp.ne.s32.totalorder %s39, %s55
    %p57 = scmp.eq.s32.totalorder %s17, 0
    %p58 = por %p56, %p57
    %s60 = sadd.s32 %s59, 1
    %p63 = scmp.eq.s32.totalorder %s11, 1
    %p64 = scmp.ne.s32.totalorder %s59, %s61
    %p65 = scmp.eq.s32.totalorder %s11, 0
    %p66 = por %p64, %p65
    %p67 = scmp.ne.s32.totalorder %s59, %s61
    %p68 = scmp.eq.s32.totalorder %s16, 1
    %p69 = por %p67, %p68
    %p70 = scmp.ne.s32.totalorder %s61, %s62
    %p71 = scmp.eq.s32.totalorder %s16, 0
    %p72 = por %p70, %p71
    %p73 = scmp.ne.s32.totalorder %s61, %s62
    %p74 = scmp.eq.s32.totalorder %s17, 1
    %p75 = por %p73, %p74
    %p77 = scmp.ne.s32.totalorder %s62, %s76
    %p78 = scmp.eq.s32.totalorder %s17, 0
    %p79 = por %p77, %p78
    %s80 = ssub.s32 %s18, %s30
    %s81 = ssub.s32 %s19, %s26
    %s82 = sor.u32 %s80, %s81
    %p83 = scmp.eq.s32.totalorder %s82, 0
    %s85 = sadd.s32 %s84, 1
    %s86 = scalar_select %p83, %s84, %s85
    %p89 = pneg %p83
    %p90 = scmp.eq.s32.totalorder %s11, 1
    %p91 = por %p89, %p90
    %p92 = scmp.ne.s32.totalorder %s84, %s87
    %p93 = scmp.eq.s32.totalorder %s11, 0
    %p94 = por %p92, %p93
    %p95 = scmp.ne.s32.totalorder %s84, %s87
    %p96 = scmp.eq.s32.totalorder %s16, 1
    %p97 = por %p95, %p96
    %p98 = scmp.ne.s32.totalorder %s87, %s88
    %p99 = scmp.eq.s32.totalorder %s16, 0
    %p100 = por %p98, %p99
    %p101 = scmp.ne.s32.totalorder %s87, %s88
    %p102 = scmp.eq.s32.totalorder %s17, 1
    %p103 = por %p101, %p102
    %p105 = scmp.ne.s32.totalorder %s88, %s104
    %p106 = scmp.eq.s32.totalorder %s17, 0
    %p107 = por %p105, %p106
    %s108 = ssub.s32 %s18, %s30
    %s109 = ssub.s32 %s19, %s26
    %s110 = sor.u32 %s108, %s109
    %p111 = scmp.eq.s32.totalorder %s110, 0
    %s113 = sadd.s32 %s112, 1
    %s114 = scalar_select %p111, %s112, %s113
    %p117 = pneg %p111
    %p118 = scmp.eq.s32.totalorder %s11, 1
    %p119 = por %p117, %p118
    %p120 = scmp.ne.s32.totalorder %s112, %s115
    %p121 = scmp.eq.s32.totalorder %s11, 0
    %p122 = por %p120, %p121
    %p123 = scmp.ne.s32.totalorder %s112, %s115
    %p124 = scmp.eq.s32.totalorder %s16, 1
    %p125 = por %p123, %p124
    %p126 = scmp.ne.s32.totalorder %s115, %s116
    %p127 = scmp.eq.s32.totalorder %s16, 0
    %p128 = por %p126, %p127
    %p129 = scmp.ne.s32.totalorder %s115, %s116
    %p130 = scmp.eq.s32.totalorder %s17, 1
    %p131 = por %p129, %p130
    %p133 = scmp.ne.s32.totalorder %s116, %s132
    %p134 = scmp.eq.s32.totalorder %s17, 0
    %p135 = por %p133, %p134
    %s136 = ssub.s32 %s18, %s30
    %s137 = ssub.s32 %s19, %s26
    %s138 = sor.u32 %s136, %s137
    %p139 = scmp.eq.s32.totalorder %s138, 0
    %s141 = sadd.s32 %s140, 1
    %s142 = scalar_select %p139, %s140, %s141
    %p145 = pneg %p139
    %p146 = scmp.eq.s32.totalorder %s11, 1
    %p147 = por %p145, %p146
    %p148 = scmp.ne.s32.totalorder %s140, %s143
    %p149 = scmp.eq.s32.totalorder %s11, 0
    %p150 = por %p148, %p149
    %p151 = scmp.ne.s32.totalorder %s140, %s143
    %p152 = scmp.eq.s32.totalorder %s16, 1
    %p153 = por %p151, %p152
    %p154 = scmp.ne.s32.totalorder %s143, %s144
    %p155 = scmp.eq.s32.totalorder %s16, 0
    %p156 = por %p154, %p155
    %p157 = scmp.ne.s32.totalorder %s143, %s144
    %p158 = scmp.eq.s32.totalorder %s17, 1
    %p159 = por %p157, %p158
    %p161 = scmp.ne.s32.totalorder %s144, %s160
    %p162 = scmp.eq.s32.totalorder %s17, 0
    %p163 = por %p161, %p162
    %p164 = scmp.le.s32.totalorder 1, %s11
    %p165 = scmp.lt.s32.totalorder %s11, 3
    %p166 = pnand %p164, %p165
    %p167 = pneg %p166
    // Predicated region
    $region9: #{down_block_conv_stride2.8} parent=5 // pred_check
      _
    $region10: #{down_block_conv_stride2.8} parent=5 // pred_check_branch
      %169 = sbr.rel (%p166) target = $region12
    $region11: #{down_block_conv_stride2.8} parent=5 // pred_region
      %s170 = ssub.s32 %s11, 1
      // Predicated region
      $region13: #{down_block_conv_stride2.8} parent=11 // pred_check
        %p171 = pneg %p72
      $region14: #{down_block_conv_stride2.8} parent=11 // pred_check_branch
        %173 = sbr.rel (%p171) target = $region16
      $region15: #{down_block_conv_stride2.8} parent=11 // pred_region
        _
      $region16: #{down_block_conv_stride2.8} parent=11 // pred_fallthru
        _
    $region12: #{down_block_conv_stride2.8} parent=5 // pred_fallthru
      _
    %p174 = scmp.lt.s32.totalorder %s11, 2
    // Predicated region
    $region17: #{down_block_conv_stride2.8} parent=5 // pred_check
      %p175 = pneg %p174
    $region18: #{down_block_conv_stride2.8} parent=5 // pred_check_branch
      %177 = sbr.rel (%p175) target = $region20
    $region19: #{down_block_conv_stride2.8} parent=5 // pred_region
      // Predicated region
      $region21: #{down_block_conv_stride2.8} parent=19 // pred_check
        %p178 = pneg %p45
      $region22: #{down_block_conv_stride2.8} parent=19 // pred_check_branch
        %180 = sbr.rel (%p178) target = $region24
      $region23: #{down_block_conv_stride2.8} parent=19 // pred_region
        %p181 = scmp.lt.s32.totalorder %s18, 1
        %s182 = scalar_select %p181, %s18, 1
        %p183 = scmp.lt.s32.totalorder %s19, 0
        %s184 = scalar_select %p183, %s19, 0
        %s185 = smul.addr %s184, 18
        %s186 = smul.addr %s182, 18
        %s187 = sadd.s32 %s185, %s186
        %s188 = smul.addr %s187, 4
        %s189 = scalar_lea.vmem %s0, %s188
      $region24: #{down_block_conv_stride2.8} parent=19 // pred_fallthru
        _
    $region20: #{down_block_conv_stride2.8} parent=5 // pred_fallthru
      _
    %p190 = scmp.le.s32.totalorder 1, %s11
    %p191 = scmp.lt.s32.totalorder %s11, 3
    %p192 = pnand %p190, %p191
    %p193 = pneg %p192
    // Predicated region
    $region25: #{down_block_conv_stride2.8} parent=5 // pred_check
      _
    $region26: #{down_block_conv_stride2.8} parent=5 // pred_check_branch
      %195 = sbr.rel (%p192) target = $region28
    $region27: #{down_block_conv_stride2.8} parent=5 // pred_region
      %s196 = ssub.s32 %s11, 1
      %p197 = scmp.lt.s32.totalorder %s20, 1
      %s198 = scalar_select %p197, %s20, 1
      %p199 = scmp.lt.s32.totalorder %s21, 0
      %s200 = scalar_select %p199, %s21, 0
      %s201 = smul.addr %s200, 18
      %s202 = smul.addr %s198, 18
      %s203 = sadd.s32 %s201, %s202
      %s204 = smul.addr %s203, 4
      %s205 = scalar_lea.vmem %s0, %s204
      %p206 = pneg %p51
      %p207 = pneg %p48
      %p208 = pneg %p72
      %p209 = pneg %p69
      %p210 = pneg %p100
      %p211 = pneg %p97
      %p212 = scmp.lt.s32.totalorder %s20, 1
      %s213 = scalar_select %p212, %s20, 1
      %p214 = scmp.lt.s32.totalorder %s21, 0
      %s215 = scalar_select %p214, %s21, 0
      %s216 = sadd.s32 %s215, %s213
      %s217 = smul.addr %s216, 4
      %s218 = scalar_lea.vmem %s2, %s217
      %p219 = pneg %p128
      %p220 = pneg %p125
      %p221 = scmp.lt.s32.totalorder %s20, 1
      %s222 = scalar_select %p221, %s20, 1
      %p223 = scmp.lt.s32.totalorder %s21, 0
      %s224 = scalar_select %p223, %s21, 0
      %s225 = sadd.s32 %s224, %s222
      %s226 = smul.addr %s225, 8
      %s227 = scalar_lea.vmem %s3, %s226
      %p228 = pneg %p156
      %p229 = pneg %p153
      %p230 = scmp.lt.s32.totalorder %s20, 1
      %s231 = scalar_select %p230, %s20, 1
      %p232 = scmp.lt.s32.totalorder %s21, 0
      %s233 = scalar_select %p232, %s21, 0
      %s234 = sadd.s32 %s233, %s231
      %s235 = smul.addr %s234, 8
      %s236 = scalar_lea.vmem %s4, %s235
      %p237 = scmp.lt.s32.totalorder %s20, 1
      %s238 = scalar_select %p237, %s20, 1
      %p239 = scmp.lt.s32.totalorder %s21, 0
      %s240 = scalar_select %p239, %s21, 0
      %s241 = smul.addr %s240, 18
      %s242 = smul.addr %s238, 18
      %s243 = sadd.s32 %s241, %s242
      %s244 = smul.addr %s243, 4
      %s245 = scalar_lea.vmem %s0, %s244
      %p246 = scmp.lt.s32.totalorder %s20, 1
      %s247 = scalar_select %p246, %s20, 1
      %p248 = scmp.lt.s32.totalorder %s21, 0
      %s249 = scalar_select %p248, %s21, 0
      %s250 = sadd.s32 %s249, %s247
      %s251 = smul.addr %s250, 4
      %s252 = scalar_lea.vmem %s2, %s251
      %p253 = scmp.lt.s32.totalorder %s20, 1
      %s254 = scalar_select %p253, %s20, 1
      %p255 = scmp.lt.s32.totalorder %s21, 0
      %s256 = scalar_select %p255, %s21, 0
      %s257 = sadd.s32 %s256, %s254
      %s258 = smul.addr %s257, 8
      %s259 = scalar_lea.vmem %s3, %s258
      %p260 = scmp.lt.s32.totalorder %s20, 1
      %s261 = scalar_select %p260, %s20, 1
      %p262 = scmp.lt.s32.totalorder %s21, 0
      %s263 = scalar_select %p262, %s21, 0
      %s264 = sadd.s32 %s263, %s261
      %s265 = smul.addr %s264, 8
      %s266 = scalar_lea.vmem %s4, %s265
      %v268 = vld [vmem:[%s245] sm:$0xf]
      %v269 = vld [vmem:[%s245 + $0x4] sm:$0xf]
      %s270 = scalar_lea.vmem %s245, 8
      %v271 = vld [vmem:[%s270] sm:$0xf]
      %v272 = vld [vmem:[%s270 + $0x4] sm:$0xf]
      %s273 = scalar_lea.vmem %s245, 16
      %v274 = vld [vmem:[%s273] sm:$0xf]
      %v275 = vld [vmem:[%s273 + $0x4] sm:$0xf]
      %s276 = scalar_lea.vmem %s245, 24
      %v277 = vld [vmem:[%s276] sm:$0xf]
      %v278 = vld [vmem:[%s276 + $0x4] sm:$0xf]
      %s279 = scalar_lea.vmem %s245, 32
      %v280 = vld [vmem:[%s279] sm:$0xf]
      %v281 = vld [vmem:[%s279 + $0x4] sm:$0xf]
      %s282 = scalar_lea.vmem %s245, 40
      %v283 = vld [vmem:[%s282] sm:$0xf]
      %v284 = vld [vmem:[%s282 + $0x4] sm:$0xf]
      %s285 = scalar_lea.vmem %s245, 48
      %v286 = vld [vmem:[%s285] sm:$0xf]
      %v287 = vld [vmem:[%s285 + $0x4] sm:$0xf]
      %v290 = vunpack.c.l.b16 %v268
      %v291 = vunpack.c.l.b16 %v269
      %v292 = vpack.c.b16 %v291, %v290
      %v295 = vunpack.c.l.b16 %v271
      %v296 = vunpack.c.l.b16 %v272
      %v297 = vpack.c.b16 %v296, %v295
      %298 = vrot.lane.b32.xlu0 %v297, 7
      %v299 = vpop.permute.xlu0 %298
      %v302 = vunpack.c.l.b16 %v274
      %v303 = vunpack.c.l.b16 %v275
      %v304 = vpack.c.b16 %v303, %v302
      %305 = vrot.lane.b32.xlu0 %v304, 14
      %v306 = vpop.permute.xlu0 %305
      %v309 = vunpack.c.l.b16 %v277
      %v310 = vunpack.c.l.b16 %v278
      %v311 = vpack.c.b16 %v310, %v309
      %312 = vrot.lane.b32.xlu0 %v311, 21
      %v313 = vpop.permute.xlu0 %312
      %v316 = vunpack.c.l.b16 %v280
      %v317 = vunpack.c.l.b16 %v281
      %v318 = vpack.c.b16 %v317, %v316
      %319 = vrot.lane.b32.xlu0 %v318, 28
      %v320 = vpop.permute.xlu0 %319
      %v323 = vunpack.c.l.b16 %v283
      %v324 = vunpack.c.l.b16 %v284
      %v325 = vpack.c.b16 %v324, %v323
      %326 = vrot.lane.b32.xlu0 %v325, 35
      %v327 = vpop.permute.xlu0 %326
      %v330 = vunpack.c.l.b16 %v286
      %v331 = vunpack.c.l.b16 %v287
      %v332 = vpack.c.b16 %v331, %v330
      %333 = vrot.lane.b32.xlu0 %v332, 42
      %v334 = vpop.permute.xlu0 %333
      %vm335 = vcmask 56320
      %v338 = vsel %vm335, %v292, %v299
      %vm339 = vcmask 113664
      %v341 = vsel %vm339, %v338, %v306
      %vm342 = vcmask 171008
      %v344 = vsel %vm342, %v341, %v313
      %vm345 = vcmask 228352
      %v347 = vsel %vm345, %v344, %v320
      %vm348 = vcmask 285696
      %v350 = vsel %vm348, %v347, %v327
      %vm351 = vcmask 343040
      %v353 = vsel %vm351, %v350, %v334
      %355 = vrot.lane.b32.xlu0 %v292, 127
      %v356 = vpop.permute.xlu0 %355
      %357 = vrot.lane.b32.xlu0 %v297, 6
      %v358 = vpop.permute.xlu0 %357
      %359 = vrot.lane.b32.xlu0 %v304, 13
      %v360 = vpop.permute.xlu0 %359
      %361 = vrot.lane.b32.xlu0 %v311, 20
      %v362 = vpop.permute.xlu0 %361
      %363 = vrot.lane.b32.xlu0 %v318, 27
      %v364 = vpop.permute.xlu0 %363
      %365 = vrot.lane.b32.xlu0 %v325, 34
      %v366 = vpop.permute.xlu0 %365
      %367 = vrot.lane.b32.xlu0 %v332, 41
      %v368 = vpop.permute.xlu0 %367
      %v371 = vsel %vm335, %v356, %v358
      %v373 = vsel %vm339, %v371, %v360
      %v375 = vsel %vm342, %v373, %v362
      %v377 = vsel %vm345, %v375, %v364
      %v379 = vsel %vm348, %v377, %v366
      %v381 = vsel %vm351, %v379, %v368
      %383 = vrot.lane.b32.xlu0 %v292, 126
      %v384 = vpop.permute.xlu0 %383
      %385 = vrot.lane.b32.xlu0 %v297, 5
      %v386 = vpop.permute.xlu0 %385
      %387 = vrot.lane.b32.xlu0 %v304, 12
      %v388 = vpop.permute.xlu0 %387
      %389 = vrot.lane.b32.xlu0 %v311, 19
      %v390 = vpop.permute.xlu0 %389
      %391 = vrot.lane.b32.xlu0 %v318, 26
      %v392 = vpop.permute.xlu0 %391
      %393 = vrot.lane.b32.xlu0 %v325, 33
      %v394 = vpop.permute.xlu0 %393
      %395 = vrot.lane.b32.xlu0 %v332, 40
      %v396 = vpop.permute.xlu0 %395
      %v399 = vsel %vm335, %v384, %v386
      %v401 = vsel %vm339, %v399, %v388
      %v403 = vsel %vm342, %v401, %v390
      %v405 = vsel %vm345, %v403, %v392
      %v407 = vsel %vm348, %v405, %v394
      %v409 = vsel %vm351, %v407, %v396
      %s411 = scalar_lea.vmem %s245, 56
      %v412 = vld [vmem:[%s411] sm:$0xf]
      %v413 = vld [vmem:[%s411 + $0x4] sm:$0xf]
      %414 = vrot.lane.b32.xlu0 %v304, 7
      %v415 = vpop.permute.xlu0 %414
      %416 = vrot.lane.b32.xlu0 %v311, 14
      %v417 = vpop.permute.xlu0 %416
      %418 = vrot.lane.b32.xlu0 %v318, 21
      %v419 = vpop.permute.xlu0 %418
      %420 = vrot.lane.b32.xlu0 %v325, 28
      %v421 = vpop.permute.xlu0 %420
      %422 = vrot.lane.b32.xlu0 %v332, 35
      %v423 = vpop.permute.xlu0 %422
      %v426 = vunpack.c.l.b16 %v412
      %v427 = vunpack.c.l.b16 %v413
      %v428 = vpack.c.b16 %v427, %v426
      %429 = vrot.lane.b32.xlu0 %v428, 42
      %v430 = vpop.permute.xlu0 %429
      %v433 = vsel %vm335, %v297, %v415
      %v435 = vsel %vm339, %v433, %v417
      %v437 = vsel %vm342, %v435, %v419
      %v439 = vsel %vm345, %v437, %v421
      %v441 = vsel %vm348, %v439, %v423
      %v443 = vsel %vm351, %v441, %v430
      %445 = vrot.lane.b32.xlu0 %v297, 127
      %v446 = vpop.permute.xlu0 %445
      %447 = vrot.lane.b32.xlu0 %v304, 6
      %v448 = vpop.permute.xlu0 %447
      %449 = vrot.lane.b32.xlu0 %v311, 13
      %v450 = vpop.permute.xlu0 %449
      %451 = vrot.lane.b32.xlu0 %v318, 20
      %v452 = vpop.permute.xlu0 %451
      %453 = vrot.lane.b32.xlu0 %v325, 27
      %v454 = vpop.permute.xlu0 %453
      %455 = vrot.lane.b32.xlu0 %v332, 34
      %v456 = vpop.permute.xlu0 %455
      %457 = vrot.lane.b32.xlu0 %v428, 41
      %v458 = vpop.permute.xlu0 %457
      %v461 = vsel %vm335, %v446, %v448
      %v463 = vsel %vm339, %v461, %v450
      %v465 = vsel %vm342, %v463, %v452
      %v467 = vsel %vm345, %v465, %v454
      %v469 = vsel %vm348, %v467, %v456
      %v471 = vsel %vm351, %v469, %v458
      %473 = vrot.lane.b32.xlu0 %v297, 126
      %v474 = vpop.permute.xlu0 %473
      %475 = vrot.lane.b32.xlu0 %v304, 5
      %v476 = vpop.permute.xlu0 %475
      %477 = vrot.lane.b32.xlu0 %v311, 12
      %v478 = vpop.permute.xlu0 %477
      %479 = vrot.lane.b32.xlu0 %v318, 19
      %v480 = vpop.permute.xlu0 %479
      %481 = vrot.lane.b32.xlu0 %v325, 26
      %v482 = vpop.permute.xlu0 %481
      %483 = vrot.lane.b32.xlu0 %v332, 33
      %v484 = vpop.permute.xlu0 %483
      %485 = vrot.lane.b32.xlu0 %v428, 40
      %v486 = vpop.permute.xlu0 %485
      %v489 = vsel %vm335, %v474, %v476
      %v491 = vsel %vm339, %v489, %v478
      %v493 = vsel %vm342, %v491, %v480
      %v495 = vsel %vm345, %v493, %v482
      %v497 = vsel %vm348, %v495, %v484
      %v499 = vsel %vm351, %v497, %v486
      %s501 = scalar_lea.vmem %s245, 64
      %v502 = vld [vmem:[%s501] sm:$0xf]
      %v503 = vld [vmem:[%s501 + $0x4] sm:$0xf]
      %504 = vrot.lane.b32.xlu0 %v311, 7
      %v505 = vpop.permute.xlu0 %504
      %506 = vrot.lane.b32.xlu0 %v318, 14
      %v507 = vpop.permute.xlu0 %506
      %508 = vrot.lane.b32.xlu0 %v325, 21
      %v509 = vpop.permute.xlu0 %508
      %510 = vrot.lane.b32.xlu0 %v332, 28
      %v511 = vpop.permute.xlu0 %510
      %512 = vrot.lane.b32.xlu0 %v428, 35
      %v513 = vpop.permute.xlu0 %512
      %v516 = vunpack.c.l.b16 %v502
      %v517 = vunpack.c.l.b16 %v503
      %v518 = vpack.c.b16 %v517, %v516
      %519 = vrot.lane.b32.xlu0 %v518, 42
      %v520 = vpop.permute.xlu0 %519
      %v523 = vsel %vm335, %v304, %v505
      %v525 = vsel %vm339, %v523, %v507
      %v527 = vsel %vm342, %v525, %v509
      %v529 = vsel %vm345, %v527, %v511
      %v531 = vsel %vm348, %v529, %v513
      %v533 = vsel %vm351, %v531, %v520
      %535 = vrot.lane.b32.xlu0 %v304, 127
      %v536 = vpop.permute.xlu0 %535
      %537 = vrot.lane.b32.xlu0 %v311, 6
      %v538 = vpop.permute.xlu0 %537
      %539 = vrot.lane.b32.xlu0 %v318, 13
      %v540 = vpop.permute.xlu0 %539
      %541 = vrot.lane.b32.xlu0 %v325, 20
      %v542 = vpop.permute.xlu0 %541
      %543 = vrot.lane.b32.xlu0 %v332, 27
      %v544 = vpop.permute.xlu0 %543
      %545 = vrot.lane.b32.xlu0 %v428, 34
      %v546 = vpop.permute.xlu0 %545
      %547 = vrot.lane.b32.xlu0 %v518, 41
      %v548 = vpop.permute.xlu0 %547
      %v551 = vsel %vm335, %v536, %v538
      %v553 = vsel %vm339, %v551, %v540
      %v555 = vsel %vm342, %v553, %v542
      %v557 = vsel %vm345, %v555, %v544
      %v559 = vsel %vm348, %v557, %v546
      %v561 = vsel %vm351, %v559, %v548
      %563 = vrot.lane.b32.xlu0 %v304, 126
      %v564 = vpop.permute.xlu0 %563
      %565 = vrot.lane.b32.xlu0 %v311, 5
      %v566 = vpop.permute.xlu0 %565
      %567 = vrot.lane.b32.xlu0 %v318, 12
      %v568 = vpop.permute.xlu0 %567
      %569 = vrot.lane.b32.xlu0 %v325, 19
      %v570 = vpop.permute.xlu0 %569
      %571 = vrot.lane.b32.xlu0 %v332, 26
      %v572 = vpop.permute.xlu0 %571
      %573 = vrot.lane.b32.xlu0 %v428, 33
      %v574 = vpop.permute.xlu0 %573
      %575 = vrot.lane.b32.xlu0 %v518, 40
      %v576 = vpop.permute.xlu0 %575
      %v579 = vsel %vm335, %v564, %v566
      %v581 = vsel %vm339, %v579, %v568
      %v583 = vsel %vm342, %v581, %v570
      %v585 = vsel %vm345, %v583, %v572
      %v587 = vsel %vm348, %v585, %v574
      %v589 = vsel %vm351, %v587, %v576
      %v591 = vld [vmem:[%s1] sm:$0xff]
      %v593 = vunpack.c.l.b16 %v591
      %v594 = vunpack.c.h.b16 %v591
      %v595 = vpack.c.b16 %v593, %v593
      %v596 = vpack.c.b16 %v594, %v594
      %vm598 = vcmask 130048
      %v600 = vsel %vm598, %v596, 0
      %602 = vmatprep.subr.bf16.mxu0 0
      %603 = vmatpush1.bf16.msra.mxu0 %v353
      %604 = vmatprep.subr.bf16.mxu0 0
      %605 = vmatpush1.bf16.msra.mxu0 %v381
      %606 = vmatprep.subr.bf16.mxu0 0
      %607 = vmatpush1.bf16.msra.mxu0 %v409
      %608 = vmatprep.subr.bf16.mxu0 0
      %609 = vmatpush1.bf16.msra.mxu0 %v443
      %610 = vmatprep.subr.bf16.mxu0 0
      %611 = vmatpush1.bf16.msra.mxu0 %v471
      %612 = vmatprep.subr.bf16.mxu0 0
      %613 = vmatpush1.bf16.msra.mxu0 %v499
      %614 = vmatprep.subr.bf16.mxu0 0
      %615 = vmatpush1.bf16.msra.mxu0 %v533
      %616 = vmatprep.subr.bf16.mxu0 0
      %617 = vmatpush1.bf16.msra.mxu0 %v561
      %618 = vmatprep.subr.bf16.mxu0 0
      %619 = vmatpush1.bf16.msra.mxu0 %v589
      %620 = vmatprep.subr.bf16.mxu0 0
      %621 = vmatpush1.bf16.msra.mxu0 0
      %622 = vmatprep.subr.bf16.mxu0 0
      %623 = vmatpush1.bf16.msra.mxu0 0
      %624 = vmatprep.subr.bf16.mxu0 0
      %625 = vmatpush1.bf16.msra.mxu0 0
      %626 = vmatprep.subr.bf16.mxu0 0
      %627 = vmatpush1.bf16.msra.mxu0 0
      %628 = vmatprep.subr.bf16.mxu0 0
      %629 = vmatpush1.bf16.msra.mxu0 0
      %630 = vmatprep.subr.bf16.mxu0 0
      %631 = vmatpush1.bf16.msra.mxu0 0
      %632 = vmatprep.subr.bf16.mxu0 0
      %633 = vmatpush1.bf16.msra.mxu0 0
      %634 = vmatprep.mubr.bf16.mxu0 %v600
      %635 = vmatmul.mubr.bf16.gmra.mrb[0].mxu0 %v595
      %v636 = vpop.f32.mrb[0].mxu0
      %v637 = vadd.f32 0.0, %v636
      %v638 = vpop.f32.mrb[0].mxu0
      %v639 = vpop.f32.mrb[0].mxu0
      %v640 = vpop.f32.mrb[0].mxu0
      %641 = vdwg.mxu0
      %v642 = vpack.c.bf16 %v637, %v637
      %vm643 = vcmask 396288
      %644 = vst.msk [vmem:[%s252] sm:$0xf] %vm643, %v642
      %vm645 = vcmask 400384
      %v646 = vsel %vm645, %v637, 0.0
      %647 = vadd.xlane.f32.xlu0 %v646
      %v648 = vpop.xlane.xlu0 %647
      %vm649 = vcmask 7168
      %650 = vst.msk [vmem:[%s259] sm:$0xff] %vm649, %v648
      %v651 = vmul.f32 %v637, %v637
      %v652 = vsel %vm645, %v651, 0.0
      %653 = vadd.xlane.f32.xlu0 %v652
      %v654 = vpop.xlane.xlu0 %653
      %655 = vst.msk [vmem:[%s266] sm:$0xff] %vm649, %v654
      %p656 = scmp.lt.s32.totalorder %s20, 1
      %s657 = scalar_select %p656, %s20, 1
      %p658 = scmp.lt.s32.totalorder %s21, 0
      %s659 = scalar_select %p658, %s21, 0
      %s660 = sadd.s32 %s659, %s657
      %s661 = smul.addr %s660, 4
      %s662 = scalar_lea.vmem %s2, %s661
      %p663 = scmp.lt.s32.totalorder %s20, 1
      %s664 = scalar_select %p663, %s20, 1
      %p665 = scmp.lt.s32.totalorder %s21, 0
      %s666 = scalar_select %p665, %s21, 0
      %s667 = sadd.s32 %s666, %s664
      %s668 = smul.addr %s667, 8
      %s669 = scalar_lea.vmem %s3, %s668
      %p670 = scmp.lt.s32.totalorder %s20, 1
      %s671 = scalar_select %p670, %s20, 1
      %p672 = scmp.lt.s32.totalorder %s21, 0
      %s673 = scalar_select %p672, %s21, 0
      %s674 = sadd.s32 %s673, %s671
      %s675 = smul.addr %s674, 8
      %s676 = scalar_lea.vmem %s4, %s675
      // Predicated region
      $region29: #{down_block_conv_stride2.8} parent=27 // pred_check
        %p677 = pneg %p97
      $region30: #{down_block_conv_stride2.8} parent=27 // pred_check_branch
        %679 = sbr.rel (%p677) target = $region32
      $region31: #{down_block_conv_stride2.8} parent=27 // pred_region
        _
      $region32: #{down_block_conv_stride2.8} parent=27 // pred_fallthru
        _
      // Predicated region
      $region33: #{down_block_conv_stride2.8} parent=27 // pred_check
        %p680 = pneg %p125
      $region34: #{down_block_conv_stride2.8} parent=27 // pred_check_branch
        %682 = sbr.rel (%p680) target = $region36
      $region35: #{down_block_conv_stride2.8} parent=27 // pred_region
        _
      $region36: #{down_block_conv_stride2.8} parent=27 // pred_fallthru
        _
      // Predicated region
      $region37: #{down_block_conv_stride2.8} parent=27 // pred_check
        %p683 = pneg %p153
      $region38: #{down_block_conv_stride2.8} parent=27 // pred_check_branch
        %685 = sbr.rel (%p683) target = $region40
      $region39: #{down_block_conv_stride2.8} parent=27 // pred_region
        _
      $region40: #{down_block_conv_stride2.8} parent=27 // pred_fallthru
        _
    $region28: #{down_block_conv_stride2.8} parent=5 // pred_fallthru
      _
    %p686 = scmp.le.s32.totalorder 2, %s11
    // Predicated region
    $region41: #{down_block_conv_stride2.8} parent=5 // pred_check
      %p687 = pneg %p686
    $region42: #{down_block_conv_stride2.8} parent=5 // pred_check_branch
      %689 = sbr.rel (%p687) target = $region44
    $region43: #{down_block_conv_stride2.8} parent=5 // pred_region
      %s690 = ssub.s32 %s11, 2
      // Predicated region
      $region45: #{down_block_conv_stride2.8} parent=43 // pred_check
        %p691 = pneg %p103
      $region46: #{down_block_conv_stride2.8} parent=43 // pred_check_branch
        %693 = sbr.rel (%p691) target = $region48
      $region47: #{down_block_conv_stride2.8} parent=43 // pred_region
        %p694 = scmp.lt.s32.totalorder %s22, 1
        %s695 = scalar_select %p694, %s22, 1
        %p696 = scmp.lt.s32.totalorder %s23, 0
        %s697 = scalar_select %p696, %s23, 0
        %s698 = sadd.s32 %s697, %s695
        %s699 = smul.addr %s698, 4
        %s700 = scalar_lea.vmem %s2, %s699
      $region48: #{down_block_conv_stride2.8} parent=43 // pred_fallthru
        _
      // Predicated region
      $region49: #{down_block_conv_stride2.8} parent=43 // pred_check
        %p701 = pneg %p131
      $region50: #{down_block_conv_stride2.8} parent=43 // pred_check_branch
        %703 = sbr.rel (%p701) target = $region52
      $region51: #{down_block_conv_stride2.8} parent=43 // pred_region
        %p704 = scmp.lt.s32.totalorder %s22, 1
        %s705 = scalar_select %p704, %s22, 1
        %p706 = scmp.lt.s32.totalorder %s23, 0
        %s707 = scalar_select %p706, %s23, 0
        %s708 = sadd.s32 %s707, %s705
        %s709 = smul.addr %s708, 8
        %s710 = scalar_lea.vmem %s3, %s709
      $region52: #{down_block_conv_stride2.8} parent=43 // pred_fallthru
        _
      // Predicated region
      $region53: #{down_block_conv_stride2.8} parent=43 // pred_check
        %p711 = pneg %p159
      $region54: #{down_block_conv_stride2.8} parent=43 // pred_check_branch
        %713 = sbr.rel (%p711) target = $region56
      $region55: #{down_block_conv_stride2.8} parent=43 // pred_region
        %p714 = scmp.lt.s32.totalorder %s22, 1
        %s715 = scalar_select %p714, %s22, 1
        %p716 = scmp.lt.s32.totalorder %s23, 0
        %s717 = scalar_select %p716, %s23, 0
        %s718 = sadd.s32 %s717, %s715
        %s719 = smul.addr %s718, 8
        %s720 = scalar_lea.vmem %s4, %s719
      $region56: #{down_block_conv_stride2.8} parent=43 // pred_fallthru
        _
    $region44: #{down_block_conv_stride2.8} parent=5 // pred_fallthru
      _
  $region6: #{down_block_conv_stride2.8} parent=0 // loop_footer
    %s15 = sadd.s32 1, %s11
  $region7: #{down_block_conv_stride2.8} parent=0 // loop_footer_branch
    %10 = sbr.rel target = $region3
  $region8: #{down_block_conv_stride2.8} parent=0 // loop_exit
    _

</llo_original>
